<compile_context>
chip_gen: v7x
topology: tpu7x:2x2x1
jax: 0.10.0
libtpu: 0.0.40
codegen_flags: <defaults>
</compile_context>

<pallas_src>
import functools

import jax
import jax.numpy as jnp
from jax.experimental import pallas as pl
from jax.experimental.pallas import tpu as pltpu


# --------------------------------------------------------------------------
# kernel
# --------------------------------------------------------------------------
def _spatial_attention_kernel(x_ref, w_ref, b_ref, o_ref,
                              mx_ref, sm_ref, mxp_ref, avp_ref,
                              *, ksize, c_total):
    """Fused: channel max/mean accumulated over the channel-tile grid axis
    (lane-dense flat layout) + ksize x ksize conv over the two pooled maps
    + exact sigmoid epilogue."""
    c_idx = pl.program_id(1)
    n_c = pl.num_programs(1)
    tc = x_ref.shape[1]                      # channels in this block (static)
    _, H, W = o_ref.shape
    pad = ksize // 2

    # ---- init running accumulators (flat, lane-dense) ----------------------
    @pl.when(c_idx == 0)
    def _init():
        mx_ref[...] = jnp.full(mx_ref.shape, -jnp.inf, mx_ref.dtype)
        sm_ref[...] = jnp.zeros(sm_ref.shape, sm_ref.dtype)

    # ---- streamed channel reduction (HBM-bound phase) -----------------------
    xb = x_ref[0].astype(jnp.float32)        # (tc, H*W), cast in-register
    if c_total % tc != 0:                    # static: mask the ragged tail tile
        ch = jax.lax.broadcasted_iota(jnp.int32, xb.shape, 0)
        valid = ch < (c_total - c_idx * tc)
        x_for_max = jnp.where(valid, xb, -jnp.inf)
        x_for_sum = jnp.where(valid, xb, 0.0)
    else:
        x_for_max = x_for_sum = xb
    mx_ref[...] = jnp.maximum(mx_ref[...],
                              jnp.max(x_for_max, axis=0, keepdims=True))
    sm_ref[...] = sm_ref[...] + jnp.sum(x_for_sum, axis=0, keepdims=True)

    # ---- finalize: pad pooled maps, 7x7 conv, sigmoid ----------------------
    @pl.when(c_idx == n_c - 1)
    def _finalize():
        mx = mx_ref[...]                              # (1, H*W) pooled max
        av = sm_ref[...] * (1.0 / c_total)            # (1, H*W) pooled mean

        # Zero-padded 2-D staging buffers.  Border MUST be 0 (not -inf) to
        # match Conv2d's zero padding of the concatenated pooled maps.
        mxp_ref[...] = jnp.zeros(mxp_ref.shape, mxp_ref.dtype)
        avp_ref[...] = jnp.zeros(avp_ref.shape, avp_ref.dtype)
        for y in range(H):                            # flat -> padded 2-D rows
            mxp_ref[pad + y:pad + y + 1, pad:pad + W] = mx[:, y * W:(y + 1) * W]
            avp_ref[pad + y:pad + y + 1, pad:pad + W] = av[:, y * W:(y + 1) * W]
        mxp = mxp_ref[...]                            # (Hp, Wp)
        avp = avp_ref[...]

        acc = jnp.zeros((H, W), jnp.float32)
        for j in range(ksize):
            # Hoist the lane-offset slice: 7 cross-lane slices per map total,
            # reused across the 7 (cheap, sublane-offset) row slices below.
            mx_cols = mxp[:, j:j + W]                 # (Hp, W)
            av_cols = avp[:, j:j + W]
            for i in range(ksize):
                t = i * ksize + j                     # SMEM scalar weights
                acc = acc + w_ref[0, t] * mx_cols[i:i + H, :]
                acc = acc + w_ref[1, t] * av_cols[i:i + H, :]
        acc = acc + b_ref[0]

        # Exact sigmoid via a single EUP tanh.
        o_ref[0] = (0.5 * (jnp.tanh(0.5 * acc) + 1.0)).astype(o_ref.dtype)


# --------------------------------------------------------------------------
# tiling heuristics
# --------------------------------------------------------------------------
def _round_up(n, m):
    return (n + m - 1) // m * m


def _vmem_budget():
    """(x-window budget for both pipeline buffers, vmem_limit_bytes)."""
    kind = ""
    try:
        kind = jax.devices()[0].device_kind.lower()
    except Exception:
        pass
    if ("v5" in kind) or ("v6" in kind):
        # 128 MiB physical VMEM: large double-buffered tiles approach HBM roofline.
        return 40 * 2**20, 100 * 2**20
    # v7x (64 MiB per TC) or unknown chip: stay conservative.
    return 20 * 2**20, 48 * 2**20


def _pick_channel_tile(C, HW, itemsize, window_budget_bytes):
    """Largest channel tile whose double-buffered x window fits the budget,
    counting PHYSICAL (8,128)-tiled VMEM bytes; tc is a multiple of 8 or C."""
    per_ch = _round_up(HW, 128) * itemsize
    max_tc = window_budget_bytes // (2 * per_ch)      # x is double-buffered
    if max_tc >= C:
        return C
    tc = (max_tc // 8) * 8
    return tc if tc >= 8 else min(8, C)


# --------------------------------------------------------------------------
# wrapper
# --------------------------------------------------------------------------
@functools.partial(jax.jit, static_argnames=("ksize", "c_block"))
def spatial_attention(x, w, b, *, ksize=7, c_block=None):
    """x: (B, C, H, W) NCHW;  w: (1, 2, k, k) (torch Conv2d layout);  b: (1,).
    Returns (B, 1, H, W), dtype of x."""
    B, C, H, W = x.shape
    HW = H * W
    pad = ksize // 2
    Hp, Wp = H + 2 * pad, W + 2 * pad

    # Free metadata reshape: stream x unpadded, lane-dense (spatial on lanes).
    x_flat = x.reshape(B, C, HW)
    w_flat = w.astype(jnp.float32).reshape(2, ksize * ksize)   # [max | avg] taps
    b_flat = b.astype(jnp.float32).reshape(1)

    window_budget, vmem_limit = _vmem_budget()
    if c_block is None:
        tc = _pick_channel_tile(C, HW, x.dtype.itemsize, window_budget)
    else:
        tc = min(int(c_block), C)
        if tc < C and tc % 8:          # block's second-minor dim must be 8-aligned
            tc = min(C, _round_up(tc, 8))
    n_cblk = pl.cdiv(C, tc)

    out = pl.pallas_call(
        functools.partial(_spatial_attention_kernel, ksize=ksize, c_total=C),
        grid=(B, n_cblk),
        in_specs=[
            pl.BlockSpec((1, tc, HW), lambda bi, ci: (bi, ci, 0)),
            pl.BlockSpec(memory_space=pltpu.MemorySpace.SMEM),   # conv weights
            pl.BlockSpec(memory_space=pltpu.MemorySpace.SMEM),   # conv bias
        ],
        out_specs=pl.BlockSpec((1, H, W), lambda bi, ci: (bi, 0, 0)),
        out_shape=jax.ShapeDtypeStruct((B, H, W), x.dtype),
        scratch_shapes=[
            pltpu.VMEM((1, HW), jnp.float32),    # running max  (flat, lane-dense)
            pltpu.VMEM((1, HW), jnp.float32),    # running sum  (flat, lane-dense)
            pltpu.VMEM((Hp, Wp), jnp.float32),   # zero-padded pooled max
            pltpu.VMEM((Hp, Wp), jnp.float32),   # zero-padded pooled mean
        ],
        compiler_params=pltpu.CompilerParams(
            dimension_semantics=("parallel", "arbitrary"),
            vmem_limit_bytes=vmem_limit),
    )(x_flat, w_flat, b_flat)

    return out.reshape(B, 1, H, W)


# --------------------------------------------------------------------------
# pure-JAX reference (mirrors the PyTorch module)
# --------------------------------------------------------------------------
def _reference(x, w, b, *, ksize=7):
    mx = jnp.max(x, axis=1, keepdims=True)
    av = jnp.mean(x, axis=1, keepdims=True)
    r = jnp.concatenate([mx, av], axis=1)                     # (B, 2, H, W)
    pad = ksize // 2
    out = jax.lax.conv_general_dilated(
        r, w.astype(jnp.float32), window_strides=(1, 1),
        padding=[(pad, pad), (pad, pad)],
        dimension_numbers=("NCHW", "OIHW", "NCHW"))
    return jax.nn.sigmoid(out + b.reshape(1, 1, 1, 1))


# --------------------------------------------------------------------------
if __name__ == "__main__":
    key = jax.random.PRNGKey(0)
    kx, kw, kb, kx2 = jax.random.split(key, 4)

    KSIZE = 7
    B, C, H, W = 2, 4, 16, 16
    x = jax.random.normal(kx, (B, C, H, W), jnp.float32)
    w = jax.random.normal(kw, (1, 2, KSIZE, KSIZE), jnp.float32) * 0.1
    b = jax.random.normal(kb, (1,), jnp.float32) * 0.1

    out = jax.block_until_ready(spatial_attention(x, w, b, ksize=KSIZE))
    ref = jax.block_until_ready(_reference(x, w, b, ksize=KSIZE))
    assert out.shape == (B, 1, H, W), out.shape
    assert bool(jnp.isfinite(out).all())
    err = float(jnp.max(jnp.abs(out - ref)))
    assert err < 1e-4, f"max abs error {err}"

    # Multi-step channel reduction + ragged tail masking (C not divisible by tile).
    C2 = 20
    x2 = jax.random.normal(kx2, (B, C2, H, W), jnp.float32)
    out2 = jax.block_until_ready(spatial_attention(x2, w, b, ksize=KSIZE, c_block=8))
    ref2 = jax.block_until_ready(_reference(x2, w, b, ksize=KSIZE))
    err2 = float(jnp.max(jnp.abs(out2 - ref2)))
    assert err2 < 1e-4, f"max abs error (tiled/ragged C) {err2}"

    print("KERNEL_OK")
</pallas_src>

<mosaic_0001>
module attributes {stable_mosaic.version = 11 : i64} {
  func.func @_spatial_attention_kernel(%arg0: i32, %arg1: i32, %arg2: memref<1x4x256xf32, #tpu.memory_space<vmem>>, %arg3: memref<2x49xf32, #tpu.memory_space<smem>>, %arg4: memref<1xf32, #tpu.memory_space<smem>>, %arg5: memref<1x16x16xf32, #tpu.memory_space<vmem>>, %arg6: memref<1x256xf32, #tpu.memory_space<vmem>>, %arg7: memref<1x256xf32, #tpu.memory_space<vmem>>, %arg8: memref<22x22xf32, #tpu.memory_space<vmem>>, %arg9: memref<22x22xf32, #tpu.memory_space<vmem>>) attributes {dimension_semantics = [#tpu.dimension_semantics<parallel>, #tpu.dimension_semantics<arbitrary>], iteration_bounds = array<i64: 2, 1>, scalar_prefetch = 0 : i64, scratch_operands = 4 : i64, tpu.core_type = #tpu.core_type<tc>, window_params = [{transform_indices = @transform_0, window_bounds = array<i64: 1, 4, 256>}, {transform_indices = @transform_1, window_bounds = array<i64: 2, 49>}, {transform_indices = @transform_2, window_bounds = array<i64: 1>}, {transform_indices = @transform_3, window_bounds = array<i64: 1, 16, 16>}]} {
    %c0_i32 = arith.constant 0 : i32
    %0 = arith.cmpi eq, %arg1, %c0_i32 : i32
    %1 = arith.extui %0 : i1 to i32
    %c0_i32_0 = arith.constant 0 : i32
    %2 = arith.cmpi ne, %1, %c0_i32_0 : i32
    scf.if %2 {
      %cst_14 = arith.constant 0xFF800000 : f32
      %18 = vector.broadcast %cst_14 : f32 to vector<1x256xf32>
      %c0_15 = arith.constant 0 : index
      %c0_16 = arith.constant 0 : index
      %19 = vector.load %arg6[%c0_15, %c0_16] : memref<1x256xf32, #tpu.memory_space<vmem>>, vector<1x256xf32>
      tpu.vector_store %arg6[%c0_15, %c0_16], %18 {strides = array<i32>} : memref<1x256xf32, #tpu.memory_space<vmem>>, vector<1x256xf32>,
      %cst_17 = arith.constant 0.000000e+00 : f32
      %20 = vector.broadcast %cst_17 : f32 to vector<1x256xf32>
      %c0_18 = arith.constant 0 : index
      %c0_19 = arith.constant 0 : index
      %21 = vector.load %arg7[%c0_18, %c0_19] : memref<1x256xf32, #tpu.memory_space<vmem>>, vector<1x256xf32>
      tpu.vector_store %arg7[%c0_18, %c0_19], %20 {strides = array<i32>} : memref<1x256xf32, #tpu.memory_space<vmem>>, vector<1x256xf32>,
    } else {
    }
    %c0 = arith.constant 0 : index
    %c0_1 = arith.constant 0 : index
    %c0_2 = arith.constant 0 : index
    %3 = vector.load %arg2[%c0, %c0_1, %c0_2] : memref<1x4x256xf32, #tpu.memory_space<vmem>>, vector<1x4x256xf32>
    %4 = vector.shape_cast %3 : vector<1x4x256xf32> to vector<4x256xf32>
    %c0_3 = arith.constant 0 : index
    %c0_4 = arith.constant 0 : index
    %5 = vector.load %arg6[%c0_3, %c0_4] : memref<1x256xf32, #tpu.memory_space<vmem>>, vector<1x256xf32>
    %cst = arith.constant dense<0xFF800000> : vector<256xf32>
    %6 = vector.multi_reduction <maximumf>, %4, %cst [0] : vector<4x256xf32> to vector<256xf32>
    %7 = vector.shape_cast %6 : vector<256xf32> to vector<1x256xf32>
    %8 = arith.maximumf %5, %7 : vector<1x256xf32>
    %c0_5 = arith.constant 0 : index
    %c0_6 = arith.constant 0 : index
    %9 = vector.load %arg6[%c0_5, %c0_6] : memref<1x256xf32, #tpu.memory_space<vmem>>, vector<1x256xf32>
    tpu.vector_store %arg6[%c0_5, %c0_6], %8 {strides = array<i32>} : memref<1x256xf32, #tpu.memory_space<vmem>>, vector<1x256xf32>,
    %c0_7 = arith.constant 0 : index
    %c0_8 = arith.constant 0 : index
    %10 = vector.load %arg7[%c0_7, %c0_8] : memref<1x256xf32, #tpu.memory_space<vmem>>, vector<1x256xf32>
    %cst_9 = arith.constant dense<0.000000e+00> : vector<256xf32>
    %11 = vector.multi_reduction <add>, %4, %cst_9 [0] : vector<4x256xf32> to vector<256xf32>
    %12 = vector.shape_cast %11 : vector<256xf32> to vector<1x256xf32>
    %13 = arith.addf %10, %12 : vector<1x256xf32>
    %c0_10 = arith.constant 0 : index
    %c0_11 = arith.constant 0 : index
    %14 = vector.load %arg7[%c0_10, %c0_11] : memref<1x256xf32, #tpu.memory_space<vmem>>, vector<1x256xf32>
    tpu.vector_store %arg7[%c0_10, %c0_11], %13 {strides = array<i32>} : memref<1x256xf32, #tpu.memory_space<vmem>>, vector<1x256xf32>,
    %c0_i32_12 = arith.constant 0 : i32
    %15 = arith.cmpi eq, %arg1, %c0_i32_12 : i32
    %16 = arith.extui %15 : i1 to i32
    %c0_i32_13 = arith.constant 0 : i32
    %17 = arith.cmpi ne, %16, %c0_i32_13 : i32
    scf.if %17 {
      %c0_14 = arith.constant 0 : index
      %c0_15 = arith.constant 0 : index
      %18 = vector.load %arg6[%c0_14, %c0_15] : memref<1x256xf32, #tpu.memory_space<vmem>>, vector<1x256xf32>
      %c0_16 = arith.constant 0 : index
      %c0_17 = arith.constant 0 : index
      %19 = vector.load %arg7[%c0_16, %c0_17] : memref<1x256xf32, #tpu.memory_space<vmem>>, vector<1x256xf32>
      %cst_18 = arith.constant 2.500000e-01 : f32
      %20 = vector.broadcast %cst_18 : f32 to vector<1x256xf32>
      %21 = arith.mulf %19, %20 : vector<1x256xf32>
      %cst_19 = arith.constant 0.000000e+00 : f32
      %22 = vector.broadcast %cst_19 : f32 to vector<22x22xf32>
      %c0_20 = arith.constant 0 : index
      %c0_21 = arith.constant 0 : index
      %23 = vector.load %arg8[%c0_20, %c0_21] : memref<22x22xf32, #tpu.memory_space<vmem>>, vector<22x22xf32>
      tpu.vector_store %arg8[%c0_20, %c0_21], %22 {strides = array<i32>} : memref<22x22xf32, #tpu.memory_space<vmem>>, vector<22x22xf32>,
      %cst_22 = arith.constant 0.000000e+00 : f32
      %24 = vector.broadcast %cst_22 : f32 to vector<22x22xf32>
      %c0_23 = arith.constant 0 : index
      %c0_24 = arith.constant 0 : index
      %25 = vector.load %arg9[%c0_23, %c0_24] : memref<22x22xf32, #tpu.memory_space<vmem>>, vector<22x22xf32>
      tpu.vector_store %arg9[%c0_23, %c0_24], %24 {strides = array<i32>} : memref<22x22xf32, #tpu.memory_space<vmem>>, vector<22x22xf32>,
      %26 = vector.extract_strided_slice %18 {offsets = [0, 0], sizes = [1, 16], strides = [1, 1]} : vector<1x256xf32> to vector<1x16xf32>
      %c3 = arith.constant 3 : index
      %c3_25 = arith.constant 3 : index
      %27 = vector.load %arg8[%c3, %c3_25] : memref<22x22xf32, #tpu.memory_space<vmem>>, vector<1x16xf32>
      tpu.vector_store %arg8[%c3, %c3_25], %26 {strides = array<i32>} : memref<22x22xf32, #tpu.memory_space<vmem>>, vector<1x16xf32>,
      %28 = vector.extract_strided_slice %21 {offsets = [0, 0], sizes = [1, 16], strides = [1, 1]} : vector<1x256xf32> to vector<1x16xf32>
      %c3_26 = arith.constant 3 : index
      %c3_27 = arith.constant 3 : index
      %29 = vector.load %arg9[%c3_26, %c3_27] : memref<22x22xf32, #tpu.memory_space<vmem>>, vector<1x16xf32>
      tpu.vector_store %arg9[%c3_26, %c3_27], %28 {strides = array<i32>} : memref<22x22xf32, #tpu.memory_space<vmem>>, vector<1x16xf32>,
      %30 = vector.extract_strided_slice %18 {offsets = [0, 16], sizes = [1, 16], strides = [1, 1]} : vector<1x256xf32> to vector<1x16xf32>
      %c4 = arith.constant 4 : index
      %c3_28 = arith.constant 3 : index
      %31 = vector.load %arg8[%c4, %c3_28] : memref<22x22xf32, #tpu.memory_space<vmem>>, vector<1x16xf32>
      tpu.vector_store %arg8[%c4, %c3_28], %30 {strides = array<i32>} : memref<22x22xf32, #tpu.memory_space<vmem>>, vector<1x16xf32>,
      %32 = vector.extract_strided_slice %21 {offsets = [0, 16], sizes = [1, 16], strides = [1, 1]} : vector<1x256xf32> to vector<1x16xf32>
      %c4_29 = arith.constant 4 : index
      %c3_30 = arith.constant 3 : index
      %33 = vector.load %arg9[%c4_29, %c3_30] : memref<22x22xf32, #tpu.memory_space<vmem>>, vector<1x16xf32>
      tpu.vector_store %arg9[%c4_29, %c3_30], %32 {strides = array<i32>} : memref<22x22xf32, #tpu.memory_space<vmem>>, vector<1x16xf32>,
      %34 = vector.extract_strided_slice %18 {offsets = [0, 32], sizes = [1, 16], strides = [1, 1]} : vector<1x256xf32> to vector<1x16xf32>
      %c5 = arith.constant 5 : index
      %c3_31 = arith.constant 3 : index
      %35 = vector.load %arg8[%c5, %c3_31] : memref<22x22xf32, #tpu.memory_space<vmem>>, vector<1x16xf32>
      tpu.vector_store %arg8[%c5, %c3_31], %34 {strides = array<i32>} : memref<22x22xf32, #tpu.memory_space<vmem>>, vector<1x16xf32>,
      %36 = vector.extract_strided_slice %21 {offsets = [0, 32], sizes = [1, 16], strides = [1, 1]} : vector<1x256xf32> to vector<1x16xf32>
      %c5_32 = arith.constant 5 : index
      %c3_33 = arith.constant 3 : index
      %37 = vector.load %arg9[%c5_32, %c3_33] : memref<22x22xf32, #tpu.memory_space<vmem>>, vector<1x16xf32>
      tpu.vector_store %arg9[%c5_32, %c3_33], %36 {strides = array<i32>} : memref<22x22xf32, #tpu.memory_space<vmem>>, vector<1x16xf32>,
      %38 = vector.extract_strided_slice %18 {offsets = [0, 48], sizes = [1, 16], strides = [1, 1]} : vector<1x256xf32> to vector<1x16xf32>
      %c6 = arith.constant 6 : index
      %c3_34 = arith.constant 3 : index
      %39 = vector.load %arg8[%c6, %c3_34] : memref<22x22xf32, #tpu.memory_space<vmem>>, vector<1x16xf32>
      tpu.vector_store %arg8[%c6, %c3_34], %38 {strides = array<i32>} : memref<22x22xf32, #tpu.memory_space<vmem>>, vector<1x16xf32>,
      %40 = vector.extract_strided_slice %21 {offsets = [0, 48], sizes = [1, 16], strides = [1, 1]} : vector<1x256xf32> to vector<1x16xf32>
      %c6_35 = arith.constant 6 : index
      %c3_36 = arith.constant 3 : index
      %41 = vector.load %arg9[%c6_35, %c3_36] : memref<22x22xf32, #tpu.memory_space<vmem>>, vector<1x16xf32>
      tpu.vector_store %arg9[%c6_35, %c3_36], %40 {strides = array<i32>} : memref<22x22xf32, #tpu.memory_space<vmem>>, vector<1x16xf32>,
      %42 = vector.extract_strided_slice %18 {offsets = [0, 64], sizes = [1, 16], strides = [1, 1]} : vector<1x256xf32> to vector<1x16xf32>
      %c7 = arith.constant 7 : index
      %c3_37 = arith.constant 3 : index
      %43 = vector.load %arg8[%c7, %c3_37] : memref<22x22xf32, #tpu.memory_space<vmem>>, vector<1x16xf32>
      tpu.vector_store %arg8[%c7, %c3_37], %42 {strides = array<i32>} : memref<22x22xf32, #tpu.memory_space<vmem>>, vector<1x16xf32>,
      %44 = vector.extract_strided_slice %21 {offsets = [0, 64], sizes = [1, 16], strides = [1, 1]} : vector<1x256xf32> to vector<1x16xf32>
      %c7_38 = arith.constant 7 : index
      %c3_39 = arith.constant 3 : index
      %45 = vector.load %arg9[%c7_38, %c3_39] : memref<22x22xf32, #tpu.memory_space<vmem>>, vector<1x16xf32>
      tpu.vector_store %arg9[%c7_38, %c3_39], %44 {strides = array<i32>} : memref<22x22xf32, #tpu.memory_space<vmem>>, vector<1x16xf32>,
      %46 = vector.extract_strided_slice %18 {offsets = [0, 80], sizes = [1, 16], strides = [1, 1]} : vector<1x256xf32> to vector<1x16xf32>
      %c8 = arith.constant 8 : index
      %c3_40 = arith.constant 3 : index
      %47 = vector.load %arg8[%c8, %c3_40] : memref<22x22xf32, #tpu.memory_space<vmem>>, vector<1x16xf32>
      tpu.vector_store %arg8[%c8, %c3_40], %46 {strides = array<i32>} : memref<22x22xf32, #tpu.memory_space<vmem>>, vector<1x16xf32>,
      %48 = vector.extract_strided_slice %21 {offsets = [0, 80], sizes = [1, 16], strides = [1, 1]} : vector<1x256xf32> to vector<1x16xf32>
      %c8_41 = arith.constant 8 : index
      %c3_42 = arith.constant 3 : index
      %49 = vector.load %arg9[%c8_41, %c3_42] : memref<22x22xf32, #tpu.memory_space<vmem>>, vector<1x16xf32>
      tpu.vector_store %arg9[%c8_41, %c3_42], %48 {strides = array<i32>} : memref<22x22xf32, #tpu.memory_space<vmem>>, vector<1x16xf32>,
      %50 = vector.extract_strided_slice %18 {offsets = [0, 96], sizes = [1, 16], strides = [1, 1]} : vector<1x256xf32> to vector<1x16xf32>
      %c9 = arith.constant 9 : index
      %c3_43 = arith.constant 3 : index
      %51 = vector.load %arg8[%c9, %c3_43] : memref<22x22xf32, #tpu.memory_space<vmem>>, vector<1x16xf32>
      tpu.vector_store %arg8[%c9, %c3_43], %50 {strides = array<i32>} : memref<22x22xf32, #tpu.memory_space<vmem>>, vector<1x16xf32>,
      %52 = vector.extract_strided_slice %21 {offsets = [0, 96], sizes = [1, 16], strides = [1, 1]} : vector<1x256xf32> to vector<1x16xf32>
      %c9_44 = arith.constant 9 : index
      %c3_45 = arith.constant 3 : index
      %53 = vector.load %arg9[%c9_44, %c3_45] : memref<22x22xf32, #tpu.memory_space<vmem>>, vector<1x16xf32>
      tpu.vector_store %arg9[%c9_44, %c3_45], %52 {strides = array<i32>} : memref<22x22xf32, #tpu.memory_space<vmem>>, vector<1x16xf32>,
      %54 = vector.extract_strided_slice %18 {offsets = [0, 112], sizes = [1, 16], strides = [1, 1]} : vector<1x256xf32> to vector<1x16xf32>
      %c10 = arith.constant 10 : index
      %c3_46 = arith.constant 3 : index
      %55 = vector.load %arg8[%c10, %c3_46] : memref<22x22xf32, #tpu.memory_space<vmem>>, vector<1x16xf32>
      tpu.vector_store %arg8[%c10, %c3_46], %54 {strides = array<i32>} : memref<22x22xf32, #tpu.memory_space<vmem>>, vector<1x16xf32>,
      %56 = vector.extract_strided_slice %21 {offsets = [0, 112], sizes = [1, 16], strides = [1, 1]} : vector<1x256xf32> to vector<1x16xf32>
      %c10_47 = arith.constant 10 : index
      %c3_48 = arith.constant 3 : index
      %57 = vector.load %arg9[%c10_47, %c3_48] : memref<22x22xf32, #tpu.memory_space<vmem>>, vector<1x16xf32>
      tpu.vector_store %arg9[%c10_47, %c3_48], %56 {strides = array<i32>} : memref<22x22xf32, #tpu.memory_space<vmem>>, vector<1x16xf32>,
      %58 = vector.extract_strided_slice %18 {offsets = [0, 128], sizes = [1, 16], strides = [1, 1]} : vector<1x256xf32> to vector<1x16xf32>
      %c11 = arith.constant 11 : index
      %c3_49 = arith.constant 3 : index
      %59 = vector.load %arg8[%c11, %c3_49] : memref<22x22xf32, #tpu.memory_space<vmem>>, vector<1x16xf32>
      tpu.vector_store %arg8[%c11, %c3_49], %58 {strides = array<i32>} : memref<22x22xf32, #tpu.memory_space<vmem>>, vector<1x16xf32>,
      %60 = vector.extract_strided_slice %21 {offsets = [0, 128], sizes = [1, 16], strides = [1, 1]} : vector<1x256xf32> to vector<1x16xf32>
      %c11_50 = arith.constant 11 : index
      %c3_51 = arith.constant 3 : index
      %61 = vector.load %arg9[%c11_50, %c3_51] : memref<22x22xf32, #tpu.memory_space<vmem>>, vector<1x16xf32>
      tpu.vector_store %arg9[%c11_50, %c3_51], %60 {strides = array<i32>} : memref<22x22xf32, #tpu.memory_space<vmem>>, vector<1x16xf32>,
      %62 = vector.extract_strided_slice %18 {offsets = [0, 144], sizes = [1, 16], strides = [1, 1]} : vector<1x256xf32> to vector<1x16xf32>
      %c12 = arith.constant 12 : index
      %c3_52 = arith.constant 3 : index
      %63 = vector.load %arg8[%c12, %c3_52] : memref<22x22xf32, #tpu.memory_space<vmem>>, vector<1x16xf32>
      tpu.vector_store %arg8[%c12, %c3_52], %62 {strides = array<i32>} : memref<22x22xf32, #tpu.memory_space<vmem>>, vector<1x16xf32>,
      %64 = vector.extract_strided_slice %21 {offsets = [0, 144], sizes = [1, 16], strides = [1, 1]} : vector<1x256xf32> to vector<1x16xf32>
      %c12_53 = arith.constant 12 : index
      %c3_54 = arith.constant 3 : index
      %65 = vector.load %arg9[%c12_53, %c3_54] : memref<22x22xf32, #tpu.memory_space<vmem>>, vector<1x16xf32>
      tpu.vector_store %arg9[%c12_53, %c3_54], %64 {strides = array<i32>} : memref<22x22xf32, #tpu.memory_space<vmem>>, vector<1x16xf32>,
      %66 = vector.extract_strided_slice %18 {offsets = [0, 160], sizes = [1, 16], strides = [1, 1]} : vector<1x256xf32> to vector<1x16xf32>
      %c13 = arith.constant 13 : index
      %c3_55 = arith.constant 3 : index
      %67 = vector.load %arg8[%c13, %c3_55] : memref<22x22xf32, #tpu.memory_space<vmem>>, vector<1x16xf32>
      tpu.vector_store %arg8[%c13, %c3_55], %66 {strides = array<i32>} : memref<22x22xf32, #tpu.memory_space<vmem>>, vector<1x16xf32>,
      %68 = vector.extract_strided_slice %21 {offsets = [0, 160], sizes = [1, 16], strides = [1, 1]} : vector<1x256xf32> to vector<1x16xf32>
      %c13_56 = arith.constant 13 : index
      %c3_57 = arith.constant 3 : index
      %69 = vector.load %arg9[%c13_56, %c3_57] : memref<22x22xf32, #tpu.memory_space<vmem>>, vector<1x16xf32>
      tpu.vector_store %arg9[%c13_56, %c3_57], %68 {strides = array<i32>} : memref<22x22xf32, #tpu.memory_space<vmem>>, vector<1x16xf32>,
      %70 = vector.extract_strided_slice %18 {offsets = [0, 176], sizes = [1, 16], strides = [1, 1]} : vector<1x256xf32> to vector<1x16xf32>
      %c14 = arith.constant 14 : index
      %c3_58 = arith.constant 3 : index
      %71 = vector.load %arg8[%c14, %c3_58] : memref<22x22xf32, #tpu.memory_space<vmem>>, vector<1x16xf32>
      tpu.vector_store %arg8[%c14, %c3_58], %70 {strides = array<i32>} : memref<22x22xf32, #tpu.memory_space<vmem>>, vector<1x16xf32>,
      %72 = vector.extract_strided_slice %21 {offsets = [0, 176], sizes = [1, 16], strides = [1, 1]} : vector<1x256xf32> to vector<1x16xf32>
      %c14_59 = arith.constant 14 : index
      %c3_60 = arith.constant 3 : index
      %73 = vector.load %arg9[%c14_59, %c3_60] : memref<22x22xf32, #tpu.memory_space<vmem>>, vector<1x16xf32>
      tpu.vector_store %arg9[%c14_59, %c3_60], %72 {strides = array<i32>} : memref<22x22xf32, #tpu.memory_space<vmem>>, vector<1x16xf32>,
      %74 = vector.extract_strided_slice %18 {offsets = [0, 192], sizes = [1, 16], strides = [1, 1]} : vector<1x256xf32> to vector<1x16xf32>
      %c15 = arith.constant 15 : index
      %c3_61 = arith.constant 3 : index
      %75 = vector.load %arg8[%c15, %c3_61] : memref<22x22xf32, #tpu.memory_space<vmem>>, vector<1x16xf32>
      tpu.vector_store %arg8[%c15, %c3_61], %74 {strides = array<i32>} : memref<22x22xf32, #tpu.memory_space<vmem>>, vector<1x16xf32>,
      %76 = vector.extract_strided_slice %21 {offsets = [0, 192], sizes = [1, 16], strides = [1, 1]} : vector<1x256xf32> to vector<1x16xf32>
      %c15_62 = arith.constant 15 : index
      %c3_63 = arith.constant 3 : index
      %77 = vector.load %arg9[%c15_62, %c3_63] : memref<22x22xf32, #tpu.memory_space<vmem>>, vector<1x16xf32>
      tpu.vector_store %arg9[%c15_62, %c3_63], %76 {strides = array<i32>} : memref<22x22xf32, #tpu.memory_space<vmem>>, vector<1x16xf32>,
      %78 = vector.extract_strided_slice %18 {offsets = [0, 208], sizes = [1, 16], strides = [1, 1]} : vector<1x256xf32> to vector<1x16xf32>
      %c16 = arith.constant 16 : index
      %c3_64 = arith.constant 3 : index
      %79 = vector.load %arg8[%c16, %c3_64] : memref<22x22xf32, #tpu.memory_space<vmem>>, vector<1x16xf32>
      tpu.vector_store %arg8[%c16, %c3_64], %78 {strides = array<i32>} : memref<22x22xf32, #tpu.memory_space<vmem>>, vector<1x16xf32>,
      %80 = vector.extract_strided_slice %21 {offsets = [0, 208], sizes = [1, 16], strides = [1, 1]} : vector<1x256xf32> to vector<1x16xf32>
      %c16_65 = arith.constant 16 : index
      %c3_66 = arith.constant 3 : index
      %81 = vector.load %arg9[%c16_65, %c3_66] : memref<22x22xf32, #tpu.memory_space<vmem>>, vector<1x16xf32>
      tpu.vector_store %arg9[%c16_65, %c3_66], %80 {strides = array<i32>} : memref<22x22xf32, #tpu.memory_space<vmem>>, vector<1x16xf32>,
      %82 = vector.extract_strided_slice %18 {offsets = [0, 224], sizes = [1, 16], strides = [1, 1]} : vector<1x256xf32> to vector<1x16xf32>
      %c17 = arith.constant 17 : index
      %c3_67 = arith.constant 3 : index
      %83 = vector.load %arg8[%c17, %c3_67] : memref<22x22xf32, #tpu.memory_space<vmem>>, vector<1x16xf32>
      tpu.vector_store %arg8[%c17, %c3_67], %82 {strides = array<i32>} : memref<22x22xf32, #tpu.memory_space<vmem>>, vector<1x16xf32>,
      %84 = vector.extract_strided_slice %21 {offsets = [0, 224], sizes = [1, 16], strides = [1, 1]} : vector<1x256xf32> to vector<1x16xf32>
      %c17_68 = arith.constant 17 : index
      %c3_69 = arith.constant 3 : index
      %85 = vector.load %arg9[%c17_68, %c3_69] : memref<22x22xf32, #tpu.memory_space<vmem>>, vector<1x16xf32>
      tpu.vector_store %arg9[%c17_68, %c3_69], %84 {strides = array<i32>} : memref<22x22xf32, #tpu.memory_space<vmem>>, vector<1x16xf32>,
      %86 = vector.extract_strided_slice %18 {offsets = [0, 240], sizes = [1, 16], strides = [1, 1]} : vector<1x256xf32> to vector<1x16xf32>
      %c18 = arith.constant 18 : index
      %c3_70 = arith.constant 3 : index
      %87 = vector.load %arg8[%c18, %c3_70] : memref<22x22xf32, #tpu.memory_space<vmem>>, vector<1x16xf32>
      tpu.vector_store %arg8[%c18, %c3_70], %86 {strides = array<i32>} : memref<22x22xf32, #tpu.memory_space<vmem>>, vector<1x16xf32>,
      %88 = vector.extract_strided_slice %21 {offsets = [0, 240], sizes = [1, 16], strides = [1, 1]} : vector<1x256xf32> to vector<1x16xf32>
      %c18_71 = arith.constant 18 : index
      %c3_72 = arith.constant 3 : index
      %89 = vector.load %arg9[%c18_71, %c3_72] : memref<22x22xf32, #tpu.memory_space<vmem>>, vector<1x16xf32>
      tpu.vector_store %arg9[%c18_71, %c3_72], %88 {strides = array<i32>} : memref<22x22xf32, #tpu.memory_space<vmem>>, vector<1x16xf32>,
      %c0_73 = arith.constant 0 : index
      %c0_74 = arith.constant 0 : index
      %90 = vector.load %arg8[%c0_73, %c0_74] : memref<22x22xf32, #tpu.memory_space<vmem>>, vector<22x22xf32>
      %c0_75 = arith.constant 0 : index
      %c0_76 = arith.constant 0 : index
      %91 = vector.load %arg9[%c0_75, %c0_76] : memref<22x22xf32, #tpu.memory_space<vmem>>, vector<22x22xf32>
      %cst_77 = arith.constant 0.000000e+00 : f32
      %92 = vector.broadcast %cst_77 : f32 to vector<16x16xf32>
      %93 = vector.extract_strided_slice %90 {offsets = [0, 0], sizes = [22, 16], strides = [1, 1]} : vector<22x22xf32> to vector<22x16xf32>
      %94 = vector.extract_strided_slice %91 {offsets = [0, 0], sizes = [22, 16], strides = [1, 1]} : vector<22x22xf32> to vector<22x16xf32>
      %c0_78 = arith.constant 0 : index
      %c0_79 = arith.constant 0 : index
      %95 = memref.load %arg3[%c0_78, %c0_79] : memref<2x49xf32, #tpu.memory_space<smem>>
      %96 = vector.extract_strided_slice %93 {offsets = [0, 0], sizes = [16, 16], strides = [1, 1]} : vector<22x16xf32> to vector<16x16xf32>
      %97 = vector.broadcast %95 : f32 to vector<16x16xf32>
      %98 = arith.mulf %97, %96 : vector<16x16xf32>
      %99 = arith.addf %92, %98 : vector<16x16xf32>
      %c1 = arith.constant 1 : index
      %c0_80 = arith.constant 0 : index
      %100 = memref.load %arg3[%c1, %c0_80] : memref<2x49xf32, #tpu.memory_space<smem>>
      %101 = vector.extract_strided_slice %94 {offsets = [0, 0], sizes = [16, 16], strides = [1, 1]} : vector<22x16xf32> to vector<16x16xf32>
      %102 = vector.broadcast %100 : f32 to vector<16x16xf32>
      %103 = arith.mulf %102, %101 : vector<16x16xf32>
      %104 = arith.addf %99, %103 : vector<16x16xf32>
      %c0_81 = arith.constant 0 : index
      %c7_82 = arith.constant 7 : index
      %105 = memref.load %arg3[%c0_81, %c7_82] : memref<2x49xf32, #tpu.memory_space<smem>>
      %106 = vector.extract_strided_slice %93 {offsets = [1, 0], sizes = [16, 16], strides = [1, 1]} : vector<22x16xf32> to vector<16x16xf32>
      %107 = vector.broadcast %105 : f32 to vector<16x16xf32>
      %108 = arith.mulf %107, %106 : vector<16x16xf32>
      %109 = arith.addf %104, %108 : vector<16x16xf32>
      %c1_83 = arith.constant 1 : index
      %c7_84 = arith.constant 7 : index
      %110 = memref.load %arg3[%c1_83, %c7_84] : memref<2x49xf32, #tpu.memory_space<smem>>
      %111 = vector.extract_strided_slice %94 {offsets = [1, 0], sizes = [16, 16], strides = [1, 1]} : vector<22x16xf32> to vector<16x16xf32>
      %112 = vector.broadcast %110 : f32 to vector<16x16xf32>
      %113 = arith.mulf %112, %111 : vector<16x16xf32>
      %114 = arith.addf %109, %113 : vector<16x16xf32>
      %c0_85 = arith.constant 0 : index
      %c14_86 = arith.constant 14 : index
      %115 = memref.load %arg3[%c0_85, %c14_86] : memref<2x49xf32, #tpu.memory_space<smem>>
      %116 = vector.extract_strided_slice %93 {offsets = [2, 0], sizes = [16, 16], strides = [1, 1]} : vector<22x16xf32> to vector<16x16xf32>
      %117 = vector.broadcast %115 : f32 to vector<16x16xf32>
      %118 = arith.mulf %117, %116 : vector<16x16xf32>
      %119 = arith.addf %114, %118 : vector<16x16xf32>
      %c1_87 = arith.constant 1 : index
      %c14_88 = arith.constant 14 : index
      %120 = memref.load %arg3[%c1_87, %c14_88] : memref<2x49xf32, #tpu.memory_space<smem>>
      %121 = vector.extract_strided_slice %94 {offsets = [2, 0], sizes = [16, 16], strides = [1, 1]} : vector<22x16xf32> to vector<16x16xf32>
      %122 = vector.broadcast %120 : f32 to vector<16x16xf32>
      %123 = arith.mulf %122, %121 : vector<16x16xf32>
      %124 = arith.addf %119, %123 : vector<16x16xf32>
      %c0_89 = arith.constant 0 : index
      %c21 = arith.constant 21 : index
      %125 = memref.load %arg3[%c0_89, %c21] : memref<2x49xf32, #tpu.memory_space<smem>>
      %126 = vector.extract_strided_slice %93 {offsets = [3, 0], sizes = [16, 16], strides = [1, 1]} : vector<22x16xf32> to vector<16x16xf32>
      %127 = vector.broadcast %125 : f32 to vector<16x16xf32>
      %128 = arith.mulf %127, %126 : vector<16x16xf32>
      %129 = arith.addf %124, %128 : vector<16x16xf32>
      %c1_90 = arith.constant 1 : index
      %c21_91 = arith.constant 21 : index
      %130 = memref.load %arg3[%c1_90, %c21_91] : memref<2x49xf32, #tpu.memory_space<smem>>
      %131 = vector.extract_strided_slice %94 {offsets = [3, 0], sizes = [16, 16], strides = [1, 1]} : vector<22x16xf32> to vector<16x16xf32>
      %132 = vector.broadcast %130 : f32 to vector<16x16xf32>
      %133 = arith.mulf %132, %131 : vector<16x16xf32>
      %134 = arith.addf %129, %133 : vector<16x16xf32>
      %c0_92 = arith.constant 0 : index
      %c28 = arith.constant 28 : index
      %135 = memref.load %arg3[%c0_92, %c28] : memref<2x49xf32, #tpu.memory_space<smem>>
      %136 = vector.extract_strided_slice %93 {offsets = [4, 0], sizes = [16, 16], strides = [1, 1]} : vector<22x16xf32> to vector<16x16xf32>
      %137 = vector.broadcast %135 : f32 to vector<16x16xf32>
      %138 = arith.mulf %137, %136 : vector<16x16xf32>
      %139 = arith.addf %134, %138 : vector<16x16xf32>
      %c1_93 = arith.constant 1 : index
      %c28_94 = arith.constant 28 : index
      %140 = memref.load %arg3[%c1_93, %c28_94] : memref<2x49xf32, #tpu.memory_space<smem>>
      %141 = vector.extract_strided_slice %94 {offsets = [4, 0], sizes = [16, 16], strides = [1, 1]} : vector<22x16xf32> to vector<16x16xf32>
      %142 = vector.broadcast %140 : f32 to vector<16x16xf32>
      %143 = arith.mulf %142, %141 : vector<16x16xf32>
      %144 = arith.addf %139, %143 : vector<16x16xf32>
      %c0_95 = arith.constant 0 : index
      %c35 = arith.constant 35 : index
      %145 = memref.load %arg3[%c0_95, %c35] : memref<2x49xf32, #tpu.memory_space<smem>>
      %146 = vector.extract_strided_slice %93 {offsets = [5, 0], sizes = [16, 16], strides = [1, 1]} : vector<22x16xf32> to vector<16x16xf32>
      %147 = vector.broadcast %145 : f32 to vector<16x16xf32>
      %148 = arith.mulf %147, %146 : vector<16x16xf32>
      %149 = arith.addf %144, %148 : vector<16x16xf32>
      %c1_96 = arith.constant 1 : index
      %c35_97 = arith.constant 35 : index
      %150 = memref.load %arg3[%c1_96, %c35_97] : memref<2x49xf32, #tpu.memory_space<smem>>
      %151 = vector.extract_strided_slice %94 {offsets = [5, 0], sizes = [16, 16], strides = [1, 1]} : vector<22x16xf32> to vector<16x16xf32>
      %152 = vector.broadcast %150 : f32 to vector<16x16xf32>
      %153 = arith.mulf %152, %151 : vector<16x16xf32>
      %154 = arith.addf %149, %153 : vector<16x16xf32>
      %c0_98 = arith.constant 0 : index
      %c42 = arith.constant 42 : index
      %155 = memref.load %arg3[%c0_98, %c42] : memref<2x49xf32, #tpu.memory_space<smem>>
      %156 = vector.extract_strided_slice %93 {offsets = [6, 0], sizes = [16, 16], strides = [1, 1]} : vector<22x16xf32> to vector<16x16xf32>
      %157 = vector.broadcast %155 : f32 to vector<16x16xf32>
      %158 = arith.mulf %157, %156 : vector<16x16xf32>
      %159 = arith.addf %154, %158 : vector<16x16xf32>
      %c1_99 = arith.constant 1 : index
      %c42_100 = arith.constant 42 : index
      %160 = memref.load %arg3[%c1_99, %c42_100] : memref<2x49xf32, #tpu.memory_space<smem>>
      %161 = vector.extract_strided_slice %94 {offsets = [6, 0], sizes = [16, 16], strides = [1, 1]} : vector<22x16xf32> to vector<16x16xf32>
      %162 = vector.broadcast %160 : f32 to vector<16x16xf32>
      %163 = arith.mulf %162, %161 : vector<16x16xf32>
      %164 = arith.addf %159, %163 : vector<16x16xf32>
      %165 = vector.extract_strided_slice %90 {offsets = [0, 1], sizes = [22, 16], strides = [1, 1]} : vector<22x22xf32> to vector<22x16xf32>
      %166 = vector.extract_strided_slice %91 {offsets = [0, 1], sizes = [22, 16], strides = [1, 1]} : vector<22x22xf32> to vector<22x16xf32>
      %c0_101 = arith.constant 0 : index
      %c1_102 = arith.constant 1 : index
      %167 = memref.load %arg3[%c0_101, %c1_102] : memref<2x49xf32, #tpu.memory_space<smem>>
      %168 = vector.extract_strided_slice %165 {offsets = [0, 0], sizes = [16, 16], strides = [1, 1]} : vector<22x16xf32> to vector<16x16xf32>
      %169 = vector.broadcast %167 : f32 to vector<16x16xf32>
      %170 = arith.mulf %169, %168 : vector<16x16xf32>
      %171 = arith.addf %164, %170 : vector<16x16xf32>
      %c1_103 = arith.constant 1 : index
      %c1_104 = arith.constant 1 : index
      %172 = memref.load %arg3[%c1_103, %c1_104] : memref<2x49xf32, #tpu.memory_space<smem>>
      %173 = vector.extract_strided_slice %166 {offsets = [0, 0], sizes = [16, 16], strides = [1, 1]} : vector<22x16xf32> to vector<16x16xf32>
      %174 = vector.broadcast %172 : f32 to vector<16x16xf32>
      %175 = arith.mulf %174, %173 : vector<16x16xf32>
      %176 = arith.addf %171, %175 : vector<16x16xf32>
      %c0_105 = arith.constant 0 : index
      %c8_106 = arith.constant 8 : index
      %177 = memref.load %arg3[%c0_105, %c8_106] : memref<2x49xf32, #tpu.memory_space<smem>>
      %178 = vector.extract_strided_slice %165 {offsets = [1, 0], sizes = [16, 16], strides = [1, 1]} : vector<22x16xf32> to vector<16x16xf32>
      %179 = vector.broadcast %177 : f32 to vector<16x16xf32>
      %180 = arith.mulf %179, %178 : vector<16x16xf32>
      %181 = arith.addf %176, %180 : vector<16x16xf32>
      %c1_107 = arith.constant 1 : index
      %c8_108 = arith.constant 8 : index
      %182 = memref.load %arg3[%c1_107, %c8_108] : memref<2x49xf32, #tpu.memory_space<smem>>
      %183 = vector.extract_strided_slice %166 {offsets = [1, 0], sizes = [16, 16], strides = [1, 1]} : vector<22x16xf32> to vector<16x16xf32>
      %184 = vector.broadcast %182 : f32 to vector<16x16xf32>
      %185 = arith.mulf %184, %183 : vector<16x16xf32>
      %186 = arith.addf %181, %185 : vector<16x16xf32>
      %c0_109 = arith.constant 0 : index
      %c15_110 = arith.constant 15 : index
      %187 = memref.load %arg3[%c0_109, %c15_110] : memref<2x49xf32, #tpu.memory_space<smem>>
      %188 = vector.extract_strided_slice %165 {offsets = [2, 0], sizes = [16, 16], strides = [1, 1]} : vector<22x16xf32> to vector<16x16xf32>
      %189 = vector.broadcast %187 : f32 to vector<16x16xf32>
      %190 = arith.mulf %189, %188 : vector<16x16xf32>
      %191 = arith.addf %186, %190 : vector<16x16xf32>
      %c1_111 = arith.constant 1 : index
      %c15_112 = arith.constant 15 : index
      %192 = memref.load %arg3[%c1_111, %c15_112] : memref<2x49xf32, #tpu.memory_space<smem>>
      %193 = vector.extract_strided_slice %166 {offsets = [2, 0], sizes = [16, 16], strides = [1, 1]} : vector<22x16xf32> to vector<16x16xf32>
      %194 = vector.broadcast %192 : f32 to vector<16x16xf32>
      %195 = arith.mulf %194, %193 : vector<16x16xf32>
      %196 = arith.addf %191, %195 : vector<16x16xf32>
      %c0_113 = arith.constant 0 : index
      %c22 = arith.constant 22 : index
      %197 = memref.load %arg3[%c0_113, %c22] : memref<2x49xf32, #tpu.memory_space<smem>>
      %198 = vector.extract_strided_slice %165 {offsets = [3, 0], sizes = [16, 16], strides = [1, 1]} : vector<22x16xf32> to vector<16x16xf32>
      %199 = vector.broadcast %197 : f32 to vector<16x16xf32>
      %200 = arith.mulf %199, %198 : vector<16x16xf32>
      %201 = arith.addf %196, %200 : vector<16x16xf32>
      %c1_114 = arith.constant 1 : index
      %c22_115 = arith.constant 22 : index
      %202 = memref.load %arg3[%c1_114, %c22_115] : memref<2x49xf32, #tpu.memory_space<smem>>
      %203 = vector.extract_strided_slice %166 {offsets = [3, 0], sizes = [16, 16], strides = [1, 1]} : vector<22x16xf32> to vector<16x16xf32>
      %204 = vector.broadcast %202 : f32 to vector<16x16xf32>
      %205 = arith.mulf %204, %203 : vector<16x16xf32>
      %206 = arith.addf %201, %205 : vector<16x16xf32>
      %c0_116 = arith.constant 0 : index
      %c29 = arith.constant 29 : index
      %207 = memref.load %arg3[%c0_116, %c29] : memref<2x49xf32, #tpu.memory_space<smem>>
      %208 = vector.extract_strided_slice %165 {offsets = [4, 0], sizes = [16, 16], strides = [1, 1]} : vector<22x16xf32> to vector<16x16xf32>
      %209 = vector.broadcast %207 : f32 to vector<16x16xf32>
      %210 = arith.mulf %209, %208 : vector<16x16xf32>
      %211 = arith.addf %206, %210 : vector<16x16xf32>
      %c1_117 = arith.constant 1 : index
      %c29_118 = arith.constant 29 : index
      %212 = memref.load %arg3[%c1_117, %c29_118] : memref<2x49xf32, #tpu.memory_space<smem>>
      %213 = vector.extract_strided_slice %166 {offsets = [4, 0], sizes = [16, 16], strides = [1, 1]} : vector<22x16xf32> to vector<16x16xf32>
      %214 = vector.broadcast %212 : f32 to vector<16x16xf32>
      %215 = arith.mulf %214, %213 : vector<16x16xf32>
      %216 = arith.addf %211, %215 : vector<16x16xf32>
      %c0_119 = arith.constant 0 : index
      %c36 = arith.constant 36 : index
      %217 = memref.load %arg3[%c0_119, %c36] : memref<2x49xf32, #tpu.memory_space<smem>>
      %218 = vector.extract_strided_slice %165 {offsets = [5, 0], sizes = [16, 16], strides = [1, 1]} : vector<22x16xf32> to vector<16x16xf32>
      %219 = vector.broadcast %217 : f32 to vector<16x16xf32>
      %220 = arith.mulf %219, %218 : vector<16x16xf32>
      %221 = arith.addf %216, %220 : vector<16x16xf32>
      %c1_120 = arith.constant 1 : index
      %c36_121 = arith.constant 36 : index
      %222 = memref.load %arg3[%c1_120, %c36_121] : memref<2x49xf32, #tpu.memory_space<smem>>
      %223 = vector.extract_strided_slice %166 {offsets = [5, 0], sizes = [16, 16], strides = [1, 1]} : vector<22x16xf32> to vector<16x16xf32>
      %224 = vector.broadcast %222 : f32 to vector<16x16xf32>
      %225 = arith.mulf %224, %223 : vector<16x16xf32>
      %226 = arith.addf %221, %225 : vector<16x16xf32>
      %c0_122 = arith.constant 0 : index
      %c43 = arith.constant 43 : index
      %227 = memref.load %arg3[%c0_122, %c43] : memref<2x49xf32, #tpu.memory_space<smem>>
      %228 = vector.extract_strided_slice %165 {offsets = [6, 0], sizes = [16, 16], strides = [1, 1]} : vector<22x16xf32> to vector<16x16xf32>
      %229 = vector.broadcast %227 : f32 to vector<16x16xf32>
      %230 = arith.mulf %229, %228 : vector<16x16xf32>
      %231 = arith.addf %226, %230 : vector<16x16xf32>
      %c1_123 = arith.constant 1 : index
      %c43_124 = arith.constant 43 : index
      %232 = memref.load %arg3[%c1_123, %c43_124] : memref<2x49xf32, #tpu.memory_space<smem>>
      %233 = vector.extract_strided_slice %166 {offsets = [6, 0], sizes = [16, 16], strides = [1, 1]} : vector<22x16xf32> to vector<16x16xf32>
      %234 = vector.broadcast %232 : f32 to vector<16x16xf32>
      %235 = arith.mulf %234, %233 : vector<16x16xf32>
      %236 = arith.addf %231, %235 : vector<16x16xf32>
      %237 = vector.extract_strided_slice %90 {offsets = [0, 2], sizes = [22, 16], strides = [1, 1]} : vector<22x22xf32> to vector<22x16xf32>
      %238 = vector.extract_strided_slice %91 {offsets = [0, 2], sizes = [22, 16], strides = [1, 1]} : vector<22x22xf32> to vector<22x16xf32>
      %c0_125 = arith.constant 0 : index
      %c2 = arith.constant 2 : index
      %239 = memref.load %arg3[%c0_125, %c2] : memref<2x49xf32, #tpu.memory_space<smem>>
      %240 = vector.extract_strided_slice %237 {offsets = [0, 0], sizes = [16, 16], strides = [1, 1]} : vector<22x16xf32> to vector<16x16xf32>
      %241 = vector.broadcast %239 : f32 to vector<16x16xf32>
      %242 = arith.mulf %241, %240 : vector<16x16xf32>
      %243 = arith.addf %236, %242 : vector<16x16xf32>
      %c1_126 = arith.constant 1 : index
      %c2_127 = arith.constant 2 : index
      %244 = memref.load %arg3[%c1_126, %c2_127] : memref<2x49xf32, #tpu.memory_space<smem>>
      %245 = vector.extract_strided_slice %238 {offsets = [0, 0], sizes = [16, 16], strides = [1, 1]} : vector<22x16xf32> to vector<16x16xf32>
      %246 = vector.broadcast %244 : f32 to vector<16x16xf32>
      %247 = arith.mulf %246, %245 : vector<16x16xf32>
      %248 = arith.addf %243, %247 : vector<16x16xf32>
      %c0_128 = arith.constant 0 : index
      %c9_129 = arith.constant 9 : index
      %249 = memref.load %arg3[%c0_128, %c9_129] : memref<2x49xf32, #tpu.memory_space<smem>>
      %250 = vector.extract_strided_slice %237 {offsets = [1, 0], sizes = [16, 16], strides = [1, 1]} : vector<22x16xf32> to vector<16x16xf32>
      %251 = vector.broadcast %249 : f32 to vector<16x16xf32>
      %252 = arith.mulf %251, %250 : vector<16x16xf32>
      %253 = arith.addf %248, %252 : vector<16x16xf32>
      %c1_130 = arith.constant 1 : index
      %c9_131 = arith.constant 9 : index
      %254 = memref.load %arg3[%c1_130, %c9_131] : memref<2x49xf32, #tpu.memory_space<smem>>
      %255 = vector.extract_strided_slice %238 {offsets = [1, 0], sizes = [16, 16], strides = [1, 1]} : vector<22x16xf32> to vector<16x16xf32>
      %256 = vector.broadcast %254 : f32 to vector<16x16xf32>
      %257 = arith.mulf %256, %255 : vector<16x16xf32>
      %258 = arith.addf %253, %257 : vector<16x16xf32>
      %c0_132 = arith.constant 0 : index
      %c16_133 = arith.constant 16 : index
      %259 = memref.load %arg3[%c0_132, %c16_133] : memref<2x49xf32, #tpu.memory_space<smem>>
      %260 = vector.extract_strided_slice %237 {offsets = [2, 0], sizes = [16, 16], strides = [1, 1]} : vector<22x16xf32> to vector<16x16xf32>
      %261 = vector.broadcast %259 : f32 to vector<16x16xf32>
      %262 = arith.mulf %261, %260 : vector<16x16xf32>
      %263 = arith.addf %258, %262 : vector<16x16xf32>
      %c1_134 = arith.constant 1 : index
      %c16_135 = arith.constant 16 : index
      %264 = memref.load %arg3[%c1_134, %c16_135] : memref<2x49xf32, #tpu.memory_space<smem>>
      %265 = vector.extract_strided_slice %238 {offsets = [2, 0], sizes = [16, 16], strides = [1, 1]} : vector<22x16xf32> to vector<16x16xf32>
      %266 = vector.broadcast %264 : f32 to vector<16x16xf32>
      %267 = arith.mulf %266, %265 : vector<16x16xf32>
      %268 = arith.addf %263, %267 : vector<16x16xf32>
      %c0_136 = arith.constant 0 : index
      %c23 = arith.constant 23 : index
      %269 = memref.load %arg3[%c0_136, %c23] : memref<2x49xf32, #tpu.memory_space<smem>>
      %270 = vector.extract_strided_slice %237 {offsets = [3, 0], sizes = [16, 16], strides = [1, 1]} : vector<22x16xf32> to vector<16x16xf32>
      %271 = vector.broadcast %269 : f32 to vector<16x16xf32>
      %272 = arith.mulf %271, %270 : vector<16x16xf32>
      %273 = arith.addf %268, %272 : vector<16x16xf32>
      %c1_137 = arith.constant 1 : index
      %c23_138 = arith.constant 23 : index
      %274 = memref.load %arg3[%c1_137, %c23_138] : memref<2x49xf32, #tpu.memory_space<smem>>
      %275 = vector.extract_strided_slice %238 {offsets = [3, 0], sizes = [16, 16], strides = [1, 1]} : vector<22x16xf32> to vector<16x16xf32>
      %276 = vector.broadcast %274 : f32 to vector<16x16xf32>
      %277 = arith.mulf %276, %275 : vector<16x16xf32>
      %278 = arith.addf %273, %277 : vector<16x16xf32>
      %c0_139 = arith.constant 0 : index
      %c30 = arith.constant 30 : index
      %279 = memref.load %arg3[%c0_139, %c30] : memref<2x49xf32, #tpu.memory_space<smem>>
      %280 = vector.extract_strided_slice %237 {offsets = [4, 0], sizes = [16, 16], strides = [1, 1]} : vector<22x16xf32> to vector<16x16xf32>
      %281 = vector.broadcast %279 : f32 to vector<16x16xf32>
      %282 = arith.mulf %281, %280 : vector<16x16xf32>
      %283 = arith.addf %278, %282 : vector<16x16xf32>
      %c1_140 = arith.constant 1 : index
      %c30_141 = arith.constant 30 : index
      %284 = memref.load %arg3[%c1_140, %c30_141] : memref<2x49xf32, #tpu.memory_space<smem>>
      %285 = vector.extract_strided_slice %238 {offsets = [4, 0], sizes = [16, 16], strides = [1, 1]} : vector<22x16xf32> to vector<16x16xf32>
      %286 = vector.broadcast %284 : f32 to vector<16x16xf32>
      %287 = arith.mulf %286, %285 : vector<16x16xf32>
      %288 = arith.addf %283, %287 : vector<16x16xf32>
      %c0_142 = arith.constant 0 : index
      %c37 = arith.constant 37 : index
      %289 = memref.load %arg3[%c0_142, %c37] : memref<2x49xf32, #tpu.memory_space<smem>>
      %290 = vector.extract_strided_slice %237 {offsets = [5, 0], sizes = [16, 16], strides = [1, 1]} : vector<22x16xf32> to vector<16x16xf32>
      %291 = vector.broadcast %289 : f32 to vector<16x16xf32>
      %292 = arith.mulf %291, %290 : vector<16x16xf32>
      %293 = arith.addf %288, %292 : vector<16x16xf32>
      %c1_143 = arith.constant 1 : index
      %c37_144 = arith.constant 37 : index
      %294 = memref.load %arg3[%c1_143, %c37_144] : memref<2x49xf32, #tpu.memory_space<smem>>
      %295 = vector.extract_strided_slice %238 {offsets = [5, 0], sizes = [16, 16], strides = [1, 1]} : vector<22x16xf32> to vector<16x16xf32>
      %296 = vector.broadcast %294 : f32 to vector<16x16xf32>
      %297 = arith.mulf %296, %295 : vector<16x16xf32>
      %298 = arith.addf %293, %297 : vector<16x16xf32>
      %c0_145 = arith.constant 0 : index
      %c44 = arith.constant 44 : index
      %299 = memref.load %arg3[%c0_145, %c44] : memref<2x49xf32, #tpu.memory_space<smem>>
      %300 = vector.extract_strided_slice %237 {offsets = [6, 0], sizes = [16, 16], strides = [1, 1]} : vector<22x16xf32> to vector<16x16xf32>
      %301 = vector.broadcast %299 : f32 to vector<16x16xf32>
      %302 = arith.mulf %301, %300 : vector<16x16xf32>
      %303 = arith.addf %298, %302 : vector<16x16xf32>
      %c1_146 = arith.constant 1 : index
      %c44_147 = arith.constant 44 : index
      %304 = memref.load %arg3[%c1_146, %c44_147] : memref<2x49xf32, #tpu.memory_space<smem>>
      %305 = vector.extract_strided_slice %238 {offsets = [6, 0], sizes = [16, 16], strides = [1, 1]} : vector<22x16xf32> to vector<16x16xf32>
      %306 = vector.broadcast %304 : f32 to vector<16x16xf32>
      %307 = arith.mulf %306, %305 : vector<16x16xf32>
      %308 = arith.addf %303, %307 : vector<16x16xf32>
      %309 = vector.extract_strided_slice %90 {offsets = [0, 3], sizes = [22, 16], strides = [1, 1]} : vector<22x22xf32> to vector<22x16xf32>
      %310 = vector.extract_strided_slice %91 {offsets = [0, 3], sizes = [22, 16], strides = [1, 1]} : vector<22x22xf32> to vector<22x16xf32>
      %c0_148 = arith.constant 0 : index
      %c3_149 = arith.constant 3 : index
      %311 = memref.load %arg3[%c0_148, %c3_149] : memref<2x49xf32, #tpu.memory_space<smem>>
      %312 = vector.extract_strided_slice %309 {offsets = [0, 0], sizes = [16, 16], strides = [1, 1]} : vector<22x16xf32> to vector<16x16xf32>
      %313 = vector.broadcast %311 : f32 to vector<16x16xf32>
      %314 = arith.mulf %313, %312 : vector<16x16xf32>
      %315 = arith.addf %308, %314 : vector<16x16xf32>
      %c1_150 = arith.constant 1 : index
      %c3_151 = arith.constant 3 : index
      %316 = memref.load %arg3[%c1_150, %c3_151] : memref<2x49xf32, #tpu.memory_space<smem>>
      %317 = vector.extract_strided_slice %310 {offsets = [0, 0], sizes = [16, 16], strides = [1, 1]} : vector<22x16xf32> to vector<16x16xf32>
      %318 = vector.broadcast %316 : f32 to vector<16x16xf32>
      %319 = arith.mulf %318, %317 : vector<16x16xf32>
      %320 = arith.addf %315, %319 : vector<16x16xf32>
      %c0_152 = arith.constant 0 : index
      %c10_153 = arith.constant 10 : index
      %321 = memref.load %arg3[%c0_152, %c10_153] : memref<2x49xf32, #tpu.memory_space<smem>>
      %322 = vector.extract_strided_slice %309 {offsets = [1, 0], sizes = [16, 16], strides = [1, 1]} : vector<22x16xf32> to vector<16x16xf32>
      %323 = vector.broadcast %321 : f32 to vector<16x16xf32>
      %324 = arith.mulf %323, %322 : vector<16x16xf32>
      %325 = arith.addf %320, %324 : vector<16x16xf32>
      %c1_154 = arith.constant 1 : index
      %c10_155 = arith.constant 10 : index
      %326 = memref.load %arg3[%c1_154, %c10_155] : memref<2x49xf32, #tpu.memory_space<smem>>
      %327 = vector.extract_strided_slice %310 {offsets = [1, 0], sizes = [16, 16], strides = [1, 1]} : vector<22x16xf32> to vector<16x16xf32>
      %328 = vector.broadcast %326 : f32 to vector<16x16xf32>
      %329 = arith.mulf %328, %327 : vector<16x16xf32>
      %330 = arith.addf %325, %329 : vector<16x16xf32>
      %c0_156 = arith.constant 0 : index
      %c17_157 = arith.constant 17 : index
      %331 = memref.load %arg3[%c0_156, %c17_157] : memref<2x49xf32, #tpu.memory_space<smem>>
      %332 = vector.extract_strided_slice %309 {offsets = [2, 0], sizes = [16, 16], strides = [1, 1]} : vector<22x16xf32> to vector<16x16xf32>
      %333 = vector.broadcast %331 : f32 to vector<16x16xf32>
      %334 = arith.mulf %333, %332 : vector<16x16xf32>
      %335 = arith.addf %330, %334 : vector<16x16xf32>
      %c1_158 = arith.constant 1 : index
      %c17_159 = arith.constant 17 : index
      %336 = memref.load %arg3[%c1_158, %c17_159] : memref<2x49xf32, #tpu.memory_space<smem>>
      %337 = vector.extract_strided_slice %310 {offsets = [2, 0], sizes = [16, 16], strides = [1, 1]} : vector<22x16xf32> to vector<16x16xf32>
      %338 = vector.broadcast %336 : f32 to vector<16x16xf32>
      %339 = arith.mulf %338, %337 : vector<16x16xf32>
      %340 = arith.addf %335, %339 : vector<16x16xf32>
      %c0_160 = arith.constant 0 : index
      %c24 = arith.constant 24 : index
      %341 = memref.load %arg3[%c0_160, %c24] : memref<2x49xf32, #tpu.memory_space<smem>>
      %342 = vector.extract_strided_slice %309 {offsets = [3, 0], sizes = [16, 16], strides = [1, 1]} : vector<22x16xf32> to vector<16x16xf32>
      %343 = vector.broadcast %341 : f32 to vector<16x16xf32>
      %344 = arith.mulf %343, %342 : vector<16x16xf32>
      %345 = arith.addf %340, %344 : vector<16x16xf32>
      %c1_161 = arith.constant 1 : index
      %c24_162 = arith.constant 24 : index
      %346 = memref.load %arg3[%c1_161, %c24_162] : memref<2x49xf32, #tpu.memory_space<smem>>
      %347 = vector.extract_strided_slice %310 {offsets = [3, 0], sizes = [16, 16], strides = [1, 1]} : vector<22x16xf32> to vector<16x16xf32>
      %348 = vector.broadcast %346 : f32 to vector<16x16xf32>
      %349 = arith.mulf %348, %347 : vector<16x16xf32>
      %350 = arith.addf %345, %349 : vector<16x16xf32>
      %c0_163 = arith.constant 0 : index
      %c31 = arith.constant 31 : index
      %351 = memref.load %arg3[%c0_163, %c31] : memref<2x49xf32, #tpu.memory_space<smem>>
      %352 = vector.extract_strided_slice %309 {offsets = [4, 0], sizes = [16, 16], strides = [1, 1]} : vector<22x16xf32> to vector<16x16xf32>
      %353 = vector.broadcast %351 : f32 to vector<16x16xf32>
      %354 = arith.mulf %353, %352 : vector<16x16xf32>
      %355 = arith.addf %350, %354 : vector<16x16xf32>
      %c1_164 = arith.constant 1 : index
      %c31_165 = arith.constant 31 : index
      %356 = memref.load %arg3[%c1_164, %c31_165] : memref<2x49xf32, #tpu.memory_space<smem>>
      %357 = vector.extract_strided_slice %310 {offsets = [4, 0], sizes = [16, 16], strides = [1, 1]} : vector<22x16xf32> to vector<16x16xf32>
      %358 = vector.broadcast %356 : f32 to vector<16x16xf32>
      %359 = arith.mulf %358, %357 : vector<16x16xf32>
      %360 = arith.addf %355, %359 : vector<16x16xf32>
      %c0_166 = arith.constant 0 : index
      %c38 = arith.constant 38 : index
      %361 = memref.load %arg3[%c0_166, %c38] : memref<2x49xf32, #tpu.memory_space<smem>>
      %362 = vector.extract_strided_slice %309 {offsets = [5, 0], sizes = [16, 16], strides = [1, 1]} : vector<22x16xf32> to vector<16x16xf32>
      %363 = vector.broadcast %361 : f32 to vector<16x16xf32>
      %364 = arith.mulf %363, %362 : vector<16x16xf32>
      %365 = arith.addf %360, %364 : vector<16x16xf32>
      %c1_167 = arith.constant 1 : index
      %c38_168 = arith.constant 38 : index
      %366 = memref.load %arg3[%c1_167, %c38_168] : memref<2x49xf32, #tpu.memory_space<smem>>
      %367 = vector.extract_strided_slice %310 {offsets = [5, 0], sizes = [16, 16], strides = [1, 1]} : vector<22x16xf32> to vector<16x16xf32>
      %368 = vector.broadcast %366 : f32 to vector<16x16xf32>
      %369 = arith.mulf %368, %367 : vector<16x16xf32>
      %370 = arith.addf %365, %369 : vector<16x16xf32>
      %c0_169 = arith.constant 0 : index
      %c45 = arith.constant 45 : index
      %371 = memref.load %arg3[%c0_169, %c45] : memref<2x49xf32, #tpu.memory_space<smem>>
      %372 = vector.extract_strided_slice %309 {offsets = [6, 0], sizes = [16, 16], strides = [1, 1]} : vector<22x16xf32> to vector<16x16xf32>
      %373 = vector.broadcast %371 : f32 to vector<16x16xf32>
      %374 = arith.mulf %373, %372 : vector<16x16xf32>
      %375 = arith.addf %370, %374 : vector<16x16xf32>
      %c1_170 = arith.constant 1 : index
      %c45_171 = arith.constant 45 : index
      %376 = memref.load %arg3[%c1_170, %c45_171] : memref<2x49xf32, #tpu.memory_space<smem>>
      %377 = vector.extract_strided_slice %310 {offsets = [6, 0], sizes = [16, 16], strides = [1, 1]} : vector<22x16xf32> to vector<16x16xf32>
      %378 = vector.broadcast %376 : f32 to vector<16x16xf32>
      %379 = arith.mulf %378, %377 : vector<16x16xf32>
      %380 = arith.addf %375, %379 : vector<16x16xf32>
      %381 = vector.extract_strided_slice %90 {offsets = [0, 4], sizes = [22, 16], strides = [1, 1]} : vector<22x22xf32> to vector<22x16xf32>
      %382 = vector.extract_strided_slice %91 {offsets = [0, 4], sizes = [22, 16], strides = [1, 1]} : vector<22x22xf32> to vector<22x16xf32>
      %c0_172 = arith.constant 0 : index
      %c4_173 = arith.constant 4 : index
      %383 = memref.load %arg3[%c0_172, %c4_173] : memref<2x49xf32, #tpu.memory_space<smem>>
      %384 = vector.extract_strided_slice %381 {offsets = [0, 0], sizes = [16, 16], strides = [1, 1]} : vector<22x16xf32> to vector<16x16xf32>
      %385 = vector.broadcast %383 : f32 to vector<16x16xf32>
      %386 = arith.mulf %385, %384 : vector<16x16xf32>
      %387 = arith.addf %380, %386 : vector<16x16xf32>
      %c1_174 = arith.constant 1 : index
      %c4_175 = arith.constant 4 : index
      %388 = memref.load %arg3[%c1_174, %c4_175] : memref<2x49xf32, #tpu.memory_space<smem>>
      %389 = vector.extract_strided_slice %382 {offsets = [0, 0], sizes = [16, 16], strides = [1, 1]} : vector<22x16xf32> to vector<16x16xf32>
      %390 = vector.broadcast %388 : f32 to vector<16x16xf32>
      %391 = arith.mulf %390, %389 : vector<16x16xf32>
      %392 = arith.addf %387, %391 : vector<16x16xf32>
      %c0_176 = arith.constant 0 : index
      %c11_177 = arith.constant 11 : index
      %393 = memref.load %arg3[%c0_176, %c11_177] : memref<2x49xf32, #tpu.memory_space<smem>>
      %394 = vector.extract_strided_slice %381 {offsets = [1, 0], sizes = [16, 16], strides = [1, 1]} : vector<22x16xf32> to vector<16x16xf32>
      %395 = vector.broadcast %393 : f32 to vector<16x16xf32>
      %396 = arith.mulf %395, %394 : vector<16x16xf32>
      %397 = arith.addf %392, %396 : vector<16x16xf32>
      %c1_178 = arith.constant 1 : index
      %c11_179 = arith.constant 11 : index
      %398 = memref.load %arg3[%c1_178, %c11_179] : memref<2x49xf32, #tpu.memory_space<smem>>
      %399 = vector.extract_strided_slice %382 {offsets = [1, 0], sizes = [16, 16], strides = [1, 1]} : vector<22x16xf32> to vector<16x16xf32>
      %400 = vector.broadcast %398 : f32 to vector<16x16xf32>
      %401 = arith.mulf %400, %399 : vector<16x16xf32>
      %402 = arith.addf %397, %401 : vector<16x16xf32>
      %c0_180 = arith.constant 0 : index
      %c18_181 = arith.constant 18 : index
      %403 = memref.load %arg3[%c0_180, %c18_181] : memref<2x49xf32, #tpu.memory_space<smem>>
      %404 = vector.extract_strided_slice %381 {offsets = [2, 0], sizes = [16, 16], strides = [1, 1]} : vector<22x16xf32> to vector<16x16xf32>
      %405 = vector.broadcast %403 : f32 to vector<16x16xf32>
      %406 = arith.mulf %405, %404 : vector<16x16xf32>
      %407 = arith.addf %402, %406 : vector<16x16xf32>
      %c1_182 = arith.constant 1 : index
      %c18_183 = arith.constant 18 : index
      %408 = memref.load %arg3[%c1_182, %c18_183] : memref<2x49xf32, #tpu.memory_space<smem>>
      %409 = vector.extract_strided_slice %382 {offsets = [2, 0], sizes = [16, 16], strides = [1, 1]} : vector<22x16xf32> to vector<16x16xf32>
      %410 = vector.broadcast %408 : f32 to vector<16x16xf32>
      %411 = arith.mulf %410, %409 : vector<16x16xf32>
      %412 = arith.addf %407, %411 : vector<16x16xf32>
      %c0_184 = arith.constant 0 : index
      %c25 = arith.constant 25 : index
      %413 = memref.load %arg3[%c0_184, %c25] : memref<2x49xf32, #tpu.memory_space<smem>>
      %414 = vector.extract_strided_slice %381 {offsets = [3, 0], sizes = [16, 16], strides = [1, 1]} : vector<22x16xf32> to vector<16x16xf32>
      %415 = vector.broadcast %413 : f32 to vector<16x16xf32>
      %416 = arith.mulf %415, %414 : vector<16x16xf32>
      %417 = arith.addf %412, %416 : vector<16x16xf32>
      %c1_185 = arith.constant 1 : index
      %c25_186 = arith.constant 25 : index
      %418 = memref.load %arg3[%c1_185, %c25_186] : memref<2x49xf32, #tpu.memory_space<smem>>
      %419 = vector.extract_strided_slice %382 {offsets = [3, 0], sizes = [16, 16], strides = [1, 1]} : vector<22x16xf32> to vector<16x16xf32>
      %420 = vector.broadcast %418 : f32 to vector<16x16xf32>
      %421 = arith.mulf %420, %419 : vector<16x16xf32>
      %422 = arith.addf %417, %421 : vector<16x16xf32>
      %c0_187 = arith.constant 0 : index
      %c32 = arith.constant 32 : index
      %423 = memref.load %arg3[%c0_187, %c32] : memref<2x49xf32, #tpu.memory_space<smem>>
      %424 = vector.extract_strided_slice %381 {offsets = [4, 0], sizes = [16, 16], strides = [1, 1]} : vector<22x16xf32> to vector<16x16xf32>
      %425 = vector.broadcast %423 : f32 to vector<16x16xf32>
      %426 = arith.mulf %425, %424 : vector<16x16xf32>
      %427 = arith.addf %422, %426 : vector<16x16xf32>
      %c1_188 = arith.constant 1 : index
      %c32_189 = arith.constant 32 : index
      %428 = memref.load %arg3[%c1_188, %c32_189] : memref<2x49xf32, #tpu.memory_space<smem>>
      %429 = vector.extract_strided_slice %382 {offsets = [4, 0], sizes = [16, 16], strides = [1, 1]} : vector<22x16xf32> to vector<16x16xf32>
      %430 = vector.broadcast %428 : f32 to vector<16x16xf32>
      %431 = arith.mulf %430, %429 : vector<16x16xf32>
      %432 = arith.addf %427, %431 : vector<16x16xf32>
      %c0_190 = arith.constant 0 : index
      %c39 = arith.constant 39 : index
      %433 = memref.load %arg3[%c0_190, %c39] : memref<2x49xf32, #tpu.memory_space<smem>>
      %434 = vector.extract_strided_slice %381 {offsets = [5, 0], sizes = [16, 16], strides = [1, 1]} : vector<22x16xf32> to vector<16x16xf32>
      %435 = vector.broadcast %433 : f32 to vector<16x16xf32>
      %436 = arith.mulf %435, %434 : vector<16x16xf32>
      %437 = arith.addf %432, %436 : vector<16x16xf32>
      %c1_191 = arith.constant 1 : index
      %c39_192 = arith.constant 39 : index
      %438 = memref.load %arg3[%c1_191, %c39_192] : memref<2x49xf32, #tpu.memory_space<smem>>
      %439 = vector.extract_strided_slice %382 {offsets = [5, 0], sizes = [16, 16], strides = [1, 1]} : vector<22x16xf32> to vector<16x16xf32>
      %440 = vector.broadcast %438 : f32 to vector<16x16xf32>
      %441 = arith.mulf %440, %439 : vector<16x16xf32>
      %442 = arith.addf %437, %441 : vector<16x16xf32>
      %c0_193 = arith.constant 0 : index
      %c46 = arith.constant 46 : index
      %443 = memref.load %arg3[%c0_193, %c46] : memref<2x49xf32, #tpu.memory_space<smem>>
      %444 = vector.extract_strided_slice %381 {offsets = [6, 0], sizes = [16, 16], strides = [1, 1]} : vector<22x16xf32> to vector<16x16xf32>
      %445 = vector.broadcast %443 : f32 to vector<16x16xf32>
      %446 = arith.mulf %445, %444 : vector<16x16xf32>
      %447 = arith.addf %442, %446 : vector<16x16xf32>
      %c1_194 = arith.constant 1 : index
      %c46_195 = arith.constant 46 : index
      %448 = memref.load %arg3[%c1_194, %c46_195] : memref<2x49xf32, #tpu.memory_space<smem>>
      %449 = vector.extract_strided_slice %382 {offsets = [6, 0], sizes = [16, 16], strides = [1, 1]} : vector<22x16xf32> to vector<16x16xf32>
      %450 = vector.broadcast %448 : f32 to vector<16x16xf32>
      %451 = arith.mulf %450, %449 : vector<16x16xf32>
      %452 = arith.addf %447, %451 : vector<16x16xf32>
      %453 = vector.extract_strided_slice %90 {offsets = [0, 5], sizes = [22, 16], strides = [1, 1]} : vector<22x22xf32> to vector<22x16xf32>
      %454 = vector.extract_strided_slice %91 {offsets = [0, 5], sizes = [22, 16], strides = [1, 1]} : vector<22x22xf32> to vector<22x16xf32>
      %c0_196 = arith.constant 0 : index
      %c5_197 = arith.constant 5 : index
      %455 = memref.load %arg3[%c0_196, %c5_197] : memref<2x49xf32, #tpu.memory_space<smem>>
      %456 = vector.extract_strided_slice %453 {offsets = [0, 0], sizes = [16, 16], strides = [1, 1]} : vector<22x16xf32> to vector<16x16xf32>
      %457 = vector.broadcast %455 : f32 to vector<16x16xf32>
      %458 = arith.mulf %457, %456 : vector<16x16xf32>
      %459 = arith.addf %452, %458 : vector<16x16xf32>
      %c1_198 = arith.constant 1 : index
      %c5_199 = arith.constant 5 : index
      %460 = memref.load %arg3[%c1_198, %c5_199] : memref<2x49xf32, #tpu.memory_space<smem>>
      %461 = vector.extract_strided_slice %454 {offsets = [0, 0], sizes = [16, 16], strides = [1, 1]} : vector<22x16xf32> to vector<16x16xf32>
      %462 = vector.broadcast %460 : f32 to vector<16x16xf32>
      %463 = arith.mulf %462, %461 : vector<16x16xf32>
      %464 = arith.addf %459, %463 : vector<16x16xf32>
      %c0_200 = arith.constant 0 : index
      %c12_201 = arith.constant 12 : index
      %465 = memref.load %arg3[%c0_200, %c12_201] : memref<2x49xf32, #tpu.memory_space<smem>>
      %466 = vector.extract_strided_slice %453 {offsets = [1, 0], sizes = [16, 16], strides = [1, 1]} : vector<22x16xf32> to vector<16x16xf32>
      %467 = vector.broadcast %465 : f32 to vector<16x16xf32>
      %468 = arith.mulf %467, %466 : vector<16x16xf32>
      %469 = arith.addf %464, %468 : vector<16x16xf32>
      %c1_202 = arith.constant 1 : index
      %c12_203 = arith.constant 12 : index
      %470 = memref.load %arg3[%c1_202, %c12_203] : memref<2x49xf32, #tpu.memory_space<smem>>
      %471 = vector.extract_strided_slice %454 {offsets = [1, 0], sizes = [16, 16], strides = [1, 1]} : vector<22x16xf32> to vector<16x16xf32>
      %472 = vector.broadcast %470 : f32 to vector<16x16xf32>
      %473 = arith.mulf %472, %471 : vector<16x16xf32>
      %474 = arith.addf %469, %473 : vector<16x16xf32>
      %c0_204 = arith.constant 0 : index
      %c19 = arith.constant 19 : index
      %475 = memref.load %arg3[%c0_204, %c19] : memref<2x49xf32, #tpu.memory_space<smem>>
      %476 = vector.extract_strided_slice %453 {offsets = [2, 0], sizes = [16, 16], strides = [1, 1]} : vector<22x16xf32> to vector<16x16xf32>
      %477 = vector.broadcast %475 : f32 to vector<16x16xf32>
      %478 = arith.mulf %477, %476 : vector<16x16xf32>
      %479 = arith.addf %474, %478 : vector<16x16xf32>
      %c1_205 = arith.constant 1 : index
      %c19_206 = arith.constant 19 : index
      %480 = memref.load %arg3[%c1_205, %c19_206] : memref<2x49xf32, #tpu.memory_space<smem>>
      %481 = vector.extract_strided_slice %454 {offsets = [2, 0], sizes = [16, 16], strides = [1, 1]} : vector<22x16xf32> to vector<16x16xf32>
      %482 = vector.broadcast %480 : f32 to vector<16x16xf32>
      %483 = arith.mulf %482, %481 : vector<16x16xf32>
      %484 = arith.addf %479, %483 : vector<16x16xf32>
      %c0_207 = arith.constant 0 : index
      %c26 = arith.constant 26 : index
      %485 = memref.load %arg3[%c0_207, %c26] : memref<2x49xf32, #tpu.memory_space<smem>>
      %486 = vector.extract_strided_slice %453 {offsets = [3, 0], sizes = [16, 16], strides = [1, 1]} : vector<22x16xf32> to vector<16x16xf32>
      %487 = vector.broadcast %485 : f32 to vector<16x16xf32>
      %488 = arith.mulf %487, %486 : vector<16x16xf32>
      %489 = arith.addf %484, %488 : vector<16x16xf32>
      %c1_208 = arith.constant 1 : index
      %c26_209 = arith.constant 26 : index
      %490 = memref.load %arg3[%c1_208, %c26_209] : memref<2x49xf32, #tpu.memory_space<smem>>
      %491 = vector.extract_strided_slice %454 {offsets = [3, 0], sizes = [16, 16], strides = [1, 1]} : vector<22x16xf32> to vector<16x16xf32>
      %492 = vector.broadcast %490 : f32 to vector<16x16xf32>
      %493 = arith.mulf %492, %491 : vector<16x16xf32>
      %494 = arith.addf %489, %493 : vector<16x16xf32>
      %c0_210 = arith.constant 0 : index
      %c33 = arith.constant 33 : index
      %495 = memref.load %arg3[%c0_210, %c33] : memref<2x49xf32, #tpu.memory_space<smem>>
      %496 = vector.extract_strided_slice %453 {offsets = [4, 0], sizes = [16, 16], strides = [1, 1]} : vector<22x16xf32> to vector<16x16xf32>
      %497 = vector.broadcast %495 : f32 to vector<16x16xf32>
      %498 = arith.mulf %497, %496 : vector<16x16xf32>
      %499 = arith.addf %494, %498 : vector<16x16xf32>
      %c1_211 = arith.constant 1 : index
      %c33_212 = arith.constant 33 : index
      %500 = memref.load %arg3[%c1_211, %c33_212] : memref<2x49xf32, #tpu.memory_space<smem>>
      %501 = vector.extract_strided_slice %454 {offsets = [4, 0], sizes = [16, 16], strides = [1, 1]} : vector<22x16xf32> to vector<16x16xf32>
      %502 = vector.broadcast %500 : f32 to vector<16x16xf32>
      %503 = arith.mulf %502, %501 : vector<16x16xf32>
      %504 = arith.addf %499, %503 : vector<16x16xf32>
      %c0_213 = arith.constant 0 : index
      %c40 = arith.constant 40 : index
      %505 = memref.load %arg3[%c0_213, %c40] : memref<2x49xf32, #tpu.memory_space<smem>>
      %506 = vector.extract_strided_slice %453 {offsets = [5, 0], sizes = [16, 16], strides = [1, 1]} : vector<22x16xf32> to vector<16x16xf32>
      %507 = vector.broadcast %505 : f32 to vector<16x16xf32>
      %508 = arith.mulf %507, %506 : vector<16x16xf32>
      %509 = arith.addf %504, %508 : vector<16x16xf32>
      %c1_214 = arith.constant 1 : index
      %c40_215 = arith.constant 40 : index
      %510 = memref.load %arg3[%c1_214, %c40_215] : memref<2x49xf32, #tpu.memory_space<smem>>
      %511 = vector.extract_strided_slice %454 {offsets = [5, 0], sizes = [16, 16], strides = [1, 1]} : vector<22x16xf32> to vector<16x16xf32>
      %512 = vector.broadcast %510 : f32 to vector<16x16xf32>
      %513 = arith.mulf %512, %511 : vector<16x16xf32>
      %514 = arith.addf %509, %513 : vector<16x16xf32>
      %c0_216 = arith.constant 0 : index
      %c47 = arith.constant 47 : index
      %515 = memref.load %arg3[%c0_216, %c47] : memref<2x49xf32, #tpu.memory_space<smem>>
      %516 = vector.extract_strided_slice %453 {offsets = [6, 0], sizes = [16, 16], strides = [1, 1]} : vector<22x16xf32> to vector<16x16xf32>
      %517 = vector.broadcast %515 : f32 to vector<16x16xf32>
      %518 = arith.mulf %517, %516 : vector<16x16xf32>
      %519 = arith.addf %514, %518 : vector<16x16xf32>
      %c1_217 = arith.constant 1 : index
      %c47_218 = arith.constant 47 : index
      %520 = memref.load %arg3[%c1_217, %c47_218] : memref<2x49xf32, #tpu.memory_space<smem>>
      %521 = vector.extract_strided_slice %454 {offsets = [6, 0], sizes = [16, 16], strides = [1, 1]} : vector<22x16xf32> to vector<16x16xf32>
      %522 = vector.broadcast %520 : f32 to vector<16x16xf32>
      %523 = arith.mulf %522, %521 : vector<16x16xf32>
      %524 = arith.addf %519, %523 : vector<16x16xf32>
      %525 = vector.extract_strided_slice %90 {offsets = [0, 6], sizes = [22, 16], strides = [1, 1]} : vector<22x22xf32> to vector<22x16xf32>
      %526 = vector.extract_strided_slice %91 {offsets = [0, 6], sizes = [22, 16], strides = [1, 1]} : vector<22x22xf32> to vector<22x16xf32>
      %c0_219 = arith.constant 0 : index
      %c6_220 = arith.constant 6 : index
      %527 = memref.load %arg3[%c0_219, %c6_220] : memref<2x49xf32, #tpu.memory_space<smem>>
      %528 = vector.extract_strided_slice %525 {offsets = [0, 0], sizes = [16, 16], strides = [1, 1]} : vector<22x16xf32> to vector<16x16xf32>
      %529 = vector.broadcast %527 : f32 to vector<16x16xf32>
      %530 = arith.mulf %529, %528 : vector<16x16xf32>
      %531 = arith.addf %524, %530 : vector<16x16xf32>
      %c1_221 = arith.constant 1 : index
      %c6_222 = arith.constant 6 : index
      %532 = memref.load %arg3[%c1_221, %c6_222] : memref<2x49xf32, #tpu.memory_space<smem>>
      %533 = vector.extract_strided_slice %526 {offsets = [0, 0], sizes = [16, 16], strides = [1, 1]} : vector<22x16xf32> to vector<16x16xf32>
      %534 = vector.broadcast %532 : f32 to vector<16x16xf32>
      %535 = arith.mulf %534, %533 : vector<16x16xf32>
      %536 = arith.addf %531, %535 : vector<16x16xf32>
      %c0_223 = arith.constant 0 : index
      %c13_224 = arith.constant 13 : index
      %537 = memref.load %arg3[%c0_223, %c13_224] : memref<2x49xf32, #tpu.memory_space<smem>>
      %538 = vector.extract_strided_slice %525 {offsets = [1, 0], sizes = [16, 16], strides = [1, 1]} : vector<22x16xf32> to vector<16x16xf32>
      %539 = vector.broadcast %537 : f32 to vector<16x16xf32>
      %540 = arith.mulf %539, %538 : vector<16x16xf32>
      %541 = arith.addf %536, %540 : vector<16x16xf32>
      %c1_225 = arith.constant 1 : index
      %c13_226 = arith.constant 13 : index
      %542 = memref.load %arg3[%c1_225, %c13_226] : memref<2x49xf32, #tpu.memory_space<smem>>
      %543 = vector.extract_strided_slice %526 {offsets = [1, 0], sizes = [16, 16], strides = [1, 1]} : vector<22x16xf32> to vector<16x16xf32>
      %544 = vector.broadcast %542 : f32 to vector<16x16xf32>
      %545 = arith.mulf %544, %543 : vector<16x16xf32>
      %546 = arith.addf %541, %545 : vector<16x16xf32>
      %c0_227 = arith.constant 0 : index
      %c20 = arith.constant 20 : index
      %547 = memref.load %arg3[%c0_227, %c20] : memref<2x49xf32, #tpu.memory_space<smem>>
      %548 = vector.extract_strided_slice %525 {offsets = [2, 0], sizes = [16, 16], strides = [1, 1]} : vector<22x16xf32> to vector<16x16xf32>
      %549 = vector.broadcast %547 : f32 to vector<16x16xf32>
      %550 = arith.mulf %549, %548 : vector<16x16xf32>
      %551 = arith.addf %546, %550 : vector<16x16xf32>
      %c1_228 = arith.constant 1 : index
      %c20_229 = arith.constant 20 : index
      %552 = memref.load %arg3[%c1_228, %c20_229] : memref<2x49xf32, #tpu.memory_space<smem>>
      %553 = vector.extract_strided_slice %526 {offsets = [2, 0], sizes = [16, 16], strides = [1, 1]} : vector<22x16xf32> to vector<16x16xf32>
      %554 = vector.broadcast %552 : f32 to vector<16x16xf32>
      %555 = arith.mulf %554, %553 : vector<16x16xf32>
      %556 = arith.addf %551, %555 : vector<16x16xf32>
      %c0_230 = arith.constant 0 : index
      %c27 = arith.constant 27 : index
      %557 = memref.load %arg3[%c0_230, %c27] : memref<2x49xf32, #tpu.memory_space<smem>>
      %558 = vector.extract_strided_slice %525 {offsets = [3, 0], sizes = [16, 16], strides = [1, 1]} : vector<22x16xf32> to vector<16x16xf32>
      %559 = vector.broadcast %557 : f32 to vector<16x16xf32>
      %560 = arith.mulf %559, %558 : vector<16x16xf32>
      %561 = arith.addf %556, %560 : vector<16x16xf32>
      %c1_231 = arith.constant 1 : index
      %c27_232 = arith.constant 27 : index
      %562 = memref.load %arg3[%c1_231, %c27_232] : memref<2x49xf32, #tpu.memory_space<smem>>
      %563 = vector.extract_strided_slice %526 {offsets = [3, 0], sizes = [16, 16], strides = [1, 1]} : vector<22x16xf32> to vector<16x16xf32>
      %564 = vector.broadcast %562 : f32 to vector<16x16xf32>
      %565 = arith.mulf %564, %563 : vector<16x16xf32>
      %566 = arith.addf %561, %565 : vector<16x16xf32>
      %c0_233 = arith.constant 0 : index
      %c34 = arith.constant 34 : index
      %567 = memref.load %arg3[%c0_233, %c34] : memref<2x49xf32, #tpu.memory_space<smem>>
      %568 = vector.extract_strided_slice %525 {offsets = [4, 0], sizes = [16, 16], strides = [1, 1]} : vector<22x16xf32> to vector<16x16xf32>
      %569 = vector.broadcast %567 : f32 to vector<16x16xf32>
      %570 = arith.mulf %569, %568 : vector<16x16xf32>
      %571 = arith.addf %566, %570 : vector<16x16xf32>
      %c1_234 = arith.constant 1 : index
      %c34_235 = arith.constant 34 : index
      %572 = memref.load %arg3[%c1_234, %c34_235] : memref<2x49xf32, #tpu.memory_space<smem>>
      %573 = vector.extract_strided_slice %526 {offsets = [4, 0], sizes = [16, 16], strides = [1, 1]} : vector<22x16xf32> to vector<16x16xf32>
      %574 = vector.broadcast %572 : f32 to vector<16x16xf32>
      %575 = arith.mulf %574, %573 : vector<16x16xf32>
      %576 = arith.addf %571, %575 : vector<16x16xf32>
      %c0_236 = arith.constant 0 : index
      %c41 = arith.constant 41 : index
      %577 = memref.load %arg3[%c0_236, %c41] : memref<2x49xf32, #tpu.memory_space<smem>>
      %578 = vector.extract_strided_slice %525 {offsets = [5, 0], sizes = [16, 16], strides = [1, 1]} : vector<22x16xf32> to vector<16x16xf32>
      %579 = vector.broadcast %577 : f32 to vector<16x16xf32>
      %580 = arith.mulf %579, %578 : vector<16x16xf32>
      %581 = arith.addf %576, %580 : vector<16x16xf32>
      %c1_237 = arith.constant 1 : index
      %c41_238 = arith.constant 41 : index
      %582 = memref.load %arg3[%c1_237, %c41_238] : memref<2x49xf32, #tpu.memory_space<smem>>
      %583 = vector.extract_strided_slice %526 {offsets = [5, 0], sizes = [16, 16], strides = [1, 1]} : vector<22x16xf32> to vector<16x16xf32>
      %584 = vector.broadcast %582 : f32 to vector<16x16xf32>
      %585 = arith.mulf %584, %583 : vector<16x16xf32>
      %586 = arith.addf %581, %585 : vector<16x16xf32>
      %c0_239 = arith.constant 0 : index
      %c48 = arith.constant 48 : index
      %587 = memref.load %arg3[%c0_239, %c48] : memref<2x49xf32, #tpu.memory_space<smem>>
      %588 = vector.extract_strided_slice %525 {offsets = [6, 0], sizes = [16, 16], strides = [1, 1]} : vector<22x16xf32> to vector<16x16xf32>
      %589 = vector.broadcast %587 : f32 to vector<16x16xf32>
      %590 = arith.mulf %589, %588 : vector<16x16xf32>
      %591 = arith.addf %586, %590 : vector<16x16xf32>
      %c1_240 = arith.constant 1 : index
      %c48_241 = arith.constant 48 : index
      %592 = memref.load %arg3[%c1_240, %c48_241] : memref<2x49xf32, #tpu.memory_space<smem>>
      %593 = vector.extract_strided_slice %526 {offsets = [6, 0], sizes = [16, 16], strides = [1, 1]} : vector<22x16xf32> to vector<16x16xf32>
      %594 = vector.broadcast %592 : f32 to vector<16x16xf32>
      %595 = arith.mulf %594, %593 : vector<16x16xf32>
      %596 = arith.addf %591, %595 : vector<16x16xf32>
      %c0_242 = arith.constant 0 : index
      %597 = memref.load %arg4[%c0_242] : memref<1xf32, #tpu.memory_space<smem>>
      %598 = vector.broadcast %597 : f32 to vector<16x16xf32>
      %599 = arith.addf %596, %598 : vector<16x16xf32>
      %cst_243 = arith.constant 5.000000e-01 : f32
      %600 = vector.broadcast %cst_243 : f32 to vector<16x16xf32>
      %601 = arith.mulf %600, %599 : vector<16x16xf32>
      %602 = math.tanh %601 : vector<16x16xf32>
      %cst_244 = arith.constant 1.000000e+00 : f32
      %603 = vector.broadcast %cst_244 : f32 to vector<16x16xf32>
      %604 = arith.addf %602, %603 : vector<16x16xf32>
      %cst_245 = arith.constant 5.000000e-01 : f32
      %605 = vector.broadcast %cst_245 : f32 to vector<16x16xf32>
      %606 = arith.mulf %605, %604 : vector<16x16xf32>
      %c0_246 = arith.constant 0 : index
      %c0_247 = arith.constant 0 : index
      %c0_248 = arith.constant 0 : index
      %607 = vector.load %arg5[%c0_246, %c0_247, %c0_248] : memref<1x16x16xf32, #tpu.memory_space<vmem>>, vector<1x16x16xf32>
      %608 = vector.shape_cast %607 : vector<1x16x16xf32> to vector<16x16xf32>
      %609 = vector.shape_cast %606 : vector<16x16xf32> to vector<1x16x16xf32>
      tpu.vector_store %arg5[%c0_246, %c0_247, %c0_248], %609 {strides = array<i32>} : memref<1x16x16xf32, #tpu.memory_space<vmem>>, vector<1x16x16xf32>,
    } else {
    }
    return
  }
  func.func @transform_0(%arg0: i32, %arg1: i32) -> (i32, i32, i32) {
    %c0_i32 = arith.constant 0 : i32
    %c0_i32_0 = arith.constant 0 : i32
    return %arg0, %arg1, %c0_i32 : i32, i32, i32
  }
  func.func @transform_1(%arg0: i32, %arg1: i32) -> (i32, i32) {
    %c0_i32 = arith.constant 0 : i32
    %c0_i32_0 = arith.constant 0 : i32
    %c0_i32_1 = arith.constant 0 : i32
    return %c0_i32, %c0_i32_0 : i32, i32
  }
  func.func @transform_2(%arg0: i32, %arg1: i32) -> i32 {
    %c0_i32 = arith.constant 0 : i32
    %c0_i32_0 = arith.constant 0 : i32
    return %c0_i32 : i32
  }
  func.func @transform_3(%arg0: i32, %arg1: i32) -> (i32, i32, i32) {
    %c0_i32 = arith.constant 0 : i32
    %c0_i32_0 = arith.constant 0 : i32
    %c0_i32_1 = arith.constant 0 : i32
    return %arg0, %c0_i32, %c0_i32_0 : i32, i32, i32
  }
}

</mosaic_0001>

<llo_original>
// kernel: spatial_attention.1
$region0: #{spatial_attention.1}
  #allocation0 [shape = 'u32[]', space=smem, size = 0x4, offset = 0x4, fixed_abs, tag = 'smem constant byte address 0x4 - core index']
  #allocation1 [shape = 'u32[144,128]{1,0:T(1,128)}', space=vmem, size = 0x12000, scoped, tag = 'internal scratch']
  #allocation2 [shape = 'f32[1,256]{1,0:T(1,128)}', space=vmem, size = 0x400, scoped, tag = 'scratch operand']
  #allocation3 [shape = 'f32[1,256]{1,0:T(1,128)}', space=vmem, size = 0x400, scoped, tag = 'scratch operand']
  #allocation4 [shape = 'f32[22,22]{1,0:T(8,128)}', space=vmem, size = 0x3000, scoped, tag = 'scratch operand']
  #allocation5 [shape = 'f32[22,22]{1,0:T(8,128)}', space=vmem, size = 0x3000, scoped, tag = 'scratch operand']
  #allocation6 [shape = 'f32[1]{0:T(128)S(6)}', space=smem, size = 0x200, scoped, tag = 'scoped memory for spatial_attention.1']
  %s0 = inlined_call_operand.vmem [shape: f32[2,4,256], index: 0, kind: input, shape index: {}]
  %s1 = inlined_call_operand.vmem [shape: f32[2,49], index: 1, kind: input, shape index: {}]
  %s2 = inlined_call_operand.<no memory space> [shape: f32[1], index: 2, kind: input, shape index: {}]
  %s3 = inlined_call_operand.hbm [shape: f32[2,16,16], index: 3, kind: output, shape index: {}]
  %s4 = sld [smem:[#allocation0]]
  $region57: #{spatial_attention.1} parent=0
    _
  %s6 = ssub.s32 1, %s4
  %s7 = scalar_select 0, %s6, %s4
  %8 = sst [smem:[#allocation6]] %s2
  $region1: #{spatial_attention.1} parent=0
    #allocation7 [shape = 'u8[1024]{0}', space=smem, size = 0x400, scoped, tag = 'input window, operand 1, single buffered']
    #allocation8 [shape = 's32[2]{0}', space=sflag, size = 0x8, scoped, tag = 'scoped memory for spatial_attention.1']
    #allocation9 [shape = 's32[2]{0}', space=sflag, size = 0x8, scoped, tag = 'scoped memory for spatial_attention.1']
    #allocation10 [shape = 'u8[16384]{0}', space=vmem, size = 0x4000, scoped, tag = 'output window, operand 0']
    %9 = vsyncpa [#allocation9], 0
    %10 = vsyncpa [#allocation8], 0
    %s11 = scalar_lea.sflag [#allocation8], 1
    %12 = vsyncpa %s11, 0
    loop: start=0, step=1, limit=4
    $region2: #{spatial_attention.1} parent=1 // loop_pre_header
      _
    $region3: #{spatial_attention.1} parent=1 // loop_header
      %s14 = sphi 0, %s18
      %p15 = scmp.ge.s32.totalorder %s14, 4
      %s21 = sphi 0, %s33
      %s22 = sphi 0, %s29
      %s23 = sphi 0, %s21
      %s24 = sphi 0, %s22
      %s25 = sphi 0, %s23
      %s26 = sphi 0, %s24
      %s38 = sphi 0, %s40
      %s41 = sphi 0, %s38
      %s42 = sphi 0, %s41
      %s58 = sphi 0, %s42
      %s62 = sphi 0, %s62
      %s64 = sphi 0, %s62
      %s65 = sphi 0, %s64
      %s79 = sphi 0, %s65
      %s83 = sphi 0, %s83
      %s85 = sphi 0, %s83
      %s86 = sphi 0, %s85
      %s100 = sphi 0, %s86
      %s106 = sphi 0, %s108
      %s109 = sphi 0, %s106
      %s110 = sphi 0, %s109
      %s126 = sphi 0, %s110
    $region4: #{spatial_attention.1} parent=1 // loop_header_branch
      %17 = sbr.rel (%p15) target = $region8
    $region5: #{spatial_attention.1} parent=1 // loop_body
      %s19 = ssub.s32 %s14, 1
      %s20 = ssub.s32 %s14, 2
      %s27 = sadd.s32 1, %s22
      %p28 = scmp.ge.s32.totalorder %s27, 1
      %s29 = scalar_select %p28, 0, %s27
      %s30 = sadd.s32 1, %s21
      %s31 = scalar_select %p28, %s30, %s21
      %p32 = scmp.ge.s32.totalorder %s31, 2
      %s33 = scalar_select %p32, 0, %s31
      %s34 = ssub.s32 %s21, %s33
      %s35 = ssub.s32 %s22, %s29
      %s36 = sor.u32 %s34, %s35
      %p37 = scmp.eq.s32.totalorder %s36, 0
      %s39 = sadd.s32 %s38, 1
      %s40 = scalar_select %p37, %s38, %s39
      %p43 = pneg %p37
      %p44 = scmp.eq.s32.totalorder %s14, 1
      %p45 = por %p43, %p44
      %p46 = scmp.ne.s32.totalorder %s38, %s41
      %p47 = scmp.eq.s32.totalorder %s14, 0
      %p48 = por %p46, %p47
      %p49 = scmp.ne.s32.totalorder %s38, %s41
      %p50 = scmp.eq.s32.totalorder %s19, 1
      %p51 = por %p49, %p50
      %p52 = scmp.ne.s32.totalorder %s41, %s42
      %p53 = scmp.eq.s32.totalorder %s19, 0
      %p54 = por %p52, %p53
      %p55 = scmp.ne.s32.totalorder %s41, %s42
      %p56 = scmp.eq.s32.totalorder %s20, 1
      %p57 = por %p55, %p56
      %p59 = scmp.ne.s32.totalorder %s42, %s58
      %p60 = scmp.eq.s32.totalorder %s20, 0
      %p61 = por %p59, %p60
      %s63 = sadd.s32 %s62, 1
      %p66 = scmp.eq.s32.totalorder %s14, 1
      %p67 = scmp.ne.s32.totalorder %s62, %s64
      %p68 = scmp.eq.s32.totalorder %s14, 0
      %p69 = por %p67, %p68
      %p70 = scmp.ne.s32.totalorder %s62, %s64
      %p71 = scmp.eq.s32.totalorder %s19, 1
      %p72 = por %p70, %p71
      %p73 = scmp.ne.s32.totalorder %s64, %s65
      %p74 = scmp.eq.s32.totalorder %s19, 0
      %p75 = por %p73, %p74
      %p76 = scmp.ne.s32.totalorder %s64, %s65
      %p77 = scmp.eq.s32.totalorder %s20, 1
      %p78 = por %p76, %p77
      %p80 = scmp.ne.s32.totalorder %s65, %s79
      %p81 = scmp.eq.s32.totalorder %s20, 0
      %p82 = por %p80, %p81
      %s84 = sadd.s32 %s83, 1
      %p87 = scmp.eq.s32.totalorder %s14, 1
      %p88 = scmp.ne.s32.totalorder %s83, %s85
      %p89 = scmp.eq.s32.totalorder %s14, 0
      %p90 = por %p88, %p89
      %p91 = scmp.ne.s32.totalorder %s83, %s85
      %p92 = scmp.eq.s32.totalorder %s19, 1
      %p93 = por %p91, %p92
      %p94 = scmp.ne.s32.totalorder %s85, %s86
      %p95 = scmp.eq.s32.totalorder %s19, 0
      %p96 = por %p94, %p95
      %p97 = scmp.ne.s32.totalorder %s85, %s86
      %p98 = scmp.eq.s32.totalorder %s20, 1
      %p99 = por %p97, %p98
      %p101 = scmp.ne.s32.totalorder %s86, %s100
      %p102 = scmp.eq.s32.totalorder %s20, 0
      %p103 = por %p101, %p102
      %s104 = ssub.s32 %s21, %s33
      %p105 = scmp.eq.s32.totalorder %s104, 0
      %s107 = sadd.s32 %s106, 1
      %s108 = scalar_select %p105, %s106, %s107
      %p111 = pneg %p105
      %p112 = scmp.eq.s32.totalorder %s14, 1
      %p113 = por %p111, %p112
      %p114 = scmp.ne.s32.totalorder %s106, %s109
      %p115 = scmp.eq.s32.totalorder %s14, 0
      %p116 = por %p114, %p115
      %p117 = scmp.ne.s32.totalorder %s106, %s109
      %p118 = scmp.eq.s32.totalorder %s19, 1
      %p119 = por %p117, %p118
      %p120 = scmp.ne.s32.totalorder %s109, %s110
      %p121 = scmp.eq.s32.totalorder %s19, 0
      %p122 = por %p120, %p121
      %p123 = scmp.ne.s32.totalorder %s109, %s110
      %p124 = scmp.eq.s32.totalorder %s20, 1
      %p125 = por %p123, %p124
      %p127 = scmp.ne.s32.totalorder %s110, %s126
      %p128 = scmp.eq.s32.totalorder %s20, 0
      %p129 = por %p127, %p128
      %p130 = scmp.le.s32.totalorder 1, %s14
      %p131 = scmp.lt.s32.totalorder %s14, 3
      %p132 = pnand %p130, %p131
      %p133 = pneg %p132
      // Predicated region
      $region9: #{spatial_attention.1} parent=5 // pred_check
        _
      $region10: #{spatial_attention.1} parent=5 // pred_check_branch
        %135 = sbr.rel (%p132) target = $region12
      $region11: #{spatial_attention.1} parent=5 // pred_region
        %s136 = ssub.s32 %s14, 1
        // Predicated region
        $region13: #{spatial_attention.1} parent=11 // pred_check
          %p137 = pneg %p75
        $region14: #{spatial_attention.1} parent=11 // pred_check_branch
          %139 = sbr.rel (%p137) target = $region16
        $region15: #{spatial_attention.1} parent=11 // pred_region
          %s141 = ssub.s32 32, 32
          %142 = vsyncadd [#allocation9], %s141
          %s144 = sshll.u32 %s1, 4
          %s145 = int_to_ptr.vmem [resolvable:$true] %s144
          %147 = dma.vmem_to_smem %s145, 32, [#allocation7], [#allocation9]
        $region16: #{spatial_attention.1} parent=11 // pred_fallthru
          _
        // Predicated region
        $region17: #{spatial_attention.1} parent=11 // pred_check
          %p148 = pneg %p96
        $region18: #{spatial_attention.1} parent=11 // pred_check_branch
          %150 = sbr.rel (%p148) target = $region20
        $region19: #{spatial_attention.1} parent=11 // pred_region
          _
        $region20: #{spatial_attention.1} parent=11 // pred_fallthru
          _
      $region12: #{spatial_attention.1} parent=5 // pred_fallthru
        _
      %p151 = scmp.lt.s32.totalorder %s14, 2
      // Predicated region
      $region21: #{spatial_attention.1} parent=5 // pred_check
        %p152 = pneg %p151
      $region22: #{spatial_attention.1} parent=5 // pred_check_branch
        %154 = sbr.rel (%p152) target = $region24
      $region23: #{spatial_attention.1} parent=5 // pred_region
        // Predicated region
        $region25: #{spatial_attention.1} parent=23 // pred_check
          %p155 = pneg %p48
        $region26: #{spatial_attention.1} parent=23 // pred_check_branch
          %157 = sbr.rel (%p155) target = $region28
        $region27: #{spatial_attention.1} parent=23 // pred_region
          %p158 = scmp.lt.s32.totalorder %s21, 1
          %s159 = scalar_select %p158, %s21, 1
          %p160 = scmp.lt.s32.totalorder %s22, 0
          %s161 = scalar_select %p160, %s22, 0
          %s162 = smul.addr %s161, 2
          %s163 = smul.addr %s159, 2
          %s164 = sadd.s32 %s162, %s163
          %s165 = smul.addr %s164, 4
          %s166 = scalar_lea.vmem %s0, %s165
        $region28: #{spatial_attention.1} parent=23 // pred_fallthru
          _
      $region24: #{spatial_attention.1} parent=5 // pred_fallthru
        _
      %p167 = scmp.le.s32.totalorder 1, %s14
      %p168 = scmp.lt.s32.totalorder %s14, 3
      %p169 = pnand %p167, %p168
      %p170 = pneg %p169
      // Predicated region
      $region29: #{spatial_attention.1} parent=5 // pred_check
        _
      $region30: #{spatial_attention.1} parent=5 // pred_check_branch
        %172 = sbr.rel (%p169) target = $region32
      $region31: #{spatial_attention.1} parent=5 // pred_region
        %s173 = ssub.s32 %s14, 1
        // Predicated region
        $region33: #{spatial_attention.1} parent=31 // pred_check
          %p174 = pneg %p75
        $region34: #{spatial_attention.1} parent=31 // pred_check_branch
          %176 = sbr.rel (%p174) target = $region36
        $region35: #{spatial_attention.1} parent=31 // pred_region
          %177 = dma.done [#allocation9], 32
        $region36: #{spatial_attention.1} parent=31 // pred_fallthru
          _
        %178 = sfence
        %p179 = scmp.lt.s32.totalorder %s23, 1
        %s180 = scalar_select %p179, %s23, 1
        %p181 = scmp.lt.s32.totalorder %s24, 0
        %s182 = scalar_select %p181, %s24, 0
        %s183 = smul.addr %s182, 2
        %s184 = smul.addr %s180, 2
        %s185 = sadd.s32 %s183, %s184
        %s186 = smul.addr %s185, 4
        %s187 = scalar_lea.vmem %s0, %s186
        %p188 = pneg %p54
        %p189 = pneg %p51
        %p190 = pneg %p75
        %p191 = pneg %p72
        %p192 = pneg %p96
        %p193 = pneg %p93
        %p194 = pneg %p122
        %p195 = pneg %p119
        %s196 = sand.u32 %s109, 1
        %s197 = scalar_lea.sflag [#allocation8], %s196
        %s198 = sand.u32 %s109, 1
        %s199 = smul.addr %s198, 16
        %s200 = scalar_lea.vmem [#allocation10], %s199
        %p201 = scmp.lt.s32.totalorder %s23, 1
        %s202 = scalar_select %p201, %s23, 1
        %p203 = scmp.lt.s32.totalorder %s24, 0
        %s204 = scalar_select %p203, %s24, 0
        %s205 = smul.addr %s204, 2
        %s206 = smul.addr %s202, 2
        %s207 = sadd.s32 %s205, %s206
        %s208 = smul.addr %s207, 4
        %s209 = scalar_lea.vmem %s0, %s208
        %p210 = scmp.eq.s32.totalorder %s24, 0
        // Predicated region
        $region37: #{spatial_attention.1} parent=31 // pred_check
          %p211 = pneg %p210
        $region38: #{spatial_attention.1} parent=31 // pred_check_branch
          %213 = sbr.rel (%p211) target = $region40
        $region39: #{spatial_attention.1} parent=31 // pred_region
          %v214 = vlaneseq
          %vm215 = vcmp.ge.s32.totalorder %v214, 0
          %vm216 = vcmp.lt.s32.totalorder %v214, 256
          %vm217 = vmand %vm215, %vm216
          %218 = vst.msk [vmem:[#allocation2] sm:$0x3] %vm217, -inf
          %219 = vst.msk [vmem:[#allocation3] sm:$0x3] %vm217, 0.0
        $region40: #{spatial_attention.1} parent=31 // pred_fallthru
          _
        %v220 = vld [vmem:[%s209] sm:$0xff]
        %v221 = vld [vmem:[#allocation2] sm:$0x3]
        %v223 = vcombine.high %v220, %v220
        %vm225 = vcmask 1043456
        %v226 = vsel %vm225, %v220, -inf
        %v227 = vrot.slane %v226, 4
        %v228 = vmax.f32 %v226, %v227
        %v229 = vrot.slane %v228, 2
        %v230 = vmax.f32 %v228, %v229
        %v231 = vrot.slane %v230, 1
        %v232 = vmax.f32 %v230, %v231
        %v233 = vsel %vm225, %v223, -inf
        %v234 = vrot.slane %v233, 4
        %v235 = vmax.f32 %v233, %v234
        %v236 = vrot.slane %v235, 2
        %v237 = vmax.f32 %v235, %v236
        %v238 = vrot.slane %v237, 1
        %v239 = vmax.f32 %v237, %v238
        %v242 = vcombine.low %v232, %v239
        %v244 = vunpack.c.l.s4 1966171168
        %v245 = vunpack.c.0.s8 %v244
        %v246 = vlaneseq
        %v247 = vshrl.u32 %v246, 7
        %v248 = vsub.s32 %v245, %v247
        %v249 = vrot.slane %v242, %v248
        %v251 = vunpack.c.l.s4 1966171168
        %v252 = vunpack.c.0.s8 %v251
        %v253 = vlaneseq
        %v254 = vshrl.u32 %v253, 7
        %v255 = vsub.s32 %v252, %v254
        %v256 = vrot.slane %v249, %v255
        %v258 = vmax.f32 %v221, %v256
        %v259 = vlaneseq
        %vm260 = vcmp.ge.s32.totalorder %v259, 0
        %vm261 = vcmp.lt.s32.totalorder %v259, 256
        %vm262 = vmand %vm260, %vm261
        %263 = vst.msk [vmem:[#allocation2] sm:$0x3] %vm262, %v258
        %v264 = vld [vmem:[#allocation3] sm:$0x3]
        %v265 = vsel %vm225, %v220, 0.0
        %v266 = vrot.slane %v265, 4
        %v267 = vadd.f32 %v265, %v266
        %v268 = vrot.slane %v267, 2
        %v269 = vadd.f32 %v267, %v268
        %v270 = vrot.slane %v269, 1
        %v271 = vadd.f32 %v269, %v270
        %v272 = vsel %vm225, %v223, 0.0
        %v273 = vrot.slane %v272, 4
        %v274 = vadd.f32 %v272, %v273
        %v275 = vrot.slane %v274, 2
        %v276 = vadd.f32 %v274, %v275
        %v277 = vrot.slane %v276, 1
        %v278 = vadd.f32 %v276, %v277
        %v281 = vcombine.low %v271, %v278
        %v283 = vunpack.c.l.s4 1966171168
        %v284 = vunpack.c.0.s8 %v283
        %v285 = vlaneseq
        %v286 = vshrl.u32 %v285, 7
        %v287 = vsub.s32 %v284, %v286
        %v288 = vrot.slane %v281, %v287
        %v290 = vunpack.c.l.s4 1966171168
        %v291 = vunpack.c.0.s8 %v290
        %v292 = vlaneseq
        %v293 = vshrl.u32 %v292, 7
        %v294 = vsub.s32 %v291, %v293
        %v295 = vrot.slane %v288, %v294
        %v297 = vadd.f32 %v264, %v295
        %298 = vst.msk [vmem:[#allocation3] sm:$0x3] %vm262, %v297
        // Predicated region
        $region41: #{spatial_attention.1} parent=31 // pred_check
          %p299 = pneg %p210
        $region42: #{spatial_attention.1} parent=31 // pred_check_branch
          %301 = sbr.rel (%p299) target = $region44
        $region43: #{spatial_attention.1} parent=31 // pred_region
          %v302 = vld [vmem:[#allocation2] sm:$0x3]
          %v303 = vld [vmem:[#allocation3] sm:$0x3]
          %v304 = vmul.f32 %v303, 0.25
          %vm305 = vcmask 179200
          %306 = vst.msk [vmem:[#allocation4] sm:$0xff] %vm305, 0.0
          %307 = vst.msk [vmem:[#allocation4 + $0x8] sm:$0xff] %vm305, 0.0
          %vm308 = vcmask 177152
          %309 = vst.msk [vmem:[#allocation4 + $0x10] sm:$0x3f] %vm308, 0.0
          %310 = vst.msk [vmem:[#allocation5] sm:$0xff] %vm305, 0.0
          %311 = vst.msk [vmem:[#allocation5 + $0x8] sm:$0xff] %vm305, 0.0
          %312 = vst.msk [vmem:[#allocation5 + $0x10] sm:$0x3f] %vm308, 0.0
          %v314 = vlaneseq
          %v315 = vshrl.u32 %v314, 7
          %v316 = vsub.s32 0, %v315
          %v317 = vrot.slane %v302, %v316
          %318 = vrot.lane.b32.xlu0 %v317, 3
          %v319 = vpop.permute.xlu0 %318
          %vm321 = vcmask 147480
          %322 = vst.msk [vmem:[#allocation4 + $0x3] sm:$0x1] %vm321, %v319
          %v324 = vlaneseq
          %v325 = vshrl.u32 %v324, 7
          %v326 = vsub.s32 0, %v325
          %v327 = vrot.slane %v304, %v326
          %328 = vrot.lane.b32.xlu0 %v327, 3
          %v329 = vpop.permute.xlu0 %328
          %331 = vst.msk [vmem:[#allocation5 + $0x3] sm:$0x1] %vm321, %v329
          %332 = vrot.lane.b32.xlu0 %v317, 115
          %v333 = vpop.permute.xlu0 %332
          %335 = vst.msk [vmem:[#allocation4 + $0x4] sm:$0x1] %vm321, %v333
          %336 = vrot.lane.b32.xlu0 %v327, 115
          %v337 = vpop.permute.xlu0 %336
          %339 = vst.msk [vmem:[#allocation5 + $0x4] sm:$0x1] %vm321, %v337
          %340 = vrot.lane.b32.xlu0 %v317, 99
          %v341 = vpop.permute.xlu0 %340
          %343 = vst.msk [vmem:[#allocation4 + $0x5] sm:$0x1] %vm321, %v341
          %344 = vrot.lane.b32.xlu0 %v327, 99
          %v345 = vpop.permute.xlu0 %344
          %347 = vst.msk [vmem:[#allocation5 + $0x5] sm:$0x1] %vm321, %v345
          %348 = vrot.lane.b32.xlu0 %v317, 83
          %v349 = vpop.permute.xlu0 %348
          %351 = vst.msk [vmem:[#allocation4 + $0x6] sm:$0x1] %vm321, %v349
          %352 = vrot.lane.b32.xlu0 %v327, 83
          %v353 = vpop.permute.xlu0 %352
          %355 = vst.msk [vmem:[#allocation5 + $0x6] sm:$0x1] %vm321, %v353
          %356 = vrot.lane.b32.xlu0 %v317, 67
          %v357 = vpop.permute.xlu0 %356
          %359 = vst.msk [vmem:[#allocation4 + $0x7] sm:$0x1] %vm321, %v357
          %360 = vrot.lane.b32.xlu0 %v327, 67
          %v361 = vpop.permute.xlu0 %360
          %363 = vst.msk [vmem:[#allocation5 + $0x7] sm:$0x1] %vm321, %v361
          %364 = vrot.lane.b32.xlu0 %v317, 51
          %v365 = vpop.permute.xlu0 %364
          %367 = vst.msk [vmem:[#allocation4 + $0x8] sm:$0x1] %vm321, %v365
          %368 = vrot.lane.b32.xlu0 %v327, 51
          %v369 = vpop.permute.xlu0 %368
          %371 = vst.msk [vmem:[#allocation5 + $0x8] sm:$0x1] %vm321, %v369
          %372 = vrot.lane.b32.xlu0 %v317, 35
          %v373 = vpop.permute.xlu0 %372
          %375 = vst.msk [vmem:[#allocation4 + $0x9] sm:$0x1] %vm321, %v373
          %376 = vrot.lane.b32.xlu0 %v327, 35
          %v377 = vpop.permute.xlu0 %376
          %379 = vst.msk [vmem:[#allocation5 + $0x9] sm:$0x1] %vm321, %v377
          %380 = vrot.lane.b32.xlu0 %v317, 19
          %v381 = vpop.permute.xlu0 %380
          %383 = vst.msk [vmem:[#allocation4 + $0xa] sm:$0x1] %vm321, %v381
          %384 = vrot.lane.b32.xlu0 %v327, 19
          %v385 = vpop.permute.xlu0 %384
          %387 = vst.msk [vmem:[#allocation5 + $0xa] sm:$0x1] %vm321, %v385
          %v388 = vlaneseq
          %v389 = vshrl.u32 %v388, 7
          %v390 = vsub.s32 1, %v389
          %v391 = vrot.slane %v302, %v390
          %392 = vrot.lane.b32.xlu0 %v391, 3
          %v393 = vpop.permute.xlu0 %392
          %395 = vst.msk [vmem:[#allocation4 + $0xb] sm:$0x1] %vm321, %v393
          %v396 = vlaneseq
          %v397 = vshrl.u32 %v396, 7
          %v398 = vsub.s32 1, %v397
          %v399 = vrot.slane %v304, %v398
          %400 = vrot.lane.b32.xlu0 %v399, 3
          %v401 = vpop.permute.xlu0 %400
          %403 = vst.msk [vmem:[#allocation5 + $0xb] sm:$0x1] %vm321, %v401
          %404 = vrot.lane.b32.xlu0 %v391, 115
          %v405 = vpop.permute.xlu0 %404
          %407 = vst.msk [vmem:[#allocation4 + $0xc] sm:$0x1] %vm321, %v405
          %408 = vrot.lane.b32.xlu0 %v399, 115
          %v409 = vpop.permute.xlu0 %408
          %411 = vst.msk [vmem:[#allocation5 + $0xc] sm:$0x1] %vm321, %v409
          %412 = vrot.lane.b32.xlu0 %v391, 99
          %v413 = vpop.permute.xlu0 %412
          %415 = vst.msk [vmem:[#allocation4 + $0xd] sm:$0x1] %vm321, %v413
          %416 = vrot.lane.b32.xlu0 %v399, 99
          %v417 = vpop.permute.xlu0 %416
          %419 = vst.msk [vmem:[#allocation5 + $0xd] sm:$0x1] %vm321, %v417
          %420 = vrot.lane.b32.xlu0 %v391, 83
          %v421 = vpop.permute.xlu0 %420
          %423 = vst.msk [vmem:[#allocation4 + $0xe] sm:$0x1] %vm321, %v421
          %424 = vrot.lane.b32.xlu0 %v399, 83
          %v425 = vpop.permute.xlu0 %424
          %427 = vst.msk [vmem:[#allocation5 + $0xe] sm:$0x1] %vm321, %v425
          %428 = vrot.lane.b32.xlu0 %v391, 67
          %v429 = vpop.permute.xlu0 %428
          %431 = vst.msk [vmem:[#allocation4 + $0xf] sm:$0x1] %vm321, %v429
          %432 = vrot.lane.b32.xlu0 %v399, 67
          %v433 = vpop.permute.xlu0 %432
          %435 = vst.msk [vmem:[#allocation5 + $0xf] sm:$0x1] %vm321, %v433
          %436 = vrot.lane.b32.xlu0 %v391, 51
          %v437 = vpop.permute.xlu0 %436
          %439 = vst.msk [vmem:[#allocation4 + $0x10] sm:$0x1] %vm321, %v437
          %440 = vrot.lane.b32.xlu0 %v399, 51
          %v441 = vpop.permute.xlu0 %440
          %443 = vst.msk [vmem:[#allocation5 + $0x10] sm:$0x1] %vm321, %v441
          %444 = vrot.lane.b32.xlu0 %v391, 35
          %v445 = vpop.permute.xlu0 %444
          %447 = vst.msk [vmem:[#allocation4 + $0x11] sm:$0x1] %vm321, %v445
          %448 = vrot.lane.b32.xlu0 %v399, 35
          %v449 = vpop.permute.xlu0 %448
          %451 = vst.msk [vmem:[#allocation5 + $0x11] sm:$0x1] %vm321, %v449
          %452 = vrot.lane.b32.xlu0 %v391, 19
          %v453 = vpop.permute.xlu0 %452
          %455 = vst.msk [vmem:[#allocation4 + $0x12] sm:$0x1] %vm321, %v453
          %456 = vrot.lane.b32.xlu0 %v399, 19
          %v457 = vpop.permute.xlu0 %456
          %459 = vst.msk [vmem:[#allocation5 + $0x12] sm:$0x1] %vm321, %v457
          %v460 = vld [vmem:[#allocation4] sm:$0xff]
          %v461 = vld [vmem:[#allocation4 + $0x8] sm:$0xff]
          %v462 = vld [vmem:[#allocation4 + $0x10] sm:$0x3f]
          %v463 = vld [vmem:[#allocation5] sm:$0xff]
          %v464 = vld [vmem:[#allocation5 + $0x8] sm:$0xff]
          %v465 = vld [vmem:[#allocation5 + $0x10] sm:$0x3f]
          %s466 = sld [smem:[#allocation7]]
          %v467 = vstv %s466
          %v468 = vmul.f32 %v467, %v460
          %v469 = vmul.f32 %v467, %v461
          %v470 = vadd.f32 %v468, 0.0
          %v471 = vadd.f32 %v469, 0.0
          %s472 = sld [smem:[#allocation7 + $0x80]]
          %v473 = vstv %s472
          %v474 = vmul.f32 %v473, %v463
          %v475 = vmul.f32 %v473, %v464
          %v476 = vadd.f32 %v470, %v474
          %v477 = vadd.f32 %v471, %v475
          %s478 = sld [smem:[#allocation7 + $0x7]]
          %v479 = vstv %s478
          %v480 = vmul.f32 %v479, %v460
          %v481 = vmul.f32 %v479, %v461
          %v482 = vmul.f32 %v479, %v462
          %vm486 = vcmask 1046528
          %v487 = vrot.slane %v480, 1
          %v488 = vrot.slane %v481, 1
          %v489 = vsel %vm486, %v487, %v488
          %v490 = vrot.slane %v482, 1
          %v491 = vsel %vm486, %v488, %v490
          %v494 = vadd.f32 %v476, %v489
          %v495 = vadd.f32 %v477, %v491
          %s496 = sld [smem:[#allocation7 + $0x87]]
          %v497 = vstv %s496
          %v498 = vmul.f32 %v497, %v463
          %v499 = vmul.f32 %v497, %v464
          %v500 = vmul.f32 %v497, %v465
          %v504 = vrot.slane %v498, 1
          %v505 = vrot.slane %v499, 1
          %v506 = vsel %vm486, %v504, %v505
          %v507 = vrot.slane %v500, 1
          %v508 = vsel %vm486, %v505, %v507
          %v511 = vadd.f32 %v494, %v506
          %v512 = vadd.f32 %v495, %v508
          %s513 = sld [smem:[#allocation7 + $0xe]]
          %v514 = vstv %s513
          %v515 = vmul.f32 %v514, %v460
          %v516 = vmul.f32 %v514, %v461
          %v517 = vmul.f32 %v514, %v462
          %vm521 = vcmask 1045504
          %v522 = vrot.slane %v515, 2
          %v523 = vrot.slane %v516, 2
          %v524 = vsel %vm521, %v522, %v523
          %v525 = vrot.slane %v517, 2
          %v526 = vsel %vm521, %v523, %v525
          %v529 = vadd.f32 %v511, %v524
          %v530 = vadd.f32 %v512, %v526
          %s531 = sld [smem:[#allocation7 + $0x8e]]
          %v532 = vstv %s531
          %v533 = vmul.f32 %v532, %v463
          %v534 = vmul.f32 %v532, %v464
          %v535 = vmul.f32 %v532, %v465
          %v539 = vrot.slane %v533, 2
          %v540 = vrot.slane %v534, 2
          %v541 = vsel %vm521, %v539, %v540
          %v542 = vrot.slane %v535, 2
          %v543 = vsel %vm521, %v540, %v542
          %v546 = vadd.f32 %v529, %v541
          %v547 = vadd.f32 %v530, %v543
          %s548 = sld [smem:[#allocation7 + $0x15]]
          %v549 = vstv %s548
          %v550 = vmul.f32 %v549, %v460
          %v551 = vmul.f32 %v549, %v461
          %v552 = vmul.f32 %v549, %v462
          %vm556 = vcmask 1044480
          %v557 = vrot.slane %v550, 3
          %v558 = vrot.slane %v551, 3
          %v559 = vsel %vm556, %v557, %v558
          %v560 = vrot.slane %v552, 3
          %v561 = vsel %vm556, %v558, %v560
          %v564 = vadd.f32 %v546, %v559
          %v565 = vadd.f32 %v547, %v561
          %s566 = sld [smem:[#allocation7 + $0x95]]
          %v567 = vstv %s566
          %v568 = vmul.f32 %v567, %v463
          %v569 = vmul.f32 %v567, %v464
          %v570 = vmul.f32 %v567, %v465
          %v574 = vrot.slane %v568, 3
          %v575 = vrot.slane %v569, 3
          %v576 = vsel %vm556, %v574, %v575
          %v577 = vrot.slane %v570, 3
          %v578 = vsel %vm556, %v575, %v577
          %v581 = vadd.f32 %v564, %v576
          %v582 = vadd.f32 %v565, %v578
          %s583 = sld [smem:[#allocation7 + $0x1c]]
          %v584 = vstv %s583
          %v585 = vmul.f32 %v584, %v460
          %v586 = vmul.f32 %v584, %v461
          %v587 = vmul.f32 %v584, %v462
          %v591 = vrot.slane %v585, 4
          %v592 = vrot.slane %v586, 4
          %v593 = vsel %vm225, %v591, %v592
          %v594 = vrot.slane %v587, 4
          %v595 = vsel %vm225, %v592, %v594
          %v598 = vadd.f32 %v581, %v593
          %v599 = vadd.f32 %v582, %v595
          %s600 = sld [smem:[#allocation7 + $0x9c]]
          %v601 = vstv %s600
          %v602 = vmul.f32 %v601, %v463
          %v603 = vmul.f32 %v601, %v464
          %v604 = vmul.f32 %v601, %v465
          %v608 = vrot.slane %v602, 4
          %v609 = vrot.slane %v603, 4
          %v610 = vsel %vm225, %v608, %v609
          %v611 = vrot.slane %v604, 4
          %v612 = vsel %vm225, %v609, %v611
          %v615 = vadd.f32 %v598, %v610
          %v616 = vadd.f32 %v599, %v612
          %s617 = sld [smem:[#allocation7 + $0x23]]
          %v618 = vstv %s617
          %v619 = vmul.f32 %v618, %v460
          %v620 = vmul.f32 %v618, %v461
          %v621 = vmul.f32 %v618, %v462
          %vm625 = vcmask 1042432
          %v626 = vrot.slane %v619, 5
          %v627 = vrot.slane %v620, 5
          %v628 = vsel %vm625, %v626, %v627
          %v629 = vrot.slane %v621, 5
          %v630 = vsel %vm625, %v627, %v629
          %v633 = vadd.f32 %v615, %v628
          %v634 = vadd.f32 %v616, %v630
          %s635 = sld [smem:[#allocation7 + $0xa3]]
          %v636 = vstv %s635
          %v637 = vmul.f32 %v636, %v463
          %v638 = vmul.f32 %v636, %v464
          %v639 = vmul.f32 %v636, %v465
          %v643 = vrot.slane %v637, 5
          %v644 = vrot.slane %v638, 5
          %v645 = vsel %vm625, %v643, %v644
          %v646 = vrot.slane %v639, 5
          %v647 = vsel %vm625, %v644, %v646
          %v650 = vadd.f32 %v633, %v645
          %v651 = vadd.f32 %v634, %v647
          %s652 = sld [smem:[#allocation7 + $0x2a]]
          %v653 = vstv %s652
          %v654 = vmul.f32 %v653, %v460
          %v655 = vmul.f32 %v653, %v461
          %v656 = vmul.f32 %v653, %v462
          %vm660 = vcmask 1041408
          %v661 = vrot.slane %v654, 6
          %v662 = vrot.slane %v655, 6
          %v663 = vsel %vm660, %v661, %v662
          %v664 = vrot.slane %v656, 6
          %v665 = vsel %vm660, %v662, %v664
          %v668 = vadd.f32 %v650, %v663
          %v669 = vadd.f32 %v651, %v665
          %s670 = sld [smem:[#allocation7 + $0xaa]]
          %v671 = vstv %s670
          %v672 = vmul.f32 %v671, %v463
          %v673 = vmul.f32 %v671, %v464
          %v674 = vmul.f32 %v671, %v465
          %v678 = vrot.slane %v672, 6
          %v679 = vrot.slane %v673, 6
          %v680 = vsel %vm660, %v678, %v679
          %v681 = vrot.slane %v674, 6
          %v682 = vsel %vm660, %v679, %v681
          %v685 = vadd.f32 %v668, %v680
          %v686 = vadd.f32 %v669, %v682
          %s687 = sld [smem:[#allocation7 + $0x1]]
          %v688 = vstv %s687
          %v689 = vmul.f32 %v688, %v460
          %v690 = vmul.f32 %v688, %v461
          %693 = vrot.lane.b32.xlu0 %v689, 127
          %v694 = vpop.permute.xlu0 %693
          %695 = vrot.lane.b32.xlu0 %v690, 127
          %v696 = vpop.permute.xlu0 %695
          %v699 = vadd.f32 %v685, %v694
          %v700 = vadd.f32 %v686, %v696
          %s701 = sld [smem:[#allocation7 + $0x81]]
          %v702 = vstv %s701
          %v703 = vmul.f32 %v702, %v463
          %v704 = vmul.f32 %v702, %v464
          %707 = vrot.lane.b32.xlu0 %v703, 127
          %v708 = vpop.permute.xlu0 %707
          %709 = vrot.lane.b32.xlu0 %v704, 127
          %v710 = vpop.permute.xlu0 %709
          %v713 = vadd.f32 %v699, %v708
          %v714 = vadd.f32 %v700, %v710
          %s715 = sld [smem:[#allocation7 + $0x8]]
          %v716 = vstv %s715
          %v717 = vmul.f32 %v716, %v460
          %v718 = vmul.f32 %v716, %v461
          %v719 = vmul.f32 %v716, %v462
          %v723 = vrot.slane %v717, 1
          %v724 = vrot.slane %v718, 1
          %v725 = vsel %vm486, %v723, %v724
          %v726 = vrot.slane %v719, 1
          %v727 = vsel %vm486, %v724, %v726
          %728 = vrot.lane.b32.xlu0 %v725, 127
          %v729 = vpop.permute.xlu0 %728
          %730 = vrot.lane.b32.xlu0 %v727, 127
          %v731 = vpop.permute.xlu0 %730
          %v734 = vadd.f32 %v713, %v729
          %v735 = vadd.f32 %v714, %v731
          %s736 = sld [smem:[#allocation7 + $0x88]]
          %v737 = vstv %s736
          %v738 = vmul.f32 %v737, %v463
          %v739 = vmul.f32 %v737, %v464
          %v740 = vmul.f32 %v737, %v465
          %v744 = vrot.slane %v738, 1
          %v745 = vrot.slane %v739, 1
          %v746 = vsel %vm486, %v744, %v745
          %v747 = vrot.slane %v740, 1
          %v748 = vsel %vm486, %v745, %v747
          %749 = vrot.lane.b32.xlu0 %v746, 127
          %v750 = vpop.permute.xlu0 %749
          %751 = vrot.lane.b32.xlu0 %v748, 127
          %v752 = vpop.permute.xlu0 %751
          %v755 = vadd.f32 %v734, %v750
          %v756 = vadd.f32 %v735, %v752
          %s757 = sld [smem:[#allocation7 + $0xf]]
          %v758 = vstv %s757
          %v759 = vmul.f32 %v758, %v460
          %v760 = vmul.f32 %v758, %v461
          %v761 = vmul.f32 %v758, %v462
          %v765 = vrot.slane %v759, 2
          %v766 = vrot.slane %v760, 2
          %v767 = vsel %vm521, %v765, %v766
          %v768 = vrot.slane %v761, 2
          %v769 = vsel %vm521, %v766, %v768
          %770 = vrot.lane.b32.xlu0 %v767, 127
          %v771 = vpop.permute.xlu0 %770
          %772 = vrot.lane.b32.xlu0 %v769, 127
          %v773 = vpop.permute.xlu0 %772
          %v776 = vadd.f32 %v755, %v771
          %v777 = vadd.f32 %v756, %v773
          %s778 = sld [smem:[#allocation7 + $0x8f]]
          %v779 = vstv %s778
          %v780 = vmul.f32 %v779, %v463
          %v781 = vmul.f32 %v779, %v464
          %v782 = vmul.f32 %v779, %v465
          %v786 = vrot.slane %v780, 2
          %v787 = vrot.slane %v781, 2
          %v788 = vsel %vm521, %v786, %v787
          %v789 = vrot.slane %v782, 2
          %v790 = vsel %vm521, %v787, %v789
          %791 = vrot.lane.b32.xlu0 %v788, 127
          %v792 = vpop.permute.xlu0 %791
          %793 = vrot.lane.b32.xlu0 %v790, 127
          %v794 = vpop.permute.xlu0 %793
          %v797 = vadd.f32 %v776, %v792
          %v798 = vadd.f32 %v777, %v794
          %s799 = sld [smem:[#allocation7 + $0x16]]
          %v800 = vstv %s799
          %v801 = vmul.f32 %v800, %v460
          %v802 = vmul.f32 %v800, %v461
          %v803 = vmul.f32 %v800, %v462
          %v807 = vrot.slane %v801, 3
          %v808 = vrot.slane %v802, 3
          %v809 = vsel %vm556, %v807, %v808
          %v810 = vrot.slane %v803, 3
          %v811 = vsel %vm556, %v808, %v810
          %812 = vrot.lane.b32.xlu0 %v809, 127
          %v813 = vpop.permute.xlu0 %812
          %814 = vrot.lane.b32.xlu0 %v811, 127
          %v815 = vpop.permute.xlu0 %814
          %v818 = vadd.f32 %v797, %v813
          %v819 = vadd.f32 %v798, %v815
          %s820 = sld [smem:[#allocation7 + $0x96]]
          %v821 = vstv %s820
          %v822 = vmul.f32 %v821, %v463
          %v823 = vmul.f32 %v821, %v464
          %v824 = vmul.f32 %v821, %v465
          %v828 = vrot.slane %v822, 3
          %v829 = vrot.slane %v823, 3
          %v830 = vsel %vm556, %v828, %v829
          %v831 = vrot.slane %v824, 3
          %v832 = vsel %vm556, %v829, %v831
          %833 = vrot.lane.b32.xlu0 %v830, 127
          %v834 = vpop.permute.xlu0 %833
          %835 = vrot.lane.b32.xlu0 %v832, 127
          %v836 = vpop.permute.xlu0 %835
          %v839 = vadd.f32 %v818, %v834
          %v840 = vadd.f32 %v819, %v836
          %s841 = sld [smem:[#allocation7 + $0x1d]]
          %v842 = vstv %s841
          %v843 = vmul.f32 %v842, %v460
          %v844 = vmul.f32 %v842, %v461
          %v845 = vmul.f32 %v842, %v462
          %v849 = vrot.slane %v843, 4
          %v850 = vrot.slane %v844, 4
          %v851 = vsel %vm225, %v849, %v850
          %v852 = vrot.slane %v845, 4
          %v853 = vsel %vm225, %v850, %v852
          %854 = vrot.lane.b32.xlu0 %v851, 127
          %v855 = vpop.permute.xlu0 %854
          %856 = vrot.lane.b32.xlu0 %v853, 127
          %v857 = vpop.permute.xlu0 %856
          %v860 = vadd.f32 %v839, %v855
          %v861 = vadd.f32 %v840, %v857
          %s862 = sld [smem:[#allocation7 + $0x9d]]
          %v863 = vstv %s862
          %v864 = vmul.f32 %v863, %v463
          %v865 = vmul.f32 %v863, %v464
          %v866 = vmul.f32 %v863, %v465
          %v870 = vrot.slane %v864, 4
          %v871 = vrot.slane %v865, 4
          %v872 = vsel %vm225, %v870, %v871
          %v873 = vrot.slane %v866, 4
          %v874 = vsel %vm225, %v871, %v873
          %875 = vrot.lane.b32.xlu0 %v872, 127
          %v876 = vpop.permute.xlu0 %875
          %877 = vrot.lane.b32.xlu0 %v874, 127
          %v878 = vpop.permute.xlu0 %877
          %v881 = vadd.f32 %v860, %v876
          %v882 = vadd.f32 %v861, %v878
          %s883 = sld [smem:[#allocation7 + $0x24]]
          %v884 = vstv %s883
          %v885 = vmul.f32 %v884, %v460
          %v886 = vmul.f32 %v884, %v461
          %v887 = vmul.f32 %v884, %v462
          %v891 = vrot.slane %v885, 5
          %v892 = vrot.slane %v886, 5
          %v893 = vsel %vm625, %v891, %v892
          %v894 = vrot.slane %v887, 5
          %v895 = vsel %vm625, %v892, %v894
          %896 = vrot.lane.b32.xlu0 %v893, 127
          %v897 = vpop.permute.xlu0 %896
          %898 = vrot.lane.b32.xlu0 %v895, 127
          %v899 = vpop.permute.xlu0 %898
          %v902 = vadd.f32 %v881, %v897
          %v903 = vadd.f32 %v882, %v899
          %s904 = sld [smem:[#allocation7 + $0xa4]]
          %v905 = vstv %s904
          %v906 = vmul.f32 %v905, %v463
          %v907 = vmul.f32 %v905, %v464
          %v908 = vmul.f32 %v905, %v465
          %v912 = vrot.slane %v906, 5
          %v913 = vrot.slane %v907, 5
          %v914 = vsel %vm625, %v912, %v913
          %v915 = vrot.slane %v908, 5
          %v916 = vsel %vm625, %v913, %v915
          %917 = vrot.lane.b32.xlu0 %v914, 127
          %v918 = vpop.permute.xlu0 %917
          %919 = vrot.lane.b32.xlu0 %v916, 127
          %v920 = vpop.permute.xlu0 %919
          %v923 = vadd.f32 %v902, %v918
          %v924 = vadd.f32 %v903, %v920
          %s925 = sld [smem:[#allocation7 + $0x2b]]
          %v926 = vstv %s925
          %v927 = vmul.f32 %v926, %v460
          %v928 = vmul.f32 %v926, %v461
          %v929 = vmul.f32 %v926, %v462
          %v933 = vrot.slane %v927, 6
          %v934 = vrot.slane %v928, 6
          %v935 = vsel %vm660, %v933, %v934
          %v936 = vrot.slane %v929, 6
          %v937 = vsel %vm660, %v934, %v936
          %938 = vrot.lane.b32.xlu0 %v935, 127
          %v939 = vpop.permute.xlu0 %938
          %940 = vrot.lane.b32.xlu0 %v937, 127
          %v941 = vpop.permute.xlu0 %940
          %v944 = vadd.f32 %v923, %v939
          %v945 = vadd.f32 %v924, %v941
          %s946 = sld [smem:[#allocation7 + $0xab]]
          %v947 = vstv %s946
          %v948 = vmul.f32 %v947, %v463
          %v949 = vmul.f32 %v947, %v464
          %v950 = vmul.f32 %v947, %v465
          %v954 = vrot.slane %v948, 6
          %v955 = vrot.slane %v949, 6
          %v956 = vsel %vm660, %v954, %v955
          %v957 = vrot.slane %v950, 6
          %v958 = vsel %vm660, %v955, %v957
          %959 = vrot.lane.b32.xlu0 %v956, 127
          %v960 = vpop.permute.xlu0 %959
          %961 = vrot.lane.b32.xlu0 %v958, 127
          %v962 = vpop.permute.xlu0 %961
          %v965 = vadd.f32 %v944, %v960
          %v966 = vadd.f32 %v945, %v962
          %s967 = sld [smem:[#allocation7 + $0x2]]
          %v968 = vstv %s967
          %v969 = vmul.f32 %v968, %v460
          %v970 = vmul.f32 %v968, %v461
          %973 = vrot.lane.b32.xlu0 %v969, 126
          %v974 = vpop.permute.xlu0 %973
          %975 = vrot.lane.b32.xlu0 %v970, 126
          %v976 = vpop.permute.xlu0 %975
          %v979 = vadd.f32 %v965, %v974
          %v980 = vadd.f32 %v966, %v976
          %s981 = sld [smem:[#allocation7 + $0x82]]
          %v982 = vstv %s981
          %v983 = vmul.f32 %v982, %v463
          %v984 = vmul.f32 %v982, %v464
          %987 = vrot.lane.b32.xlu0 %v983, 126
          %v988 = vpop.permute.xlu0 %987
          %989 = vrot.lane.b32.xlu0 %v984, 126
          %v990 = vpop.permute.xlu0 %989
          %v993 = vadd.f32 %v979, %v988
          %v994 = vadd.f32 %v980, %v990
          %s995 = sld [smem:[#allocation7 + $0x9]]
          %v996 = vstv %s995
          %v997 = vmul.f32 %v996, %v460
          %v998 = vmul.f32 %v996, %v461
          %v999 = vmul.f32 %v996, %v462
          %v1003 = vrot.slane %v997, 1
          %v1004 = vrot.slane %v998, 1
          %v1005 = vsel %vm486, %v1003, %v1004
          %v1006 = vrot.slane %v999, 1
          %v1007 = vsel %vm486, %v1004, %v1006
          %1008 = vrot.lane.b32.xlu0 %v1005, 126
          %v1009 = vpop.permute.xlu0 %1008
          %1010 = vrot.lane.b32.xlu0 %v1007, 126
          %v1011 = vpop.permute.xlu0 %1010
          %v1014 = vadd.f32 %v993, %v1009
          %v1015 = vadd.f32 %v994, %v1011
          %s1016 = sld [smem:[#allocation7 + $0x89]]
          %v1017 = vstv %s1016
          %v1018 = vmul.f32 %v1017, %v463
          %v1019 = vmul.f32 %v1017, %v464
          %v1020 = vmul.f32 %v1017, %v465
          %v1024 = vrot.slane %v1018, 1
          %v1025 = vrot.slane %v1019, 1
          %v1026 = vsel %vm486, %v1024, %v1025
          %v1027 = vrot.slane %v1020, 1
          %v1028 = vsel %vm486, %v1025, %v1027
          %1029 = vrot.lane.b32.xlu0 %v1026, 126
          %v1030 = vpop.permute.xlu0 %1029
          %1031 = vrot.lane.b32.xlu0 %v1028, 126
          %v1032 = vpop.permute.xlu0 %1031
          %v1035 = vadd.f32 %v1014, %v1030
          %v1036 = vadd.f32 %v1015, %v1032
          %s1037 = sld [smem:[#allocation7 + $0x10]]
          %v1038 = vstv %s1037
          %v1039 = vmul.f32 %v1038, %v460
          %v1040 = vmul.f32 %v1038, %v461
          %v1041 = vmul.f32 %v1038, %v462
          %v1045 = vrot.slane %v1039, 2
          %v1046 = vrot.slane %v1040, 2
          %v1047 = vsel %vm521, %v1045, %v1046
          %v1048 = vrot.slane %v1041, 2
          %v1049 = vsel %vm521, %v1046, %v1048
          %1050 = vrot.lane.b32.xlu0 %v1047, 126
          %v1051 = vpop.permute.xlu0 %1050
          %1052 = vrot.lane.b32.xlu0 %v1049, 126
          %v1053 = vpop.permute.xlu0 %1052
          %v1056 = vadd.f32 %v1035, %v1051
          %v1057 = vadd.f32 %v1036, %v1053
          %s1058 = sld [smem:[#allocation7 + $0x90]]
          %v1059 = vstv %s1058
          %v1060 = vmul.f32 %v1059, %v463
          %v1061 = vmul.f32 %v1059, %v464
          %v1062 = vmul.f32 %v1059, %v465
          %v1066 = vrot.slane %v1060, 2
          %v1067 = vrot.slane %v1061, 2
          %v1068 = vsel %vm521, %v1066, %v1067
          %v1069 = vrot.slane %v1062, 2
          %v1070 = vsel %vm521, %v1067, %v1069
          %1071 = vrot.lane.b32.xlu0 %v1068, 126
          %v1072 = vpop.permute.xlu0 %1071
          %1073 = vrot.lane.b32.xlu0 %v1070, 126
          %v1074 = vpop.permute.xlu0 %1073
          %v1077 = vadd.f32 %v1056, %v1072
          %v1078 = vadd.f32 %v1057, %v1074
          %s1079 = sld [smem:[#allocation7 + $0x17]]
          %v1080 = vstv %s1079
          %v1081 = vmul.f32 %v1080, %v460
          %v1082 = vmul.f32 %v1080, %v461
          %v1083 = vmul.f32 %v1080, %v462
          %v1087 = vrot.slane %v1081, 3
          %v1088 = vrot.slane %v1082, 3
          %v1089 = vsel %vm556, %v1087, %v1088
          %v1090 = vrot.slane %v1083, 3
          %v1091 = vsel %vm556, %v1088, %v1090
          %1092 = vrot.lane.b32.xlu0 %v1089, 126
          %v1093 = vpop.permute.xlu0 %1092
          %1094 = vrot.lane.b32.xlu0 %v1091, 126
          %v1095 = vpop.permute.xlu0 %1094
          %v1098 = vadd.f32 %v1077, %v1093
          %v1099 = vadd.f32 %v1078, %v1095
          %s1100 = sld [smem:[#allocation7 + $0x97]]
          %v1101 = vstv %s1100
          %v1102 = vmul.f32 %v1101, %v463
          %v1103 = vmul.f32 %v1101, %v464
          %v1104 = vmul.f32 %v1101, %v465
          %v1108 = vrot.slane %v1102, 3
          %v1109 = vrot.slane %v1103, 3
          %v1110 = vsel %vm556, %v1108, %v1109
          %v1111 = vrot.slane %v1104, 3
          %v1112 = vsel %vm556, %v1109, %v1111
          %1113 = vrot.lane.b32.xlu0 %v1110, 126
          %v1114 = vpop.permute.xlu0 %1113
          %1115 = vrot.lane.b32.xlu0 %v1112, 126
          %v1116 = vpop.permute.xlu0 %1115
          %v1119 = vadd.f32 %v1098, %v1114
          %v1120 = vadd.f32 %v1099, %v1116
          %s1121 = sld [smem:[#allocation7 + $0x1e]]
          %v1122 = vstv %s1121
          %v1123 = vmul.f32 %v1122, %v460
          %v1124 = vmul.f32 %v1122, %v461
          %v1125 = vmul.f32 %v1122, %v462
          %v1129 = vrot.slane %v1123, 4
          %v1130 = vrot.slane %v1124, 4
          %v1131 = vsel %vm225, %v1129, %v1130
          %v1132 = vrot.slane %v1125, 4
          %v1133 = vsel %vm225, %v1130, %v1132
          %1134 = vrot.lane.b32.xlu0 %v1131, 126
          %v1135 = vpop.permute.xlu0 %1134
          %1136 = vrot.lane.b32.xlu0 %v1133, 126
          %v1137 = vpop.permute.xlu0 %1136
          %v1140 = vadd.f32 %v1119, %v1135
          %v1141 = vadd.f32 %v1120, %v1137
          %s1142 = sld [smem:[#allocation7 + $0x9e]]
          %v1143 = vstv %s1142
          %v1144 = vmul.f32 %v1143, %v463
          %v1145 = vmul.f32 %v1143, %v464
          %v1146 = vmul.f32 %v1143, %v465
          %v1150 = vrot.slane %v1144, 4
          %v1151 = vrot.slane %v1145, 4
          %v1152 = vsel %vm225, %v1150, %v1151
          %v1153 = vrot.slane %v1146, 4
          %v1154 = vsel %vm225, %v1151, %v1153
          %1155 = vrot.lane.b32.xlu0 %v1152, 126
          %v1156 = vpop.permute.xlu0 %1155
          %1157 = vrot.lane.b32.xlu0 %v1154, 126
          %v1158 = vpop.permute.xlu0 %1157
          %v1161 = vadd.f32 %v1140, %v1156
          %v1162 = vadd.f32 %v1141, %v1158
          %s1163 = sld [smem:[#allocation7 + $0x25]]
          %v1164 = vstv %s1163
          %v1165 = vmul.f32 %v1164, %v460
          %v1166 = vmul.f32 %v1164, %v461
          %v1167 = vmul.f32 %v1164, %v462
          %v1171 = vrot.slane %v1165, 5
          %v1172 = vrot.slane %v1166, 5
          %v1173 = vsel %vm625, %v1171, %v1172
          %v1174 = vrot.slane %v1167, 5
          %v1175 = vsel %vm625, %v1172, %v1174
          %1176 = vrot.lane.b32.xlu0 %v1173, 126
          %v1177 = vpop.permute.xlu0 %1176
          %1178 = vrot.lane.b32.xlu0 %v1175, 126
          %v1179 = vpop.permute.xlu0 %1178
          %v1182 = vadd.f32 %v1161, %v1177
          %v1183 = vadd.f32 %v1162, %v1179
          %s1184 = sld [smem:[#allocation7 + $0xa5]]
          %v1185 = vstv %s1184
          %v1186 = vmul.f32 %v1185, %v463
          %v1187 = vmul.f32 %v1185, %v464
          %v1188 = vmul.f32 %v1185, %v465
          %v1192 = vrot.slane %v1186, 5
          %v1193 = vrot.slane %v1187, 5
          %v1194 = vsel %vm625, %v1192, %v1193
          %v1195 = vrot.slane %v1188, 5
          %v1196 = vsel %vm625, %v1193, %v1195
          %1197 = vrot.lane.b32.xlu0 %v1194, 126
          %v1198 = vpop.permute.xlu0 %1197
          %1199 = vrot.lane.b32.xlu0 %v1196, 126
          %v1200 = vpop.permute.xlu0 %1199
          %v1203 = vadd.f32 %v1182, %v1198
          %v1204 = vadd.f32 %v1183, %v1200
          %s1205 = sld [smem:[#allocation7 + $0x2c]]
          %v1206 = vstv %s1205
          %v1207 = vmul.f32 %v1206, %v460
          %v1208 = vmul.f32 %v1206, %v461
          %v1209 = vmul.f32 %v1206, %v462
          %v1213 = vrot.slane %v1207, 6
          %v1214 = vrot.slane %v1208, 6
          %v1215 = vsel %vm660, %v1213, %v1214
          %v1216 = vrot.slane %v1209, 6
          %v1217 = vsel %vm660, %v1214, %v1216
          %1218 = vrot.lane.b32.xlu0 %v1215, 126
          %v1219 = vpop.permute.xlu0 %1218
          %1220 = vrot.lane.b32.xlu0 %v1217, 126
          %v1221 = vpop.permute.xlu0 %1220
          %v1224 = vadd.f32 %v1203, %v1219
          %v1225 = vadd.f32 %v1204, %v1221
          %s1226 = sld [smem:[#allocation7 + $0xac]]
          %v1227 = vstv %s1226
          %v1228 = vmul.f32 %v1227, %v463
          %v1229 = vmul.f32 %v1227, %v464
          %v1230 = vmul.f32 %v1227, %v465
          %v1234 = vrot.slane %v1228, 6
          %v1235 = vrot.slane %v1229, 6
          %v1236 = vsel %vm660, %v1234, %v1235
          %v1237 = vrot.slane %v1230, 6
          %v1238 = vsel %vm660, %v1235, %v1237
          %1239 = vrot.lane.b32.xlu0 %v1236, 126
          %v1240 = vpop.permute.xlu0 %1239
          %1241 = vrot.lane.b32.xlu0 %v1238, 126
          %v1242 = vpop.permute.xlu0 %1241
          %v1245 = vadd.f32 %v1224, %v1240
          %v1246 = vadd.f32 %v1225, %v1242
          %s1247 = sld [smem:[#allocation7 + $0x3]]
          %v1248 = vstv %s1247
          %v1249 = vmul.f32 %v1248, %v460
          %v1250 = vmul.f32 %v1248, %v461
          %1253 = vrot.lane.b32.xlu0 %v1249, 125
          %v1254 = vpop.permute.xlu0 %1253
          %1255 = vrot.lane.b32.xlu0 %v1250, 125
          %v1256 = vpop.permute.xlu0 %1255
          %v1259 = vadd.f32 %v1245, %v1254
          %v1260 = vadd.f32 %v1246, %v1256
          %s1261 = sld [smem:[#allocation7 + $0x83]]
          %v1262 = vstv %s1261
          %v1263 = vmul.f32 %v1262, %v463
          %v1264 = vmul.f32 %v1262, %v464
          %1267 = vrot.lane.b32.xlu0 %v1263, 125
          %v1268 = vpop.permute.xlu0 %1267
          %1269 = vrot.lane.b32.xlu0 %v1264, 125
          %v1270 = vpop.permute.xlu0 %1269
          %v1273 = vadd.f32 %v1259, %v1268
          %v1274 = vadd.f32 %v1260, %v1270
          %s1275 = sld [smem:[#allocation7 + $0xa]]
          %v1276 = vstv %s1275
          %v1277 = vmul.f32 %v1276, %v460
          %v1278 = vmul.f32 %v1276, %v461
          %v1279 = vmul.f32 %v1276, %v462
          %v1283 = vrot.slane %v1277, 1
          %v1284 = vrot.slane %v1278, 1
          %v1285 = vsel %vm486, %v1283, %v1284
          %v1286 = vrot.slane %v1279, 1
          %v1287 = vsel %vm486, %v1284, %v1286
          %1288 = vrot.lane.b32.xlu0 %v1285, 125
          %v1289 = vpop.permute.xlu0 %1288
          %1290 = vrot.lane.b32.xlu0 %v1287, 125
          %v1291 = vpop.permute.xlu0 %1290
          %v1294 = vadd.f32 %v1273, %v1289
          %v1295 = vadd.f32 %v1274, %v1291
          %s1296 = sld [smem:[#allocation7 + $0x8a]]
          %v1297 = vstv %s1296
          %v1298 = vmul.f32 %v1297, %v463
          %v1299 = vmul.f32 %v1297, %v464
          %v1300 = vmul.f32 %v1297, %v465
          %v1304 = vrot.slane %v1298, 1
          %v1305 = vrot.slane %v1299, 1
          %v1306 = vsel %vm486, %v1304, %v1305
          %v1307 = vrot.slane %v1300, 1
          %v1308 = vsel %vm486, %v1305, %v1307
          %1309 = vrot.lane.b32.xlu0 %v1306, 125
          %v1310 = vpop.permute.xlu0 %1309
          %1311 = vrot.lane.b32.xlu0 %v1308, 125
          %v1312 = vpop.permute.xlu0 %1311
          %v1315 = vadd.f32 %v1294, %v1310
          %v1316 = vadd.f32 %v1295, %v1312
          %s1317 = sld [smem:[#allocation7 + $0x11]]
          %v1318 = vstv %s1317
          %v1319 = vmul.f32 %v1318, %v460
          %v1320 = vmul.f32 %v1318, %v461
          %v1321 = vmul.f32 %v1318, %v462
          %v1325 = vrot.slane %v1319, 2
          %v1326 = vrot.slane %v1320, 2
          %v1327 = vsel %vm521, %v1325, %v1326
          %v1328 = vrot.slane %v1321, 2
          %v1329 = vsel %vm521, %v1326, %v1328
          %1330 = vrot.lane.b32.xlu0 %v1327, 125
          %v1331 = vpop.permute.xlu0 %1330
          %1332 = vrot.lane.b32.xlu0 %v1329, 125
          %v1333 = vpop.permute.xlu0 %1332
          %v1336 = vadd.f32 %v1315, %v1331
          %v1337 = vadd.f32 %v1316, %v1333
          %s1338 = sld [smem:[#allocation7 + $0x91]]
          %v1339 = vstv %s1338
          %v1340 = vmul.f32 %v1339, %v463
          %v1341 = vmul.f32 %v1339, %v464
          %v1342 = vmul.f32 %v1339, %v465
          %v1346 = vrot.slane %v1340, 2
          %v1347 = vrot.slane %v1341, 2
          %v1348 = vsel %vm521, %v1346, %v1347
          %v1349 = vrot.slane %v1342, 2
          %v1350 = vsel %vm521, %v1347, %v1349
          %1351 = vrot.lane.b32.xlu0 %v1348, 125
          %v1352 = vpop.permute.xlu0 %1351
          %1353 = vrot.lane.b32.xlu0 %v1350, 125
          %v1354 = vpop.permute.xlu0 %1353
          %v1357 = vadd.f32 %v1336, %v1352
          %v1358 = vadd.f32 %v1337, %v1354
          %s1359 = sld [smem:[#allocation7 + $0x18]]
          %v1360 = vstv %s1359
          %v1361 = vmul.f32 %v1360, %v460
          %v1362 = vmul.f32 %v1360, %v461
          %v1363 = vmul.f32 %v1360, %v462
          %v1367 = vrot.slane %v1361, 3
          %v1368 = vrot.slane %v1362, 3
          %v1369 = vsel %vm556, %v1367, %v1368
          %v1370 = vrot.slane %v1363, 3
          %v1371 = vsel %vm556, %v1368, %v1370
          %1372 = vrot.lane.b32.xlu0 %v1369, 125
          %v1373 = vpop.permute.xlu0 %1372
          %1374 = vrot.lane.b32.xlu0 %v1371, 125
          %v1375 = vpop.permute.xlu0 %1374
          %v1378 = vadd.f32 %v1357, %v1373
          %v1379 = vadd.f32 %v1358, %v1375
          %s1380 = sld [smem:[#allocation7 + $0x98]]
          %v1381 = vstv %s1380
          %v1382 = vmul.f32 %v1381, %v463
          %v1383 = vmul.f32 %v1381, %v464
          %v1384 = vmul.f32 %v1381, %v465
          %v1388 = vrot.slane %v1382, 3
          %v1389 = vrot.slane %v1383, 3
          %v1390 = vsel %vm556, %v1388, %v1389
          %v1391 = vrot.slane %v1384, 3
          %v1392 = vsel %vm556, %v1389, %v1391
          %1393 = vrot.lane.b32.xlu0 %v1390, 125
          %v1394 = vpop.permute.xlu0 %1393
          %1395 = vrot.lane.b32.xlu0 %v1392, 125
          %v1396 = vpop.permute.xlu0 %1395
          %v1399 = vadd.f32 %v1378, %v1394
          %v1400 = vadd.f32 %v1379, %v1396
          %s1401 = sld [smem:[#allocation7 + $0x1f]]
          %v1402 = vstv %s1401
          %v1403 = vmul.f32 %v1402, %v460
          %v1404 = vmul.f32 %v1402, %v461
          %v1405 = vmul.f32 %v1402, %v462
          %v1409 = vrot.slane %v1403, 4
          %v1410 = vrot.slane %v1404, 4
          %v1411 = vsel %vm225, %v1409, %v1410
          %v1412 = vrot.slane %v1405, 4
          %v1413 = vsel %vm225, %v1410, %v1412
          %1414 = vrot.lane.b32.xlu0 %v1411, 125
          %v1415 = vpop.permute.xlu0 %1414
          %1416 = vrot.lane.b32.xlu0 %v1413, 125
          %v1417 = vpop.permute.xlu0 %1416
          %v1420 = vadd.f32 %v1399, %v1415
          %v1421 = vadd.f32 %v1400, %v1417
          %s1422 = sld [smem:[#allocation7 + $0x9f]]
          %v1423 = vstv %s1422
          %v1424 = vmul.f32 %v1423, %v463
          %v1425 = vmul.f32 %v1423, %v464
          %v1426 = vmul.f32 %v1423, %v465
          %v1430 = vrot.slane %v1424, 4
          %v1431 = vrot.slane %v1425, 4
          %v1432 = vsel %vm225, %v1430, %v1431
          %v1433 = vrot.slane %v1426, 4
          %v1434 = vsel %vm225, %v1431, %v1433
          %1435 = vrot.lane.b32.xlu0 %v1432, 125
          %v1436 = vpop.permute.xlu0 %1435
          %1437 = vrot.lane.b32.xlu0 %v1434, 125
          %v1438 = vpop.permute.xlu0 %1437
          %v1441 = vadd.f32 %v1420, %v1436
          %v1442 = vadd.f32 %v1421, %v1438
          %s1443 = sld [smem:[#allocation7 + $0x26]]
          %v1444 = vstv %s1443
          %v1445 = vmul.f32 %v1444, %v460
          %v1446 = vmul.f32 %v1444, %v461
          %v1447 = vmul.f32 %v1444, %v462
          %v1451 = vrot.slane %v1445, 5
          %v1452 = vrot.slane %v1446, 5
          %v1453 = vsel %vm625, %v1451, %v1452
          %v1454 = vrot.slane %v1447, 5
          %v1455 = vsel %vm625, %v1452, %v1454
          %1456 = vrot.lane.b32.xlu0 %v1453, 125
          %v1457 = vpop.permute.xlu0 %1456
          %1458 = vrot.lane.b32.xlu0 %v1455, 125
          %v1459 = vpop.permute.xlu0 %1458
          %v1462 = vadd.f32 %v1441, %v1457
          %v1463 = vadd.f32 %v1442, %v1459
          %s1464 = sld [smem:[#allocation7 + $0xa6]]
          %v1465 = vstv %s1464
          %v1466 = vmul.f32 %v1465, %v463
          %v1467 = vmul.f32 %v1465, %v464
          %v1468 = vmul.f32 %v1465, %v465
          %v1472 = vrot.slane %v1466, 5
          %v1473 = vrot.slane %v1467, 5
          %v1474 = vsel %vm625, %v1472, %v1473
          %v1475 = vrot.slane %v1468, 5
          %v1476 = vsel %vm625, %v1473, %v1475
          %1477 = vrot.lane.b32.xlu0 %v1474, 125
          %v1478 = vpop.permute.xlu0 %1477
          %1479 = vrot.lane.b32.xlu0 %v1476, 125
          %v1480 = vpop.permute.xlu0 %1479
          %v1483 = vadd.f32 %v1462, %v1478
          %v1484 = vadd.f32 %v1463, %v1480
          %s1485 = sld [smem:[#allocation7 + $0x2d]]
          %v1486 = vstv %s1485
          %v1487 = vmul.f32 %v1486, %v460
          %v1488 = vmul.f32 %v1486, %v461
          %v1489 = vmul.f32 %v1486, %v462
          %v1493 = vrot.slane %v1487, 6
          %v1494 = vrot.slane %v1488, 6
          %v1495 = vsel %vm660, %v1493, %v1494
          %v1496 = vrot.slane %v1489, 6
          %v1497 = vsel %vm660, %v1494, %v1496
          %1498 = vrot.lane.b32.xlu0 %v1495, 125
          %v1499 = vpop.permute.xlu0 %1498
          %1500 = vrot.lane.b32.xlu0 %v1497, 125
          %v1501 = vpop.permute.xlu0 %1500
          %v1504 = vadd.f32 %v1483, %v1499
          %v1505 = vadd.f32 %v1484, %v1501
          %s1506 = sld [smem:[#allocation7 + $0xad]]
          %v1507 = vstv %s1506
          %v1508 = vmul.f32 %v1507, %v463
          %v1509 = vmul.f32 %v1507, %v464
          %v1510 = vmul.f32 %v1507, %v465
          %v1514 = vrot.slane %v1508, 6
          %v1515 = vrot.slane %v1509, 6
          %v1516 = vsel %vm660, %v1514, %v1515
          %v1517 = vrot.slane %v1510, 6
          %v1518 = vsel %vm660, %v1515, %v1517
          %1519 = vrot.lane.b32.xlu0 %v1516, 125
          %v1520 = vpop.permute.xlu0 %1519
          %1521 = vrot.lane.b32.xlu0 %v1518, 125
          %v1522 = vpop.permute.xlu0 %1521
          %v1525 = vadd.f32 %v1504, %v1520
          %v1526 = vadd.f32 %v1505, %v1522
          %s1527 = sld [smem:[#allocation7 + $0x4]]
          %v1528 = vstv %s1527
          %v1529 = vmul.f32 %v1528, %v460
          %v1530 = vmul.f32 %v1528, %v461
          %1533 = vrot.lane.b32.xlu0 %v1529, 124
          %v1534 = vpop.permute.xlu0 %1533
          %1535 = vrot.lane.b32.xlu0 %v1530, 124
          %v1536 = vpop.permute.xlu0 %1535
          %v1539 = vadd.f32 %v1525, %v1534
          %v1540 = vadd.f32 %v1526, %v1536
          %s1541 = sld [smem:[#allocation7 + $0x84]]
          %v1542 = vstv %s1541
          %v1543 = vmul.f32 %v1542, %v463
          %v1544 = vmul.f32 %v1542, %v464
          %1547 = vrot.lane.b32.xlu0 %v1543, 124
          %v1548 = vpop.permute.xlu0 %1547
          %1549 = vrot.lane.b32.xlu0 %v1544, 124
          %v1550 = vpop.permute.xlu0 %1549
          %v1553 = vadd.f32 %v1539, %v1548
          %v1554 = vadd.f32 %v1540, %v1550
          %s1555 = sld [smem:[#allocation7 + $0xb]]
          %v1556 = vstv %s1555
          %v1557 = vmul.f32 %v1556, %v460
          %v1558 = vmul.f32 %v1556, %v461
          %v1559 = vmul.f32 %v1556, %v462
          %v1563 = vrot.slane %v1557, 1
          %v1564 = vrot.slane %v1558, 1
          %v1565 = vsel %vm486, %v1563, %v1564
          %v1566 = vrot.slane %v1559, 1
          %v1567 = vsel %vm486, %v1564, %v1566
          %1568 = vrot.lane.b32.xlu0 %v1565, 124
          %v1569 = vpop.permute.xlu0 %1568
          %1570 = vrot.lane.b32.xlu0 %v1567, 124
          %v1571 = vpop.permute.xlu0 %1570
          %v1574 = vadd.f32 %v1553, %v1569
          %v1575 = vadd.f32 %v1554, %v1571
          %s1576 = sld [smem:[#allocation7 + $0x8b]]
          %v1577 = vstv %s1576
          %v1578 = vmul.f32 %v1577, %v463
          %v1579 = vmul.f32 %v1577, %v464
          %v1580 = vmul.f32 %v1577, %v465
          %v1584 = vrot.slane %v1578, 1
          %v1585 = vrot.slane %v1579, 1
          %v1586 = vsel %vm486, %v1584, %v1585
          %v1587 = vrot.slane %v1580, 1
          %v1588 = vsel %vm486, %v1585, %v1587
          %1589 = vrot.lane.b32.xlu0 %v1586, 124
          %v1590 = vpop.permute.xlu0 %1589
          %1591 = vrot.lane.b32.xlu0 %v1588, 124
          %v1592 = vpop.permute.xlu0 %1591
          %v1595 = vadd.f32 %v1574, %v1590
          %v1596 = vadd.f32 %v1575, %v1592
          %s1597 = sld [smem:[#allocation7 + $0x12]]
          %v1598 = vstv %s1597
          %v1599 = vmul.f32 %v1598, %v460
          %v1600 = vmul.f32 %v1598, %v461
          %v1601 = vmul.f32 %v1598, %v462
          %v1605 = vrot.slane %v1599, 2
          %v1606 = vrot.slane %v1600, 2
          %v1607 = vsel %vm521, %v1605, %v1606
          %v1608 = vrot.slane %v1601, 2
          %v1609 = vsel %vm521, %v1606, %v1608
          %1610 = vrot.lane.b32.xlu0 %v1607, 124
          %v1611 = vpop.permute.xlu0 %1610
          %1612 = vrot.lane.b32.xlu0 %v1609, 124
          %v1613 = vpop.permute.xlu0 %1612
          %v1616 = vadd.f32 %v1595, %v1611
          %v1617 = vadd.f32 %v1596, %v1613
          %s1618 = sld [smem:[#allocation7 + $0x92]]
          %v1619 = vstv %s1618
          %v1620 = vmul.f32 %v1619, %v463
          %v1621 = vmul.f32 %v1619, %v464
          %v1622 = vmul.f32 %v1619, %v465
          %v1626 = vrot.slane %v1620, 2
          %v1627 = vrot.slane %v1621, 2
          %v1628 = vsel %vm521, %v1626, %v1627
          %v1629 = vrot.slane %v1622, 2
          %v1630 = vsel %vm521, %v1627, %v1629
          %1631 = vrot.lane.b32.xlu0 %v1628, 124
          %v1632 = vpop.permute.xlu0 %1631
          %1633 = vrot.lane.b32.xlu0 %v1630, 124
          %v1634 = vpop.permute.xlu0 %1633
          %v1637 = vadd.f32 %v1616, %v1632
          %v1638 = vadd.f32 %v1617, %v1634
          %s1639 = sld [smem:[#allocation7 + $0x19]]
          %v1640 = vstv %s1639
          %v1641 = vmul.f32 %v1640, %v460
          %v1642 = vmul.f32 %v1640, %v461
          %v1643 = vmul.f32 %v1640, %v462
          %v1647 = vrot.slane %v1641, 3
          %v1648 = vrot.slane %v1642, 3
          %v1649 = vsel %vm556, %v1647, %v1648
          %v1650 = vrot.slane %v1643, 3
          %v1651 = vsel %vm556, %v1648, %v1650
          %1652 = vrot.lane.b32.xlu0 %v1649, 124
          %v1653 = vpop.permute.xlu0 %1652
          %1654 = vrot.lane.b32.xlu0 %v1651, 124
          %v1655 = vpop.permute.xlu0 %1654
          %v1658 = vadd.f32 %v1637, %v1653
          %v1659 = vadd.f32 %v1638, %v1655
          %s1660 = sld [smem:[#allocation7 + $0x99]]
          %v1661 = vstv %s1660
          %v1662 = vmul.f32 %v1661, %v463
          %v1663 = vmul.f32 %v1661, %v464
          %v1664 = vmul.f32 %v1661, %v465
          %v1668 = vrot.slane %v1662, 3
          %v1669 = vrot.slane %v1663, 3
          %v1670 = vsel %vm556, %v1668, %v1669
          %v1671 = vrot.slane %v1664, 3
          %v1672 = vsel %vm556, %v1669, %v1671
          %1673 = vrot.lane.b32.xlu0 %v1670, 124
          %v1674 = vpop.permute.xlu0 %1673
          %1675 = vrot.lane.b32.xlu0 %v1672, 124
          %v1676 = vpop.permute.xlu0 %1675
          %v1679 = vadd.f32 %v1658, %v1674
          %v1680 = vadd.f32 %v1659, %v1676
          %s1681 = sld [smem:[#allocation7 + $0x20]]
          %v1682 = vstv %s1681
          %v1683 = vmul.f32 %v1682, %v460
          %v1684 = vmul.f32 %v1682, %v461
          %v1685 = vmul.f32 %v1682, %v462
          %v1689 = vrot.slane %v1683, 4
          %v1690 = vrot.slane %v1684, 4
          %v1691 = vsel %vm225, %v1689, %v1690
          %v1692 = vrot.slane %v1685, 4
          %v1693 = vsel %vm225, %v1690, %v1692
          %1694 = vrot.lane.b32.xlu0 %v1691, 124
          %v1695 = vpop.permute.xlu0 %1694
          %1696 = vrot.lane.b32.xlu0 %v1693, 124
          %v1697 = vpop.permute.xlu0 %1696
          %v1700 = vadd.f32 %v1679, %v1695
          %v1701 = vadd.f32 %v1680, %v1697
          %s1702 = sld [smem:[#allocation7 + $0xa0]]
          %v1703 = vstv %s1702
          %v1704 = vmul.f32 %v1703, %v463
          %v1705 = vmul.f32 %v1703, %v464
          %v1706 = vmul.f32 %v1703, %v465
          %v1710 = vrot.slane %v1704, 4
          %v1711 = vrot.slane %v1705, 4
          %v1712 = vsel %vm225, %v1710, %v1711
          %v1713 = vrot.slane %v1706, 4
          %v1714 = vsel %vm225, %v1711, %v1713
          %1715 = vrot.lane.b32.xlu0 %v1712, 124
          %v1716 = vpop.permute.xlu0 %1715
          %1717 = vrot.lane.b32.xlu0 %v1714, 124
          %v1718 = vpop.permute.xlu0 %1717
          %v1721 = vadd.f32 %v1700, %v1716
          %v1722 = vadd.f32 %v1701, %v1718
          %s1723 = sld [smem:[#allocation7 + $0x27]]
          %v1724 = vstv %s1723
          %v1725 = vmul.f32 %v1724, %v460
          %v1726 = vmul.f32 %v1724, %v461
          %v1727 = vmul.f32 %v1724, %v462
          %v1731 = vrot.slane %v1725, 5
          %v1732 = vrot.slane %v1726, 5
          %v1733 = vsel %vm625, %v1731, %v1732
          %v1734 = vrot.slane %v1727, 5
          %v1735 = vsel %vm625, %v1732, %v1734
          %1736 = vrot.lane.b32.xlu0 %v1733, 124
          %v1737 = vpop.permute.xlu0 %1736
          %1738 = vrot.lane.b32.xlu0 %v1735, 124
          %v1739 = vpop.permute.xlu0 %1738
          %v1742 = vadd.f32 %v1721, %v1737
          %v1743 = vadd.f32 %v1722, %v1739
          %s1744 = sld [smem:[#allocation7 + $0xa7]]
          %v1745 = vstv %s1744
          %v1746 = vmul.f32 %v1745, %v463
          %v1747 = vmul.f32 %v1745, %v464
          %v1748 = vmul.f32 %v1745, %v465
          %v1752 = vrot.slane %v1746, 5
          %v1753 = vrot.slane %v1747, 5
          %v1754 = vsel %vm625, %v1752, %v1753
          %v1755 = vrot.slane %v1748, 5
          %v1756 = vsel %vm625, %v1753, %v1755
          %1757 = vrot.lane.b32.xlu0 %v1754, 124
          %v1758 = vpop.permute.xlu0 %1757
          %1759 = vrot.lane.b32.xlu0 %v1756, 124
          %v1760 = vpop.permute.xlu0 %1759
          %v1763 = vadd.f32 %v1742, %v1758
          %v1764 = vadd.f32 %v1743, %v1760
          %s1765 = sld [smem:[#allocation7 + $0x2e]]
          %v1766 = vstv %s1765
          %v1767 = vmul.f32 %v1766, %v460
          %v1768 = vmul.f32 %v1766, %v461
          %v1769 = vmul.f32 %v1766, %v462
          %v1773 = vrot.slane %v1767, 6
          %v1774 = vrot.slane %v1768, 6
          %v1775 = vsel %vm660, %v1773, %v1774
          %v1776 = vrot.slane %v1769, 6
          %v1777 = vsel %vm660, %v1774, %v1776
          %1778 = vrot.lane.b32.xlu0 %v1775, 124
          %v1779 = vpop.permute.xlu0 %1778
          %1780 = vrot.lane.b32.xlu0 %v1777, 124
          %v1781 = vpop.permute.xlu0 %1780
          %v1784 = vadd.f32 %v1763, %v1779
          %v1785 = vadd.f32 %v1764, %v1781
          %s1786 = sld [smem:[#allocation7 + $0xae]]
          %v1787 = vstv %s1786
          %v1788 = vmul.f32 %v1787, %v463
          %v1789 = vmul.f32 %v1787, %v464
          %v1790 = vmul.f32 %v1787, %v465
          %v1794 = vrot.slane %v1788, 6
          %v1795 = vrot.slane %v1789, 6
          %v1796 = vsel %vm660, %v1794, %v1795
          %v1797 = vrot.slane %v1790, 6
          %v1798 = vsel %vm660, %v1795, %v1797
          %1799 = vrot.lane.b32.xlu0 %v1796, 124
          %v1800 = vpop.permute.xlu0 %1799
          %1801 = vrot.lane.b32.xlu0 %v1798, 124
          %v1802 = vpop.permute.xlu0 %1801
          %v1805 = vadd.f32 %v1784, %v1800
          %v1806 = vadd.f32 %v1785, %v1802
          %s1807 = sld [smem:[#allocation7 + $0x5]]
          %v1808 = vstv %s1807
          %v1809 = vmul.f32 %v1808, %v460
          %v1810 = vmul.f32 %v1808, %v461
          %1813 = vrot.lane.b32.xlu0 %v1809, 123
          %v1814 = vpop.permute.xlu0 %1813
          %1815 = vrot.lane.b32.xlu0 %v1810, 123
          %v1816 = vpop.permute.xlu0 %1815
          %v1819 = vadd.f32 %v1805, %v1814
          %v1820 = vadd.f32 %v1806, %v1816
          %s1821 = sld [smem:[#allocation7 + $0x85]]
          %v1822 = vstv %s1821
          %v1823 = vmul.f32 %v1822, %v463
          %v1824 = vmul.f32 %v1822, %v464
          %1827 = vrot.lane.b32.xlu0 %v1823, 123
          %v1828 = vpop.permute.xlu0 %1827
          %1829 = vrot.lane.b32.xlu0 %v1824, 123
          %v1830 = vpop.permute.xlu0 %1829
          %v1833 = vadd.f32 %v1819, %v1828
          %v1834 = vadd.f32 %v1820, %v1830
          %s1835 = sld [smem:[#allocation7 + $0xc]]
          %v1836 = vstv %s1835
          %v1837 = vmul.f32 %v1836, %v460
          %v1838 = vmul.f32 %v1836, %v461
          %v1839 = vmul.f32 %v1836, %v462
          %v1843 = vrot.slane %v1837, 1
          %v1844 = vrot.slane %v1838, 1
          %v1845 = vsel %vm486, %v1843, %v1844
          %v1846 = vrot.slane %v1839, 1
          %v1847 = vsel %vm486, %v1844, %v1846
          %1848 = vrot.lane.b32.xlu0 %v1845, 123
          %v1849 = vpop.permute.xlu0 %1848
          %1850 = vrot.lane.b32.xlu0 %v1847, 123
          %v1851 = vpop.permute.xlu0 %1850
          %v1854 = vadd.f32 %v1833, %v1849
          %v1855 = vadd.f32 %v1834, %v1851
          %s1856 = sld [smem:[#allocation7 + $0x8c]]
          %v1857 = vstv %s1856
          %v1858 = vmul.f32 %v1857, %v463
          %v1859 = vmul.f32 %v1857, %v464
          %v1860 = vmul.f32 %v1857, %v465
          %v1864 = vrot.slane %v1858, 1
          %v1865 = vrot.slane %v1859, 1
          %v1866 = vsel %vm486, %v1864, %v1865
          %v1867 = vrot.slane %v1860, 1
          %v1868 = vsel %vm486, %v1865, %v1867
          %1869 = vrot.lane.b32.xlu0 %v1866, 123
          %v1870 = vpop.permute.xlu0 %1869
          %1871 = vrot.lane.b32.xlu0 %v1868, 123
          %v1872 = vpop.permute.xlu0 %1871
          %v1875 = vadd.f32 %v1854, %v1870
          %v1876 = vadd.f32 %v1855, %v1872
          %s1877 = sld [smem:[#allocation7 + $0x13]]
          %v1878 = vstv %s1877
          %v1879 = vmul.f32 %v1878, %v460
          %v1880 = vmul.f32 %v1878, %v461
          %v1881 = vmul.f32 %v1878, %v462
          %v1885 = vrot.slane %v1879, 2
          %v1886 = vrot.slane %v1880, 2
          %v1887 = vsel %vm521, %v1885, %v1886
          %v1888 = vrot.slane %v1881, 2
          %v1889 = vsel %vm521, %v1886, %v1888
          %1890 = vrot.lane.b32.xlu0 %v1887, 123
          %v1891 = vpop.permute.xlu0 %1890
          %1892 = vrot.lane.b32.xlu0 %v1889, 123
          %v1893 = vpop.permute.xlu0 %1892
          %v1896 = vadd.f32 %v1875, %v1891
          %v1897 = vadd.f32 %v1876, %v1893
          %s1898 = sld [smem:[#allocation7 + $0x93]]
          %v1899 = vstv %s1898
          %v1900 = vmul.f32 %v1899, %v463
          %v1901 = vmul.f32 %v1899, %v464
          %v1902 = vmul.f32 %v1899, %v465
          %v1906 = vrot.slane %v1900, 2
          %v1907 = vrot.slane %v1901, 2
          %v1908 = vsel %vm521, %v1906, %v1907
          %v1909 = vrot.slane %v1902, 2
          %v1910 = vsel %vm521, %v1907, %v1909
          %1911 = vrot.lane.b32.xlu0 %v1908, 123
          %v1912 = vpop.permute.xlu0 %1911
          %1913 = vrot.lane.b32.xlu0 %v1910, 123
          %v1914 = vpop.permute.xlu0 %1913
          %v1917 = vadd.f32 %v1896, %v1912
          %v1918 = vadd.f32 %v1897, %v1914
          %s1919 = sld [smem:[#allocation7 + $0x1a]]
          %v1920 = vstv %s1919
          %v1921 = vmul.f32 %v1920, %v460
          %v1922 = vmul.f32 %v1920, %v461
          %v1923 = vmul.f32 %v1920, %v462
          %v1927 = vrot.slane %v1921, 3
          %v1928 = vrot.slane %v1922, 3
          %v1929 = vsel %vm556, %v1927, %v1928
          %v1930 = vrot.slane %v1923, 3
          %v1931 = vsel %vm556, %v1928, %v1930
          %1932 = vrot.lane.b32.xlu0 %v1929, 123
          %v1933 = vpop.permute.xlu0 %1932
          %1934 = vrot.lane.b32.xlu0 %v1931, 123
          %v1935 = vpop.permute.xlu0 %1934
          %v1938 = vadd.f32 %v1917, %v1933
          %v1939 = vadd.f32 %v1918, %v1935
          %s1940 = sld [smem:[#allocation7 + $0x9a]]
          %v1941 = vstv %s1940
          %v1942 = vmul.f32 %v1941, %v463
          %v1943 = vmul.f32 %v1941, %v464
          %v1944 = vmul.f32 %v1941, %v465
          %v1948 = vrot.slane %v1942, 3
          %v1949 = vrot.slane %v1943, 3
          %v1950 = vsel %vm556, %v1948, %v1949
          %v1951 = vrot.slane %v1944, 3
          %v1952 = vsel %vm556, %v1949, %v1951
          %1953 = vrot.lane.b32.xlu0 %v1950, 123
          %v1954 = vpop.permute.xlu0 %1953
          %1955 = vrot.lane.b32.xlu0 %v1952, 123
          %v1956 = vpop.permute.xlu0 %1955
          %v1959 = vadd.f32 %v1938, %v1954
          %v1960 = vadd.f32 %v1939, %v1956
          %s1961 = sld [smem:[#allocation7 + $0x21]]
          %v1962 = vstv %s1961
          %v1963 = vmul.f32 %v1962, %v460
          %v1964 = vmul.f32 %v1962, %v461
          %v1965 = vmul.f32 %v1962, %v462
          %v1969 = vrot.slane %v1963, 4
          %v1970 = vrot.slane %v1964, 4
          %v1971 = vsel %vm225, %v1969, %v1970
          %v1972 = vrot.slane %v1965, 4
          %v1973 = vsel %vm225, %v1970, %v1972
          %1974 = vrot.lane.b32.xlu0 %v1971, 123
          %v1975 = vpop.permute.xlu0 %1974
          %1976 = vrot.lane.b32.xlu0 %v1973, 123
          %v1977 = vpop.permute.xlu0 %1976
          %v1980 = vadd.f32 %v1959, %v1975
          %v1981 = vadd.f32 %v1960, %v1977
          %s1982 = sld [smem:[#allocation7 + $0xa1]]
          %v1983 = vstv %s1982
          %v1984 = vmul.f32 %v1983, %v463
          %v1985 = vmul.f32 %v1983, %v464
          %v1986 = vmul.f32 %v1983, %v465
          %v1990 = vrot.slane %v1984, 4
          %v1991 = vrot.slane %v1985, 4
          %v1992 = vsel %vm225, %v1990, %v1991
          %v1993 = vrot.slane %v1986, 4
          %v1994 = vsel %vm225, %v1991, %v1993
          %1995 = vrot.lane.b32.xlu0 %v1992, 123
          %v1996 = vpop.permute.xlu0 %1995
          %1997 = vrot.lane.b32.xlu0 %v1994, 123
          %v1998 = vpop.permute.xlu0 %1997
          %v2001 = vadd.f32 %v1980, %v1996
          %v2002 = vadd.f32 %v1981, %v1998
          %s2003 = sld [smem:[#allocation7 + $0x28]]
          %v2004 = vstv %s2003
          %v2005 = vmul.f32 %v2004, %v460
          %v2006 = vmul.f32 %v2004, %v461
          %v2007 = vmul.f32 %v2004, %v462
          %v2011 = vrot.slane %v2005, 5
          %v2012 = vrot.slane %v2006, 5
          %v2013 = vsel %vm625, %v2011, %v2012
          %v2014 = vrot.slane %v2007, 5
          %v2015 = vsel %vm625, %v2012, %v2014
          %2016 = vrot.lane.b32.xlu0 %v2013, 123
          %v2017 = vpop.permute.xlu0 %2016
          %2018 = vrot.lane.b32.xlu0 %v2015, 123
          %v2019 = vpop.permute.xlu0 %2018
          %v2022 = vadd.f32 %v2001, %v2017
          %v2023 = vadd.f32 %v2002, %v2019
          %s2024 = sld [smem:[#allocation7 + $0xa8]]
          %v2025 = vstv %s2024
          %v2026 = vmul.f32 %v2025, %v463
          %v2027 = vmul.f32 %v2025, %v464
          %v2028 = vmul.f32 %v2025, %v465
          %v2032 = vrot.slane %v2026, 5
          %v2033 = vrot.slane %v2027, 5
          %v2034 = vsel %vm625, %v2032, %v2033
          %v2035 = vrot.slane %v2028, 5
          %v2036 = vsel %vm625, %v2033, %v2035
          %2037 = vrot.lane.b32.xlu0 %v2034, 123
          %v2038 = vpop.permute.xlu0 %2037
          %2039 = vrot.lane.b32.xlu0 %v2036, 123
          %v2040 = vpop.permute.xlu0 %2039
          %v2043 = vadd.f32 %v2022, %v2038
          %v2044 = vadd.f32 %v2023, %v2040
          %s2045 = sld [smem:[#allocation7 + $0x2f]]
          %v2046 = vstv %s2045
          %v2047 = vmul.f32 %v2046, %v460
          %v2048 = vmul.f32 %v2046, %v461
          %v2049 = vmul.f32 %v2046, %v462
          %v2053 = vrot.slane %v2047, 6
          %v2054 = vrot.slane %v2048, 6
          %v2055 = vsel %vm660, %v2053, %v2054
          %v2056 = vrot.slane %v2049, 6
          %v2057 = vsel %vm660, %v2054, %v2056
          %2058 = vrot.lane.b32.xlu0 %v2055, 123
          %v2059 = vpop.permute.xlu0 %2058
          %2060 = vrot.lane.b32.xlu0 %v2057, 123
          %v2061 = vpop.permute.xlu0 %2060
          %v2064 = vadd.f32 %v2043, %v2059
          %v2065 = vadd.f32 %v2044, %v2061
          %s2066 = sld [smem:[#allocation7 + $0xaf]]
          %v2067 = vstv %s2066
          %v2068 = vmul.f32 %v2067, %v463
          %v2069 = vmul.f32 %v2067, %v464
          %v2070 = vmul.f32 %v2067, %v465
          %v2074 = vrot.slane %v2068, 6
          %v2075 = vrot.slane %v2069, 6
          %v2076 = vsel %vm660, %v2074, %v2075
          %v2077 = vrot.slane %v2070, 6
          %v2078 = vsel %vm660, %v2075, %v2077
          %2079 = vrot.lane.b32.xlu0 %v2076, 123
          %v2080 = vpop.permute.xlu0 %2079
          %2081 = vrot.lane.b32.xlu0 %v2078, 123
          %v2082 = vpop.permute.xlu0 %2081
          %v2085 = vadd.f32 %v2064, %v2080
          %v2086 = vadd.f32 %v2065, %v2082
          %s2087 = sld [smem:[#allocation7 + $0x6]]
          %v2088 = vstv %s2087
          %v2089 = vmul.f32 %v2088, %v460
          %v2090 = vmul.f32 %v2088, %v461
          %2093 = vrot.lane.b32.xlu0 %v2089, 122
          %v2094 = vpop.permute.xlu0 %2093
          %2095 = vrot.lane.b32.xlu0 %v2090, 122
          %v2096 = vpop.permute.xlu0 %2095
          %v2099 = vadd.f32 %v2085, %v2094
          %v2100 = vadd.f32 %v2086, %v2096
          %s2101 = sld [smem:[#allocation7 + $0x86]]
          %v2102 = vstv %s2101
          %v2103 = vmul.f32 %v2102, %v463
          %v2104 = vmul.f32 %v2102, %v464
          %2107 = vrot.lane.b32.xlu0 %v2103, 122
          %v2108 = vpop.permute.xlu0 %2107
          %2109 = vrot.lane.b32.xlu0 %v2104, 122
          %v2110 = vpop.permute.xlu0 %2109
          %v2113 = vadd.f32 %v2099, %v2108
          %v2114 = vadd.f32 %v2100, %v2110
          %s2115 = sld [smem:[#allocation7 + $0xd]]
          %v2116 = vstv %s2115
          %v2117 = vmul.f32 %v2116, %v460
          %v2118 = vmul.f32 %v2116, %v461
          %v2119 = vmul.f32 %v2116, %v462
          %v2123 = vrot.slane %v2117, 1
          %v2124 = vrot.slane %v2118, 1
          %v2125 = vsel %vm486, %v2123, %v2124
          %v2126 = vrot.slane %v2119, 1
          %v2127 = vsel %vm486, %v2124, %v2126
          %2128 = vrot.lane.b32.xlu0 %v2125, 122
          %v2129 = vpop.permute.xlu0 %2128
          %2130 = vrot.lane.b32.xlu0 %v2127, 122
          %v2131 = vpop.permute.xlu0 %2130
          %v2134 = vadd.f32 %v2113, %v2129
          %v2135 = vadd.f32 %v2114, %v2131
          %s2136 = sld [smem:[#allocation7 + $0x8d]]
          %v2137 = vstv %s2136
          %v2138 = vmul.f32 %v2137, %v463
          %v2139 = vmul.f32 %v2137, %v464
          %v2140 = vmul.f32 %v2137, %v465
          %v2144 = vrot.slane %v2138, 1
          %v2145 = vrot.slane %v2139, 1
          %v2146 = vsel %vm486, %v2144, %v2145
          %v2147 = vrot.slane %v2140, 1
          %v2148 = vsel %vm486, %v2145, %v2147
          %2149 = vrot.lane.b32.xlu0 %v2146, 122
          %v2150 = vpop.permute.xlu0 %2149
          %2151 = vrot.lane.b32.xlu0 %v2148, 122
          %v2152 = vpop.permute.xlu0 %2151
          %v2155 = vadd.f32 %v2134, %v2150
          %v2156 = vadd.f32 %v2135, %v2152
          %s2157 = sld [smem:[#allocation7 + $0x14]]
          %v2158 = vstv %s2157
          %v2159 = vmul.f32 %v2158, %v460
          %v2160 = vmul.f32 %v2158, %v461
          %v2161 = vmul.f32 %v2158, %v462
          %v2165 = vrot.slane %v2159, 2
          %v2166 = vrot.slane %v2160, 2
          %v2167 = vsel %vm521, %v2165, %v2166
          %v2168 = vrot.slane %v2161, 2
          %v2169 = vsel %vm521, %v2166, %v2168
          %2170 = vrot.lane.b32.xlu0 %v2167, 122
          %v2171 = vpop.permute.xlu0 %2170
          %2172 = vrot.lane.b32.xlu0 %v2169, 122
          %v2173 = vpop.permute.xlu0 %2172
          %v2176 = vadd.f32 %v2155, %v2171
          %v2177 = vadd.f32 %v2156, %v2173
          %s2178 = sld [smem:[#allocation7 + $0x94]]
          %v2179 = vstv %s2178
          %v2180 = vmul.f32 %v2179, %v463
          %v2181 = vmul.f32 %v2179, %v464
          %v2182 = vmul.f32 %v2179, %v465
          %v2186 = vrot.slane %v2180, 2
          %v2187 = vrot.slane %v2181, 2
          %v2188 = vsel %vm521, %v2186, %v2187
          %v2189 = vrot.slane %v2182, 2
          %v2190 = vsel %vm521, %v2187, %v2189
          %2191 = vrot.lane.b32.xlu0 %v2188, 122
          %v2192 = vpop.permute.xlu0 %2191
          %2193 = vrot.lane.b32.xlu0 %v2190, 122
          %v2194 = vpop.permute.xlu0 %2193
          %v2197 = vadd.f32 %v2176, %v2192
          %v2198 = vadd.f32 %v2177, %v2194
          %s2199 = sld [smem:[#allocation7 + $0x1b]]
          %v2200 = vstv %s2199
          %v2201 = vmul.f32 %v2200, %v460
          %v2202 = vmul.f32 %v2200, %v461
          %v2203 = vmul.f32 %v2200, %v462
          %v2207 = vrot.slane %v2201, 3
          %v2208 = vrot.slane %v2202, 3
          %v2209 = vsel %vm556, %v2207, %v2208
          %v2210 = vrot.slane %v2203, 3
          %v2211 = vsel %vm556, %v2208, %v2210
          %2212 = vrot.lane.b32.xlu0 %v2209, 122
          %v2213 = vpop.permute.xlu0 %2212
          %2214 = vrot.lane.b32.xlu0 %v2211, 122
          %v2215 = vpop.permute.xlu0 %2214
          %v2218 = vadd.f32 %v2197, %v2213
          %v2219 = vadd.f32 %v2198, %v2215
          %s2220 = sld [smem:[#allocation7 + $0x9b]]
          %v2221 = vstv %s2220
          %v2222 = vmul.f32 %v2221, %v463
          %v2223 = vmul.f32 %v2221, %v464
          %v2224 = vmul.f32 %v2221, %v465
          %v2228 = vrot.slane %v2222, 3
          %v2229 = vrot.slane %v2223, 3
          %v2230 = vsel %vm556, %v2228, %v2229
          %v2231 = vrot.slane %v2224, 3
          %v2232 = vsel %vm556, %v2229, %v2231
          %2233 = vrot.lane.b32.xlu0 %v2230, 122
          %v2234 = vpop.permute.xlu0 %2233
          %2235 = vrot.lane.b32.xlu0 %v2232, 122
          %v2236 = vpop.permute.xlu0 %2235
          %v2239 = vadd.f32 %v2218, %v2234
          %v2240 = vadd.f32 %v2219, %v2236
          %s2241 = sld [smem:[#allocation7 + $0x22]]
          %v2242 = vstv %s2241
          %v2243 = vmul.f32 %v2242, %v460
          %v2244 = vmul.f32 %v2242, %v461
          %v2245 = vmul.f32 %v2242, %v462
          %v2249 = vrot.slane %v2243, 4
          %v2250 = vrot.slane %v2244, 4
          %v2251 = vsel %vm225, %v2249, %v2250
          %v2252 = vrot.slane %v2245, 4
          %v2253 = vsel %vm225, %v2250, %v2252
          %2254 = vrot.lane.b32.xlu0 %v2251, 122
          %v2255 = vpop.permute.xlu0 %2254
          %2256 = vrot.lane.b32.xlu0 %v2253, 122
          %v2257 = vpop.permute.xlu0 %2256
          %v2260 = vadd.f32 %v2239, %v2255
          %v2261 = vadd.f32 %v2240, %v2257
          %s2262 = sld [smem:[#allocation7 + $0xa2]]
          %v2263 = vstv %s2262
          %v2264 = vmul.f32 %v2263, %v463
          %v2265 = vmul.f32 %v2263, %v464
          %v2266 = vmul.f32 %v2263, %v465
          %v2270 = vrot.slane %v2264, 4
          %v2271 = vrot.slane %v2265, 4
          %v2272 = vsel %vm225, %v2270, %v2271
          %v2273 = vrot.slane %v2266, 4
          %v2274 = vsel %vm225, %v2271, %v2273
          %2275 = vrot.lane.b32.xlu0 %v2272, 122
          %v2276 = vpop.permute.xlu0 %2275
          %2277 = vrot.lane.b32.xlu0 %v2274, 122
          %v2278 = vpop.permute.xlu0 %2277
          %v2281 = vadd.f32 %v2260, %v2276
          %v2282 = vadd.f32 %v2261, %v2278
          %s2283 = sld [smem:[#allocation7 + $0x29]]
          %v2284 = vstv %s2283
          %v2285 = vmul.f32 %v2284, %v460
          %v2286 = vmul.f32 %v2284, %v461
          %v2287 = vmul.f32 %v2284, %v462
          %v2291 = vrot.slane %v2285, 5
          %v2292 = vrot.slane %v2286, 5
          %v2293 = vsel %vm625, %v2291, %v2292
          %v2294 = vrot.slane %v2287, 5
          %v2295 = vsel %vm625, %v2292, %v2294
          %2296 = vrot.lane.b32.xlu0 %v2293, 122
          %v2297 = vpop.permute.xlu0 %2296
          %2298 = vrot.lane.b32.xlu0 %v2295, 122
          %v2299 = vpop.permute.xlu0 %2298
          %v2302 = vadd.f32 %v2281, %v2297
          %v2303 = vadd.f32 %v2282, %v2299
          %s2304 = sld [smem:[#allocation7 + $0xa9]]
          %v2305 = vstv %s2304
          %v2306 = vmul.f32 %v2305, %v463
          %v2307 = vmul.f32 %v2305, %v464
          %v2308 = vmul.f32 %v2305, %v465
          %v2312 = vrot.slane %v2306, 5
          %v2313 = vrot.slane %v2307, 5
          %v2314 = vsel %vm625, %v2312, %v2313
          %v2315 = vrot.slane %v2308, 5
          %v2316 = vsel %vm625, %v2313, %v2315
          %2317 = vrot.lane.b32.xlu0 %v2314, 122
          %v2318 = vpop.permute.xlu0 %2317
          %2319 = vrot.lane.b32.xlu0 %v2316, 122
          %v2320 = vpop.permute.xlu0 %2319
          %v2323 = vadd.f32 %v2302, %v2318
          %v2324 = vadd.f32 %v2303, %v2320
          %s2325 = sld [smem:[#allocation7 + $0x30]]
          %v2326 = vstv %s2325
          %v2327 = vmul.f32 %v2326, %v460
          %v2328 = vmul.f32 %v2326, %v461
          %v2329 = vmul.f32 %v2326, %v462
          %v2333 = vrot.slane %v2327, 6
          %v2334 = vrot.slane %v2328, 6
          %v2335 = vsel %vm660, %v2333, %v2334
          %v2336 = vrot.slane %v2329, 6
          %v2337 = vsel %vm660, %v2334, %v2336
          %2338 = vrot.lane.b32.xlu0 %v2335, 122
          %v2339 = vpop.permute.xlu0 %2338
          %2340 = vrot.lane.b32.xlu0 %v2337, 122
          %v2341 = vpop.permute.xlu0 %2340
          %v2344 = vadd.f32 %v2323, %v2339
          %v2345 = vadd.f32 %v2324, %v2341
          %s2346 = sld [smem:[#allocation7 + $0xb0]]
          %v2347 = vstv %s2346
          %v2348 = vmul.f32 %v2347, %v463
          %v2349 = vmul.f32 %v2347, %v464
          %v2350 = vmul.f32 %v2347, %v465
          %v2354 = vrot.slane %v2348, 6
          %v2355 = vrot.slane %v2349, 6
          %v2356 = vsel %vm660, %v2354, %v2355
          %v2357 = vrot.slane %v2350, 6
          %v2358 = vsel %vm660, %v2355, %v2357
          %2359 = vrot.lane.b32.xlu0 %v2356, 122
          %v2360 = vpop.permute.xlu0 %2359
          %2361 = vrot.lane.b32.xlu0 %v2358, 122
          %v2362 = vpop.permute.xlu0 %2361
          %v2365 = vadd.f32 %v2344, %v2360
          %v2366 = vadd.f32 %v2345, %v2362
          %s2367 = sld [smem:[#allocation6]]
          %v2368 = vstv %s2367
          %v2369 = vadd.f32 %v2365, %v2368
          %v2370 = vadd.f32 %v2366, %v2368
          %v2371 = vmul.f32 %v2369, 0.5
          %v2372 = vmul.f32 %v2370, 0.5
          %v2373 = vtanh.pop %v2371
          %v2374 = vtanh.pop %v2372
          %v2375 = vadd.f32 %v2373, 1.0
          %v2376 = vadd.f32 %v2374, 1.0
          %v2377 = vmul.f32 %v2375, 0.5
          %v2378 = vmul.f32 %v2376, 0.5
          %vm2379 = vcmask 130048
          %2380 = vst.msk [vmem:[%s200] sm:$0xff] %vm2379, %v2377
          %2381 = vst.msk [vmem:[%s200 + $0x8] sm:$0xff] %vm2379, %v2378
        $region44: #{spatial_attention.1} parent=31 // pred_fallthru
          _
        %s2382 = sand.u32 %s109, 1
        %s2383 = scalar_lea.sflag [#allocation8], %s2382
        %s2384 = sand.u32 %s109, 1
        %s2385 = smul.addr %s2384, 16
        %s2386 = scalar_lea.vmem [#allocation10], %s2385
        // Predicated region
        $region45: #{spatial_attention.1} parent=31 // pred_check
          %p2387 = pneg %p119
        $region46: #{spatial_attention.1} parent=31 // pred_check_branch
          %2389 = sbr.rel (%p2387) target = $region48
        $region47: #{spatial_attention.1} parent=31 // pred_region
          %s2391 = ssub.s32 256, 256
          %2392 = vsyncadd %s2383, %s2391
          %s2393 = smul.addr %s23, 2
          %s2394 = smul.addr %s2393, 128
          %s2395 = scalar_lea.hbm %s3, %s2394
          %s2396 = sshll.u32 %s2386, 4
          %s2397 = int_to_ptr.vmem [resolvable:$true] %s2396
          %2402 = dma.vmem_to_hbm [thread:$0]  %s2397, 256, %s2395, %s2383, 128, 128, 8
        $region48: #{spatial_attention.1} parent=31 // pred_fallthru
          _
      $region32: #{spatial_attention.1} parent=5 // pred_fallthru
        _
      %p2403 = scmp.le.s32.totalorder 2, %s14
      // Predicated region
      $region49: #{spatial_attention.1} parent=5 // pred_check
        %p2404 = pneg %p2403
      $region50: #{spatial_attention.1} parent=5 // pred_check_branch
        %2406 = sbr.rel (%p2404) target = $region52
      $region51: #{spatial_attention.1} parent=5 // pred_region
        %s2407 = ssub.s32 %s14, 2
        // Predicated region
        $region53: #{spatial_attention.1} parent=51 // pred_check
          %p2408 = pneg %p125
        $region54: #{spatial_attention.1} parent=51 // pred_check_branch
          %2410 = sbr.rel (%p2408) target = $region56
        $region55: #{spatial_attention.1} parent=51 // pred_region
          %s2411 = sand.u32 %s110, 1
          %s2412 = scalar_lea.sflag [#allocation8], %s2411
          %s2413 = sand.u32 %s110, 1
          %s2414 = smul.addr %s2413, 16
          %s2415 = scalar_lea.vmem [#allocation10], %s2414
          %2416 = dma.done %s2412, 256
        $region56: #{spatial_attention.1} parent=51 // pred_fallthru
          _
      $region52: #{spatial_attention.1} parent=5 // pred_fallthru
        _
    $region6: #{spatial_attention.1} parent=1 // loop_footer
      %s18 = sadd.s32 1, %s14
    $region7: #{spatial_attention.1} parent=1 // loop_footer_branch
      %13 = sbr.rel target = $region3
    $region8: #{spatial_attention.1} parent=1 // loop_exit
      _
    %2417 = vsyncpa [#allocation8], 1
    %s2418 = scalar_lea.sflag [#allocation8], 1
    %2419 = vsyncpa %s2418, 1
    %2420 = vsyncpa [#allocation9], 1
    %s2421 = scalar_lea.sflag [#allocation9], 1
    %2422 = vsyncpa %s2421, 1

</llo_original>
